<compile_context>
chip_gen: v7x
topology: tpu7x:2x2x1
jax: 0.10.0
libtpu: 0.0.40
codegen_flags: <defaults>
</compile_context>

<pallas_src>
import jax
import jax.numpy as jnp
from jax import lax
from jax.experimental import pallas as pl
from jax.experimental.pallas import tpu as pltpu

_EPS = 1e-5
_PAD_L = 8          # aligned start column of the interior inside the h1 scratch


def _make_resblock_kernel(H, W, C):
    """Fused  conv1 -> IN -> ReLU -> conv2 (+x) -> IN -> ReLU  for one image."""
    HW = H * W

    def conv3x3(img, w_ref, interior_col):
        """3x3 'same' conv (bias-free) of the zero-halo image `img`.

        img          : (H+2, Wtot, C) f32 value; valid pixels live in rows
                       [1, H+1) and columns [interior_col, interior_col+W),
                       surrounded by zeros.
        w_ref        : (9, Cin, Cout) bf16 ref, tap index = 3*kh + kw.
        returns      : (H*W, Cout) f32.
        """
        acc = jnp.zeros((HW, C), jnp.float32)
        for kw in range(3):
            col0 = interior_col + kw - 1
            # One width-shifted view per kw; collapsing rows makes the three
            # kh taps *aligned* row slices of the same matrix (W % 8 == 0).
            xw = img[:, col0:col0 + W, :].reshape((H + 2) * W, C)
            xw = xw.astype(jnp.bfloat16)
            for kh in range(3):
                win = xw[kh * W: kh * W + HW, :]          # (HW, C) bf16
                acc = acc + jnp.dot(win, w_ref[3 * kh + kw],
                                    preferred_element_type=jnp.float32)
        return acc

    def instance_norm_relu(y):
        # Exact two-pass statistics over the full spatial extent (f32).
        mean = jnp.mean(y, axis=0, keepdims=True)          # (1, C)
        d = y - mean
        var = jnp.mean(d * d, axis=0, keepdims=True)       # (1, C)
        return jnp.maximum(d * lax.rsqrt(var + _EPS), 0.0)

    def kernel(x_ref, w1_ref, w2_ref, o_ref, h1pad_ref):
        # x_ref: (1, H+2, W+2, C) bf16 -- input image with a zero spatial halo.
        xpad = x_ref[0].astype(jnp.float32)                # (H+2, W+2, C) f32

        # ---- layer 1: conv1 -> InstanceNorm -> ReLU ------------------------
        h1 = instance_norm_relu(conv3x3(xpad, w1_ref, interior_col=1))

        # Rebuild a zero-halo image for the second conv inside VMEM.  The
        # interior starts at column _PAD_L so the partial store is
        # sublane-aligned; the halo columns/rows stay zero.
        h1pad_ref[...] = jnp.zeros(h1pad_ref.shape, h1pad_ref.dtype)
        h1pad_ref[1:H + 1, _PAD_L:_PAD_L + W, :] = h1.reshape(H, W, C)

        # ---- layer 2: conv2 + residual -> InstanceNorm -> ReLU --------------
        res = xpad[1:H + 1, 1:W + 1, :].reshape(HW, C)     # residual (f32)
        y2 = conv3x3(h1pad_ref[...], w2_ref, interior_col=_PAD_L) + res
        o_ref[0] = instance_norm_relu(y2).reshape(H, W, C)

    return kernel


def _vmem_limit_bytes(H, W, C):
    """Generous per-step VMEM budget, capped below the physical capacity."""
    img_pad = (H + 2) * (W + 2) * C
    scratch = (H + 2) * (_PAD_L + W + 1) * C
    hw = H * W * C
    need = (2 * img_pad * 2            # x blocks (bf16, double-buffered)
            + 4 * 9 * C * C * 2        # w1/w2 blocks (bf16, double-buffered)
            + 2 * hw * 4               # output blocks (f32, double-buffered)
            + scratch * 4              # h1 halo scratch (f32)
            + 24 * hw * 4              # in-flight f32 temporaries
            + (4 << 20))               # compiler headroom
    try:
        cap = int(pltpu.get_tpu_info().vmem_capacity_bytes)
    except Exception:                  # conservative fallback (v7x-sized)
        cap = 64 << 20
    return int(max(16 << 20, min(need, (3 * cap) // 4)))


def resblock_forward(x_nchw, params):
    """ResBlock forward.  params = (w1, b1, w2, b2) with torch OIHW weights.

    Conv biases are skipped on purpose: InstanceNorm2d(affine=False) removes
    any per-channel constant immediately after each conv, so they cancel.
    """
    w1, _b1, w2, _b2 = params
    B, C, H, W = x_nchw.shape

    # NCHW -> NHWC, add the 3x3 zero halo once, stream to the kernel in bf16.
    x_nhwc = jnp.transpose(x_nchw, (0, 2, 3, 1)).astype(jnp.float32)
    x_pad = jnp.pad(x_nhwc, ((0, 0), (1, 1), (1, 1), (0, 0))).astype(jnp.bfloat16)

    def prep_w(w):
        # torch (Cout, Cin, 3, 3) -> (3, 3, Cin, Cout) -> (9, Cin, Cout), bf16.
        return jnp.transpose(w, (2, 3, 1, 0)).reshape(9, C, C).astype(jnp.bfloat16)

    out_nhwc = pl.pallas_call(
        _make_resblock_kernel(H, W, C),
        out_shape=jax.ShapeDtypeStruct((B, H, W, C), jnp.float32),
        grid_spec=pltpu.PrefetchScalarGridSpec(
            num_scalar_prefetch=0,
            grid=(B,),
            in_specs=[
                pl.BlockSpec((1, H + 2, W + 2, C), lambda b: (b, 0, 0, 0)),
                pl.BlockSpec((9, C, C), lambda b: (0, 0, 0)),
                pl.BlockSpec((9, C, C), lambda b: (0, 0, 0)),
            ],
            out_specs=pl.BlockSpec((1, H, W, C), lambda b: (b, 0, 0, 0)),
            scratch_shapes=[
                pltpu.VMEM((H + 2, _PAD_L + W + 1, C), jnp.float32),
            ],
        ),
        compiler_params=pltpu.CompilerParams(
            dimension_semantics=("parallel",),
            vmem_limit_bytes=_vmem_limit_bytes(H, W, C)),
    )(x_pad, prep_w(w1), prep_w(w2))

    return jnp.transpose(out_nhwc, (0, 3, 1, 2))   # back to NCHW


# -----------------------------------------------------------------------------
# Pure-JAX f32 reference (for correctness check)
# -----------------------------------------------------------------------------
def reference_forward(x_nchw, params):
    w1, b1, w2, b2 = params
    x = x_nchw.astype(jnp.float32)

    def conv(h, w, b):
        y = lax.conv_general_dilated(
            h, w, window_strides=(1, 1), padding=((1, 1), (1, 1)),
            dimension_numbers=("NCHW", "OIHW", "NCHW"))
        return y + b.reshape(1, -1, 1, 1)

    def instance_norm(y):
        mean = jnp.mean(y, axis=(2, 3), keepdims=True)
        var = jnp.mean((y - mean) ** 2, axis=(2, 3), keepdims=True)
        return (y - mean) / jnp.sqrt(var + _EPS)

    h = jnp.maximum(instance_norm(conv(x, w1, b1)), 0.0)
    y = conv(h, w2, b2) + x
    return jnp.maximum(instance_norm(y), 0.0)


if __name__ == "__main__":
    f = 32
    B, H, W = 2, 16, 16

    key = jax.random.PRNGKey(0)
    kx, k1, kb1, k2, kb2 = jax.random.split(key, 5)
    x = jax.random.normal(kx, (B, f, H, W), jnp.float32)
    w1 = jax.random.normal(k1, (f, f, 3, 3), jnp.float32) * 0.05
    b1 = jax.random.normal(kb1, (f,), jnp.float32) * 0.05
    w2 = jax.random.normal(k2, (f, f, 3, 3), jnp.float32) * 0.05
    b2 = jax.random.normal(kb2, (f,), jnp.float32) * 0.05
    params = (w1, b1, w2, b2)

    out = jax.block_until_ready(jax.jit(resblock_forward)(x, params))
    ref = jax.block_until_ready(reference_forward(x, params))

    assert out.shape == ref.shape == (B, f, H, W), (out.shape, ref.shape)
    err = float(jnp.max(jnp.abs(out - ref)))
    assert err < 5e-2, f"max abs error {err}"   # bf16 matmul inputs, f32 math
    print("KERNEL_OK")
</pallas_src>

<mosaic_0001>
module attributes {stable_mosaic.version = 11 : i64} {
  func.func @kernel(%arg0: i32, %arg1: memref<1x18x18x32xbf16, #tpu.memory_space<vmem>>, %arg2: memref<9x32x32xbf16, #tpu.memory_space<vmem>>, %arg3: memref<9x32x32xbf16, #tpu.memory_space<vmem>>, %arg4: memref<1x16x16x32xf32, #tpu.memory_space<vmem>>, %arg5: memref<18x25x32xf32, #tpu.memory_space<vmem>>) attributes {dimension_semantics = [#tpu.dimension_semantics<parallel>], iteration_bounds = array<i64: 2>, scalar_prefetch = 0 : i64, scratch_operands = 1 : i64, tpu.core_type = #tpu.core_type<tc>, window_params = [{transform_indices = @transform_0, window_bounds = array<i64: 1, 18, 18, 32>}, {pipeline_mode = #tpu.pipeline_mode<synchronous>, transform_indices = @transform_1, window_bounds = array<i64: 9, 32, 32>}, {pipeline_mode = #tpu.pipeline_mode<synchronous>, transform_indices = @transform_2, window_bounds = array<i64: 9, 32, 32>}, {transform_indices = @transform_3, window_bounds = array<i64: 1, 16, 16, 32>}]} {
    %c0 = arith.constant 0 : index
    %c0_0 = arith.constant 0 : index
    %c0_1 = arith.constant 0 : index
    %c0_2 = arith.constant 0 : index
    %0 = vector.load %arg1[%c0, %c0_0, %c0_1, %c0_2] : memref<1x18x18x32xbf16, #tpu.memory_space<vmem>>, vector<1x18x18x32xbf16>
    %1 = vector.shape_cast %0 : vector<1x18x18x32xbf16> to vector<18x18x32xbf16>
    %2 = arith.extf %1 : vector<18x18x32xbf16> to vector<18x18x32xf32>
    %cst = arith.constant 0.000000e+00 : f32
    %3 = vector.broadcast %cst : f32 to vector<256x32xf32>
    %4 = vector.extract_strided_slice %2 {offsets = [0, 0, 0], sizes = [18, 16, 32], strides = [1, 1, 1]} : vector<18x18x32xf32> to vector<18x16x32xf32>
    %5 = vector.shape_cast %4 : vector<18x16x32xf32> to vector<288x32xf32>
    %6 = arith.truncf %5 : vector<288x32xf32> to vector<288x32xbf16>
    %7 = vector.extract_strided_slice %6 {offsets = [0, 0], sizes = [256, 32], strides = [1, 1]} : vector<288x32xbf16> to vector<256x32xbf16>
    %c0_3 = arith.constant 0 : index
    %c0_4 = arith.constant 0 : index
    %c0_5 = arith.constant 0 : index
    %8 = vector.load %arg2[%c0_3, %c0_4, %c0_5] : memref<9x32x32xbf16, #tpu.memory_space<vmem>>, vector<1x32x32xbf16>
    %9 = vector.shape_cast %8 : vector<1x32x32xbf16> to vector<32x32xbf16>
    %cst_6 = arith.constant dense<0.000000e+00> : vector<256x32xf32>
    %10 = tpu.matmul %7, %9, %cst_6 {dimension_numbers = #tpu.dot_dimension_numbers<[1], [0], [0], [1], [0, 0, 1, 1], [], []>} : vector<256x32xbf16>, vector<32x32xbf16>, vector<256x32xf32> -> vector<256x32xf32>
    %11 = arith.addf %3, %10 : vector<256x32xf32>
    %12 = vector.extract_strided_slice %6 {offsets = [16, 0], sizes = [256, 32], strides = [1, 1]} : vector<288x32xbf16> to vector<256x32xbf16>
    %c3 = arith.constant 3 : index
    %c0_7 = arith.constant 0 : index
    %c0_8 = arith.constant 0 : index
    %13 = vector.load %arg2[%c3, %c0_7, %c0_8] : memref<9x32x32xbf16, #tpu.memory_space<vmem>>, vector<1x32x32xbf16>
    %14 = vector.shape_cast %13 : vector<1x32x32xbf16> to vector<32x32xbf16>
    %cst_9 = arith.constant dense<0.000000e+00> : vector<256x32xf32>
    %15 = tpu.matmul %12, %14, %cst_9 {dimension_numbers = #tpu.dot_dimension_numbers<[1], [0], [0], [1], [0, 0, 1, 1], [], []>} : vector<256x32xbf16>, vector<32x32xbf16>, vector<256x32xf32> -> vector<256x32xf32>
    %16 = arith.addf %11, %15 : vector<256x32xf32>
    %17 = vector.extract_strided_slice %6 {offsets = [32, 0], sizes = [256, 32], strides = [1, 1]} : vector<288x32xbf16> to vector<256x32xbf16>
    %c6 = arith.constant 6 : index
    %c0_10 = arith.constant 0 : index
    %c0_11 = arith.constant 0 : index
    %18 = vector.load %arg2[%c6, %c0_10, %c0_11] : memref<9x32x32xbf16, #tpu.memory_space<vmem>>, vector<1x32x32xbf16>
    %19 = vector.shape_cast %18 : vector<1x32x32xbf16> to vector<32x32xbf16>
    %cst_12 = arith.constant dense<0.000000e+00> : vector<256x32xf32>
    %20 = tpu.matmul %17, %19, %cst_12 {dimension_numbers = #tpu.dot_dimension_numbers<[1], [0], [0], [1], [0, 0, 1, 1], [], []>} : vector<256x32xbf16>, vector<32x32xbf16>, vector<256x32xf32> -> vector<256x32xf32>
    %21 = arith.addf %16, %20 : vector<256x32xf32>
    %22 = vector.extract_strided_slice %2 {offsets = [0, 1, 0], sizes = [18, 16, 32], strides = [1, 1, 1]} : vector<18x18x32xf32> to vector<18x16x32xf32>
    %23 = vector.shape_cast %22 : vector<18x16x32xf32> to vector<288x32xf32>
    %24 = arith.truncf %23 : vector<288x32xf32> to vector<288x32xbf16>
    %25 = vector.extract_strided_slice %24 {offsets = [0, 0], sizes = [256, 32], strides = [1, 1]} : vector<288x32xbf16> to vector<256x32xbf16>
    %c1 = arith.constant 1 : index
    %c0_13 = arith.constant 0 : index
    %c0_14 = arith.constant 0 : index
    %26 = vector.load %arg2[%c1, %c0_13, %c0_14] : memref<9x32x32xbf16, #tpu.memory_space<vmem>>, vector<1x32x32xbf16>
    %27 = vector.shape_cast %26 : vector<1x32x32xbf16> to vector<32x32xbf16>
    %cst_15 = arith.constant dense<0.000000e+00> : vector<256x32xf32>
    %28 = tpu.matmul %25, %27, %cst_15 {dimension_numbers = #tpu.dot_dimension_numbers<[1], [0], [0], [1], [0, 0, 1, 1], [], []>} : vector<256x32xbf16>, vector<32x32xbf16>, vector<256x32xf32> -> vector<256x32xf32>
    %29 = arith.addf %21, %28 : vector<256x32xf32>
    %30 = vector.extract_strided_slice %24 {offsets = [16, 0], sizes = [256, 32], strides = [1, 1]} : vector<288x32xbf16> to vector<256x32xbf16>
    %c4 = arith.constant 4 : index
    %c0_16 = arith.constant 0 : index
    %c0_17 = arith.constant 0 : index
    %31 = vector.load %arg2[%c4, %c0_16, %c0_17] : memref<9x32x32xbf16, #tpu.memory_space<vmem>>, vector<1x32x32xbf16>
    %32 = vector.shape_cast %31 : vector<1x32x32xbf16> to vector<32x32xbf16>
    %cst_18 = arith.constant dense<0.000000e+00> : vector<256x32xf32>
    %33 = tpu.matmul %30, %32, %cst_18 {dimension_numbers = #tpu.dot_dimension_numbers<[1], [0], [0], [1], [0, 0, 1, 1], [], []>} : vector<256x32xbf16>, vector<32x32xbf16>, vector<256x32xf32> -> vector<256x32xf32>
    %34 = arith.addf %29, %33 : vector<256x32xf32>
    %35 = vector.extract_strided_slice %24 {offsets = [32, 0], sizes = [256, 32], strides = [1, 1]} : vector<288x32xbf16> to vector<256x32xbf16>
    %c7 = arith.constant 7 : index
    %c0_19 = arith.constant 0 : index
    %c0_20 = arith.constant 0 : index
    %36 = vector.load %arg2[%c7, %c0_19, %c0_20] : memref<9x32x32xbf16, #tpu.memory_space<vmem>>, vector<1x32x32xbf16>
    %37 = vector.shape_cast %36 : vector<1x32x32xbf16> to vector<32x32xbf16>
    %cst_21 = arith.constant dense<0.000000e+00> : vector<256x32xf32>
    %38 = tpu.matmul %35, %37, %cst_21 {dimension_numbers = #tpu.dot_dimension_numbers<[1], [0], [0], [1], [0, 0, 1, 1], [], []>} : vector<256x32xbf16>, vector<32x32xbf16>, vector<256x32xf32> -> vector<256x32xf32>
    %39 = arith.addf %34, %38 : vector<256x32xf32>
    %40 = vector.extract_strided_slice %2 {offsets = [0, 2, 0], sizes = [18, 16, 32], strides = [1, 1, 1]} : vector<18x18x32xf32> to vector<18x16x32xf32>
    %41 = vector.shape_cast %40 : vector<18x16x32xf32> to vector<288x32xf32>
    %42 = arith.truncf %41 : vector<288x32xf32> to vector<288x32xbf16>
    %43 = vector.extract_strided_slice %42 {offsets = [0, 0], sizes = [256, 32], strides = [1, 1]} : vector<288x32xbf16> to vector<256x32xbf16>
    %c2 = arith.constant 2 : index
    %c0_22 = arith.constant 0 : index
    %c0_23 = arith.constant 0 : index
    %44 = vector.load %arg2[%c2, %c0_22, %c0_23] : memref<9x32x32xbf16, #tpu.memory_space<vmem>>, vector<1x32x32xbf16>
    %45 = vector.shape_cast %44 : vector<1x32x32xbf16> to vector<32x32xbf16>
    %cst_24 = arith.constant dense<0.000000e+00> : vector<256x32xf32>
    %46 = tpu.matmul %43, %45, %cst_24 {dimension_numbers = #tpu.dot_dimension_numbers<[1], [0], [0], [1], [0, 0, 1, 1], [], []>} : vector<256x32xbf16>, vector<32x32xbf16>, vector<256x32xf32> -> vector<256x32xf32>
    %47 = arith.addf %39, %46 : vector<256x32xf32>
    %48 = vector.extract_strided_slice %42 {offsets = [16, 0], sizes = [256, 32], strides = [1, 1]} : vector<288x32xbf16> to vector<256x32xbf16>
    %c5 = arith.constant 5 : index
    %c0_25 = arith.constant 0 : index
    %c0_26 = arith.constant 0 : index
    %49 = vector.load %arg2[%c5, %c0_25, %c0_26] : memref<9x32x32xbf16, #tpu.memory_space<vmem>>, vector<1x32x32xbf16>
    %50 = vector.shape_cast %49 : vector<1x32x32xbf16> to vector<32x32xbf16>
    %cst_27 = arith.constant dense<0.000000e+00> : vector<256x32xf32>
    %51 = tpu.matmul %48, %50, %cst_27 {dimension_numbers = #tpu.dot_dimension_numbers<[1], [0], [0], [1], [0, 0, 1, 1], [], []>} : vector<256x32xbf16>, vector<32x32xbf16>, vector<256x32xf32> -> vector<256x32xf32>
    %52 = arith.addf %47, %51 : vector<256x32xf32>
    %53 = vector.extract_strided_slice %42 {offsets = [32, 0], sizes = [256, 32], strides = [1, 1]} : vector<288x32xbf16> to vector<256x32xbf16>
    %c8 = arith.constant 8 : index
    %c0_28 = arith.constant 0 : index
    %c0_29 = arith.constant 0 : index
    %54 = vector.load %arg2[%c8, %c0_28, %c0_29] : memref<9x32x32xbf16, #tpu.memory_space<vmem>>, vector<1x32x32xbf16>
    %55 = vector.shape_cast %54 : vector<1x32x32xbf16> to vector<32x32xbf16>
    %cst_30 = arith.constant dense<0.000000e+00> : vector<256x32xf32>
    %56 = tpu.matmul %53, %55, %cst_30 {dimension_numbers = #tpu.dot_dimension_numbers<[1], [0], [0], [1], [0, 0, 1, 1], [], []>} : vector<256x32xbf16>, vector<32x32xbf16>, vector<256x32xf32> -> vector<256x32xf32>
    %57 = arith.addf %52, %56 : vector<256x32xf32>
    %cst_31 = arith.constant dense<0.000000e+00> : vector<32xf32>
    %58 = vector.multi_reduction <add>, %57, %cst_31 [0] : vector<256x32xf32> to vector<32xf32>
    %59 = vector.shape_cast %58 : vector<32xf32> to vector<1x32xf32>
    %cst_32 = arith.constant 2.560000e+02 : f32
    %60 = vector.broadcast %cst_32 : f32 to vector<1x32xf32>
    %61 = arith.divf %59, %60 : vector<1x32xf32>
    %62 = vector.broadcast %61 : vector<1x32xf32> to vector<256x32xf32>
    %63 = arith.subf %57, %62 : vector<256x32xf32>
    %64 = arith.mulf %63, %63 : vector<256x32xf32>
    %cst_33 = arith.constant dense<0.000000e+00> : vector<32xf32>
    %65 = vector.multi_reduction <add>, %64, %cst_33 [0] : vector<256x32xf32> to vector<32xf32>
    %66 = vector.shape_cast %65 : vector<32xf32> to vector<1x32xf32>
    %cst_34 = arith.constant 2.560000e+02 : f32
    %67 = vector.broadcast %cst_34 : f32 to vector<1x32xf32>
    %68 = arith.divf %66, %67 : vector<1x32xf32>
    %cst_35 = arith.constant 9.99999974E-6 : f32
    %69 = vector.broadcast %cst_35 : f32 to vector<1x32xf32>
    %70 = arith.addf %68, %69 : vector<1x32xf32>
    %71 = math.rsqrt %70 : vector<1x32xf32>
    %72 = vector.broadcast %71 : vector<1x32xf32> to vector<256x32xf32>
    %73 = arith.mulf %63, %72 : vector<256x32xf32>
    %cst_36 = arith.constant 0.000000e+00 : f32
    %74 = vector.broadcast %cst_36 : f32 to vector<256x32xf32>
    %75 = arith.maximumf %73, %74 : vector<256x32xf32>
    %cst_37 = arith.constant 0.000000e+00 : f32
    %76 = vector.broadcast %cst_37 : f32 to vector<18x25x32xf32>
    %c0_38 = arith.constant 0 : index
    %c0_39 = arith.constant 0 : index
    %c0_40 = arith.constant 0 : index
    %77 = vector.load %arg5[%c0_38, %c0_39, %c0_40] : memref<18x25x32xf32, #tpu.memory_space<vmem>>, vector<18x25x32xf32>
    tpu.vector_store %arg5[%c0_38, %c0_39, %c0_40], %76 {strides = array<i32>} : memref<18x25x32xf32, #tpu.memory_space<vmem>>, vector<18x25x32xf32>,
    %78 = vector.shape_cast %75 : vector<256x32xf32> to vector<16x16x32xf32>
    %c1_41 = arith.constant 1 : index
    %c8_42 = arith.constant 8 : index
    %c0_43 = arith.constant 0 : index
    %79 = vector.load %arg5[%c1_41, %c8_42, %c0_43] : memref<18x25x32xf32, #tpu.memory_space<vmem>>, vector<16x16x32xf32>
    tpu.vector_store %arg5[%c1_41, %c8_42, %c0_43], %78 {strides = array<i32>} : memref<18x25x32xf32, #tpu.memory_space<vmem>>, vector<16x16x32xf32>,
    %80 = vector.extract_strided_slice %2 {offsets = [1, 1, 0], sizes = [16, 16, 32], strides = [1, 1, 1]} : vector<18x18x32xf32> to vector<16x16x32xf32>
    %81 = vector.shape_cast %80 : vector<16x16x32xf32> to vector<256x32xf32>
    %c0_44 = arith.constant 0 : index
    %c0_45 = arith.constant 0 : index
    %c0_46 = arith.constant 0 : index
    %82 = vector.load %arg5[%c0_44, %c0_45, %c0_46] : memref<18x25x32xf32, #tpu.memory_space<vmem>>, vector<18x25x32xf32>
    %cst_47 = arith.constant 0.000000e+00 : f32
    %83 = vector.broadcast %cst_47 : f32 to vector<256x32xf32>
    %84 = vector.extract_strided_slice %82 {offsets = [0, 7, 0], sizes = [18, 16, 32], strides = [1, 1, 1]} : vector<18x25x32xf32> to vector<18x16x32xf32>
    %85 = vector.shape_cast %84 : vector<18x16x32xf32> to vector<288x32xf32>
    %86 = arith.truncf %85 : vector<288x32xf32> to vector<288x32xbf16>
    %87 = vector.extract_strided_slice %86 {offsets = [0, 0], sizes = [256, 32], strides = [1, 1]} : vector<288x32xbf16> to vector<256x32xbf16>
    %c0_48 = arith.constant 0 : index
    %c0_49 = arith.constant 0 : index
    %c0_50 = arith.constant 0 : index
    %88 = vector.load %arg3[%c0_48, %c0_49, %c0_50] : memref<9x32x32xbf16, #tpu.memory_space<vmem>>, vector<1x32x32xbf16>
    %89 = vector.shape_cast %88 : vector<1x32x32xbf16> to vector<32x32xbf16>
    %cst_51 = arith.constant dense<0.000000e+00> : vector<256x32xf32>
    %90 = tpu.matmul %87, %89, %cst_51 {dimension_numbers = #tpu.dot_dimension_numbers<[1], [0], [0], [1], [0, 0, 1, 1], [], []>} : vector<256x32xbf16>, vector<32x32xbf16>, vector<256x32xf32> -> vector<256x32xf32>
    %91 = arith.addf %83, %90 : vector<256x32xf32>
    %92 = vector.extract_strided_slice %86 {offsets = [16, 0], sizes = [256, 32], strides = [1, 1]} : vector<288x32xbf16> to vector<256x32xbf16>
    %c3_52 = arith.constant 3 : index
    %c0_53 = arith.constant 0 : index
    %c0_54 = arith.constant 0 : index
    %93 = vector.load %arg3[%c3_52, %c0_53, %c0_54] : memref<9x32x32xbf16, #tpu.memory_space<vmem>>, vector<1x32x32xbf16>
    %94 = vector.shape_cast %93 : vector<1x32x32xbf16> to vector<32x32xbf16>
    %cst_55 = arith.constant dense<0.000000e+00> : vector<256x32xf32>
    %95 = tpu.matmul %92, %94, %cst_55 {dimension_numbers = #tpu.dot_dimension_numbers<[1], [0], [0], [1], [0, 0, 1, 1], [], []>} : vector<256x32xbf16>, vector<32x32xbf16>, vector<256x32xf32> -> vector<256x32xf32>
    %96 = arith.addf %91, %95 : vector<256x32xf32>
    %97 = vector.extract_strided_slice %86 {offsets = [32, 0], sizes = [256, 32], strides = [1, 1]} : vector<288x32xbf16> to vector<256x32xbf16>
    %c6_56 = arith.constant 6 : index
    %c0_57 = arith.constant 0 : index
    %c0_58 = arith.constant 0 : index
    %98 = vector.load %arg3[%c6_56, %c0_57, %c0_58] : memref<9x32x32xbf16, #tpu.memory_space<vmem>>, vector<1x32x32xbf16>
    %99 = vector.shape_cast %98 : vector<1x32x32xbf16> to vector<32x32xbf16>
    %cst_59 = arith.constant dense<0.000000e+00> : vector<256x32xf32>
    %100 = tpu.matmul %97, %99, %cst_59 {dimension_numbers = #tpu.dot_dimension_numbers<[1], [0], [0], [1], [0, 0, 1, 1], [], []>} : vector<256x32xbf16>, vector<32x32xbf16>, vector<256x32xf32> -> vector<256x32xf32>
    %101 = arith.addf %96, %100 : vector<256x32xf32>
    %102 = vector.extract_strided_slice %82 {offsets = [0, 8, 0], sizes = [18, 16, 32], strides = [1, 1, 1]} : vector<18x25x32xf32> to vector<18x16x32xf32>
    %103 = vector.shape_cast %102 : vector<18x16x32xf32> to vector<288x32xf32>
    %104 = arith.truncf %103 : vector<288x32xf32> to vector<288x32xbf16>
    %105 = vector.extract_strided_slice %104 {offsets = [0, 0], sizes = [256, 32], strides = [1, 1]} : vector<288x32xbf16> to vector<256x32xbf16>
    %c1_60 = arith.constant 1 : index
    %c0_61 = arith.constant 0 : index
    %c0_62 = arith.constant 0 : index
    %106 = vector.load %arg3[%c1_60, %c0_61, %c0_62] : memref<9x32x32xbf16, #tpu.memory_space<vmem>>, vector<1x32x32xbf16>
    %107 = vector.shape_cast %106 : vector<1x32x32xbf16> to vector<32x32xbf16>
    %cst_63 = arith.constant dense<0.000000e+00> : vector<256x32xf32>
    %108 = tpu.matmul %105, %107, %cst_63 {dimension_numbers = #tpu.dot_dimension_numbers<[1], [0], [0], [1], [0, 0, 1, 1], [], []>} : vector<256x32xbf16>, vector<32x32xbf16>, vector<256x32xf32> -> vector<256x32xf32>
    %109 = arith.addf %101, %108 : vector<256x32xf32>
    %110 = vector.extract_strided_slice %104 {offsets = [16, 0], sizes = [256, 32], strides = [1, 1]} : vector<288x32xbf16> to vector<256x32xbf16>
    %c4_64 = arith.constant 4 : index
    %c0_65 = arith.constant 0 : index
    %c0_66 = arith.constant 0 : index
    %111 = vector.load %arg3[%c4_64, %c0_65, %c0_66] : memref<9x32x32xbf16, #tpu.memory_space<vmem>>, vector<1x32x32xbf16>
    %112 = vector.shape_cast %111 : vector<1x32x32xbf16> to vector<32x32xbf16>
    %cst_67 = arith.constant dense<0.000000e+00> : vector<256x32xf32>
    %113 = tpu.matmul %110, %112, %cst_67 {dimension_numbers = #tpu.dot_dimension_numbers<[1], [0], [0], [1], [0, 0, 1, 1], [], []>} : vector<256x32xbf16>, vector<32x32xbf16>, vector<256x32xf32> -> vector<256x32xf32>
    %114 = arith.addf %109, %113 : vector<256x32xf32>
    %115 = vector.extract_strided_slice %104 {offsets = [32, 0], sizes = [256, 32], strides = [1, 1]} : vector<288x32xbf16> to vector<256x32xbf16>
    %c7_68 = arith.constant 7 : index
    %c0_69 = arith.constant 0 : index
    %c0_70 = arith.constant 0 : index
    %116 = vector.load %arg3[%c7_68, %c0_69, %c0_70] : memref<9x32x32xbf16, #tpu.memory_space<vmem>>, vector<1x32x32xbf16>
    %117 = vector.shape_cast %116 : vector<1x32x32xbf16> to vector<32x32xbf16>
    %cst_71 = arith.constant dense<0.000000e+00> : vector<256x32xf32>
    %118 = tpu.matmul %115, %117, %cst_71 {dimension_numbers = #tpu.dot_dimension_numbers<[1], [0], [0], [1], [0, 0, 1, 1], [], []>} : vector<256x32xbf16>, vector<32x32xbf16>, vector<256x32xf32> -> vector<256x32xf32>
    %119 = arith.addf %114, %118 : vector<256x32xf32>
    %120 = vector.extract_strided_slice %82 {offsets = [0, 9, 0], sizes = [18, 16, 32], strides = [1, 1, 1]} : vector<18x25x32xf32> to vector<18x16x32xf32>
    %121 = vector.shape_cast %120 : vector<18x16x32xf32> to vector<288x32xf32>
    %122 = arith.truncf %121 : vector<288x32xf32> to vector<288x32xbf16>
    %123 = vector.extract_strided_slice %122 {offsets = [0, 0], sizes = [256, 32], strides = [1, 1]} : vector<288x32xbf16> to vector<256x32xbf16>
    %c2_72 = arith.constant 2 : index
    %c0_73 = arith.constant 0 : index
    %c0_74 = arith.constant 0 : index
    %124 = vector.load %arg3[%c2_72, %c0_73, %c0_74] : memref<9x32x32xbf16, #tpu.memory_space<vmem>>, vector<1x32x32xbf16>
    %125 = vector.shape_cast %124 : vector<1x32x32xbf16> to vector<32x32xbf16>
    %cst_75 = arith.constant dense<0.000000e+00> : vector<256x32xf32>
    %126 = tpu.matmul %123, %125, %cst_75 {dimension_numbers = #tpu.dot_dimension_numbers<[1], [0], [0], [1], [0, 0, 1, 1], [], []>} : vector<256x32xbf16>, vector<32x32xbf16>, vector<256x32xf32> -> vector<256x32xf32>
    %127 = arith.addf %119, %126 : vector<256x32xf32>
    %128 = vector.extract_strided_slice %122 {offsets = [16, 0], sizes = [256, 32], strides = [1, 1]} : vector<288x32xbf16> to vector<256x32xbf16>
    %c5_76 = arith.constant 5 : index
    %c0_77 = arith.constant 0 : index
    %c0_78 = arith.constant 0 : index
    %129 = vector.load %arg3[%c5_76, %c0_77, %c0_78] : memref<9x32x32xbf16, #tpu.memory_space<vmem>>, vector<1x32x32xbf16>
    %130 = vector.shape_cast %129 : vector<1x32x32xbf16> to vector<32x32xbf16>
    %cst_79 = arith.constant dense<0.000000e+00> : vector<256x32xf32>
    %131 = tpu.matmul %128, %130, %cst_79 {dimension_numbers = #tpu.dot_dimension_numbers<[1], [0], [0], [1], [0, 0, 1, 1], [], []>} : vector<256x32xbf16>, vector<32x32xbf16>, vector<256x32xf32> -> vector<256x32xf32>
    %132 = arith.addf %127, %131 : vector<256x32xf32>
    %133 = vector.extract_strided_slice %122 {offsets = [32, 0], sizes = [256, 32], strides = [1, 1]} : vector<288x32xbf16> to vector<256x32xbf16>
    %c8_80 = arith.constant 8 : index
    %c0_81 = arith.constant 0 : index
    %c0_82 = arith.constant 0 : index
    %134 = vector.load %arg3[%c8_80, %c0_81, %c0_82] : memref<9x32x32xbf16, #tpu.memory_space<vmem>>, vector<1x32x32xbf16>
    %135 = vector.shape_cast %134 : vector<1x32x32xbf16> to vector<32x32xbf16>
    %cst_83 = arith.constant dense<0.000000e+00> : vector<256x32xf32>
    %136 = tpu.matmul %133, %135, %cst_83 {dimension_numbers = #tpu.dot_dimension_numbers<[1], [0], [0], [1], [0, 0, 1, 1], [], []>} : vector<256x32xbf16>, vector<32x32xbf16>, vector<256x32xf32> -> vector<256x32xf32>
    %137 = arith.addf %132, %136 : vector<256x32xf32>
    %138 = arith.addf %137, %81 : vector<256x32xf32>
    %cst_84 = arith.constant dense<0.000000e+00> : vector<32xf32>
    %139 = vector.multi_reduction <add>, %138, %cst_84 [0] : vector<256x32xf32> to vector<32xf32>
    %140 = vector.shape_cast %139 : vector<32xf32> to vector<1x32xf32>
    %cst_85 = arith.constant 2.560000e+02 : f32
    %141 = vector.broadcast %cst_85 : f32 to vector<1x32xf32>
    %142 = arith.divf %140, %141 : vector<1x32xf32>
    %143 = vector.broadcast %142 : vector<1x32xf32> to vector<256x32xf32>
    %144 = arith.subf %138, %143 : vector<256x32xf32>
    %145 = arith.mulf %144, %144 : vector<256x32xf32>
    %cst_86 = arith.constant dense<0.000000e+00> : vector<32xf32>
    %146 = vector.multi_reduction <add>, %145, %cst_86 [0] : vector<256x32xf32> to vector<32xf32>
    %147 = vector.shape_cast %146 : vector<32xf32> to vector<1x32xf32>
    %cst_87 = arith.constant 2.560000e+02 : f32
    %148 = vector.broadcast %cst_87 : f32 to vector<1x32xf32>
    %149 = arith.divf %147, %148 : vector<1x32xf32>
    %cst_88 = arith.constant 9.99999974E-6 : f32
    %150 = vector.broadcast %cst_88 : f32 to vector<1x32xf32>
    %151 = arith.addf %149, %150 : vector<1x32xf32>
    %152 = math.rsqrt %151 : vector<1x32xf32>
    %153 = vector.broadcast %152 : vector<1x32xf32> to vector<256x32xf32>
    %154 = arith.mulf %144, %153 : vector<256x32xf32>
    %cst_89 = arith.constant 0.000000e+00 : f32
    %155 = vector.broadcast %cst_89 : f32 to vector<256x32xf32>
    %156 = arith.maximumf %154, %155 : vector<256x32xf32>
    %157 = vector.shape_cast %156 : vector<256x32xf32> to vector<16x16x32xf32>
    %c0_90 = arith.constant 0 : index
    %c0_91 = arith.constant 0 : index
    %c0_92 = arith.constant 0 : index
    %c0_93 = arith.constant 0 : index
    %158 = vector.load %arg4[%c0_90, %c0_91, %c0_92, %c0_93] : memref<1x16x16x32xf32, #tpu.memory_space<vmem>>, vector<1x16x16x32xf32>
    %159 = vector.shape_cast %158 : vector<1x16x16x32xf32> to vector<16x16x32xf32>
    %160 = vector.shape_cast %157 : vector<16x16x32xf32> to vector<1x16x16x32xf32>
    tpu.vector_store %arg4[%c0_90, %c0_91, %c0_92, %c0_93], %160 {strides = array<i32>} : memref<1x16x16x32xf32, #tpu.memory_space<vmem>>, vector<1x16x16x32xf32>,
    return
  }
  func.func @transform_0(%arg0: i32) -> (i32, i32, i32, i32) {
    %c0_i32 = arith.constant 0 : i32
    %c0_i32_0 = arith.constant 0 : i32
    %c0_i32_1 = arith.constant 0 : i32
    %c0_i32_2 = arith.constant 0 : i32
    return %arg0, %c0_i32, %c0_i32_0, %c0_i32_1 : i32, i32, i32, i32
  }
  func.func @transform_1(%arg0: i32) -> (i32, i32, i32) {
    %c0_i32 = arith.constant 0 : i32
    %c0_i32_0 = arith.constant 0 : i32
    %c0_i32_1 = arith.constant 0 : i32
    %c0_i32_2 = arith.constant 0 : i32
    return %c0_i32, %c0_i32_0, %c0_i32_1 : i32, i32, i32
  }
  func.func @transform_2(%arg0: i32) -> (i32, i32, i32) {
    %c0_i32 = arith.constant 0 : i32
    %c0_i32_0 = arith.constant 0 : i32
    %c0_i32_1 = arith.constant 0 : i32
    %c0_i32_2 = arith.constant 0 : i32
    return %c0_i32, %c0_i32_0, %c0_i32_1 : i32, i32, i32
  }
  func.func @transform_3(%arg0: i32) -> (i32, i32, i32, i32) {
    %c0_i32 = arith.constant 0 : i32
    %c0_i32_0 = arith.constant 0 : i32
    %c0_i32_1 = arith.constant 0 : i32
    %c0_i32_2 = arith.constant 0 : i32
    return %arg0, %c0_i32, %c0_i32_0, %c0_i32_1 : i32, i32, i32, i32
  }
}

</mosaic_0001>

<llo_original>
// kernel: resblock_forward.1
$region0: #{resblock_forward.1}
  #allocation0 [shape = 'u32[]', space=smem, size = 0x4, offset = 0x4, fixed_abs, tag = 'smem constant byte address 0x4 - core index']
  #allocation1 [shape = 'u32[144,128]{1,0:T(1,128)}', space=vmem, size = 0x12000, scoped, tag = 'internal scratch']
  #allocation2 [shape = 'f32[18,25,32]{2,1,0:T(8,128)}', space=vmem, size = 0x48000, scoped, tag = 'scratch operand']
  %s0 = inlined_call_operand.vmem [shape: bf16[2,18,18,32], index: 0, kind: input, shape index: {}]
  %s1 = inlined_call_operand.vmem [shape: bf16[9,32,32], index: 1, kind: input, shape index: {}]
  %s2 = inlined_call_operand.vmem [shape: bf16[9,32,32], index: 2, kind: input, shape index: {}]
  %s3 = inlined_call_operand.hbm [shape: f32[2,16,16,32], index: 3, kind: output, shape index: {}]
  %s4 = sld [smem:[#allocation0]]
  $region45: #{resblock_forward.1} parent=0
    _
  %s6 = ssub.s32 1, %s4
  %s7 = scalar_select 0, %s6, %s4
  $region1: #{resblock_forward.1} parent=0
    #allocation3 [shape = 'u8[262144]{0}', space=vmem, size = 0x40000, scoped, tag = 'output window, operand 0']
    #allocation4 [shape = 's32[2]{0}', space=sflag, size = 0x8, scoped, tag = 'scoped memory for resblock_forward.1']
    %8 = vsyncpa [#allocation4], 0
    %s9 = scalar_lea.sflag [#allocation4], 1
    %10 = vsyncpa %s9, 0
    loop: start=0, step=1, limit=4
    $region2: #{resblock_forward.1} parent=1 // loop_pre_header
      _
    $region3: #{resblock_forward.1} parent=1 // loop_header
      %s12 = sphi 0, %s16
      %p13 = scmp.ge.s32.totalorder %s12, 4
      %s22 = sphi 0, %s24
      %s25 = sphi 0, %s22
      %s26 = sphi 0, %s25
      %s42 = sphi 0, %s26
      %s46 = sphi 0, %s46
      %s48 = sphi 0, %s46
      %s49 = sphi 0, %s48
      %s63 = sphi 0, %s49
      %s67 = sphi 0, %s67
      %s69 = sphi 0, %s67
      %s70 = sphi 0, %s69
      %s84 = sphi 0, %s70
      %s90 = sphi 0, %s92
      %s93 = sphi 0, %s90
      %s94 = sphi 0, %s93
      %s110 = sphi 0, %s94
    $region4: #{resblock_forward.1} parent=1 // loop_header_branch
      %15 = sbr.rel (%p13) target = $region8
    $region5: #{resblock_forward.1} parent=1 // loop_body
      %s17 = ssub.s32 %s12, 1
      %s18 = ssub.s32 %s12, 2
      %s19 = sadd.s32 %s12, 1
      %s20 = ssub.s32 %s12, %s19
      %p21 = scmp.eq.s32.totalorder %s20, 0
      %s23 = sadd.s32 %s22, 1
      %s24 = scalar_select %p21, %s22, %s23
      %p27 = pneg %p21
      %p28 = scmp.eq.s32.totalorder %s12, 1
      %p29 = por %p27, %p28
      %p30 = scmp.ne.s32.totalorder %s22, %s25
      %p31 = scmp.eq.s32.totalorder %s12, 0
      %p32 = por %p30, %p31
      %p33 = scmp.ne.s32.totalorder %s22, %s25
      %p34 = scmp.eq.s32.totalorder %s17, 1
      %p35 = por %p33, %p34
      %p36 = scmp.ne.s32.totalorder %s25, %s26
      %p37 = scmp.eq.s32.totalorder %s17, 0
      %p38 = por %p36, %p37
      %p39 = scmp.ne.s32.totalorder %s25, %s26
      %p40 = scmp.eq.s32.totalorder %s18, 1
      %p41 = por %p39, %p40
      %p43 = scmp.ne.s32.totalorder %s26, %s42
      %p44 = scmp.eq.s32.totalorder %s18, 0
      %p45 = por %p43, %p44
      %s47 = sadd.s32 %s46, 1
      %p50 = scmp.eq.s32.totalorder %s12, 1
      %p51 = scmp.ne.s32.totalorder %s46, %s48
      %p52 = scmp.eq.s32.totalorder %s12, 0
      %p53 = por %p51, %p52
      %p54 = scmp.ne.s32.totalorder %s46, %s48
      %p55 = scmp.eq.s32.totalorder %s17, 1
      %p56 = por %p54, %p55
      %p57 = scmp.ne.s32.totalorder %s48, %s49
      %p58 = scmp.eq.s32.totalorder %s17, 0
      %p59 = por %p57, %p58
      %p60 = scmp.ne.s32.totalorder %s48, %s49
      %p61 = scmp.eq.s32.totalorder %s18, 1
      %p62 = por %p60, %p61
      %p64 = scmp.ne.s32.totalorder %s49, %s63
      %p65 = scmp.eq.s32.totalorder %s18, 0
      %p66 = por %p64, %p65
      %s68 = sadd.s32 %s67, 1
      %p71 = scmp.eq.s32.totalorder %s12, 1
      %p72 = scmp.ne.s32.totalorder %s67, %s69
      %p73 = scmp.eq.s32.totalorder %s12, 0
      %p74 = por %p72, %p73
      %p75 = scmp.ne.s32.totalorder %s67, %s69
      %p76 = scmp.eq.s32.totalorder %s17, 1
      %p77 = por %p75, %p76
      %p78 = scmp.ne.s32.totalorder %s69, %s70
      %p79 = scmp.eq.s32.totalorder %s17, 0
      %p80 = por %p78, %p79
      %p81 = scmp.ne.s32.totalorder %s69, %s70
      %p82 = scmp.eq.s32.totalorder %s18, 1
      %p83 = por %p81, %p82
      %p85 = scmp.ne.s32.totalorder %s70, %s84
      %p86 = scmp.eq.s32.totalorder %s18, 0
      %p87 = por %p85, %p86
      %s88 = ssub.s32 %s12, %s19
      %p89 = scmp.eq.s32.totalorder %s88, 0
      %s91 = sadd.s32 %s90, 1
      %s92 = scalar_select %p89, %s90, %s91
      %p95 = pneg %p89
      %p96 = scmp.eq.s32.totalorder %s12, 1
      %p97 = por %p95, %p96
      %p98 = scmp.ne.s32.totalorder %s90, %s93
      %p99 = scmp.eq.s32.totalorder %s12, 0
      %p100 = por %p98, %p99
      %p101 = scmp.ne.s32.totalorder %s90, %s93
      %p102 = scmp.eq.s32.totalorder %s17, 1
      %p103 = por %p101, %p102
      %p104 = scmp.ne.s32.totalorder %s93, %s94
      %p105 = scmp.eq.s32.totalorder %s17, 0
      %p106 = por %p104, %p105
      %p107 = scmp.ne.s32.totalorder %s93, %s94
      %p108 = scmp.eq.s32.totalorder %s18, 1
      %p109 = por %p107, %p108
      %p111 = scmp.ne.s32.totalorder %s94, %s110
      %p112 = scmp.eq.s32.totalorder %s18, 0
      %p113 = por %p111, %p112
      %p114 = scmp.le.s32.totalorder 1, %s12
      %p115 = scmp.lt.s32.totalorder %s12, 3
      %p116 = pnand %p114, %p115
      %p117 = pneg %p116
      // Predicated region
      $region9: #{resblock_forward.1} parent=5 // pred_check
        _
      $region10: #{resblock_forward.1} parent=5 // pred_check_branch
        %119 = sbr.rel (%p116) target = $region12
      $region11: #{resblock_forward.1} parent=5 // pred_region
        %s120 = ssub.s32 %s12, 1
        // Predicated region
        $region13: #{resblock_forward.1} parent=11 // pred_check
          %p121 = pneg %p59
        $region14: #{resblock_forward.1} parent=11 // pred_check_branch
          %123 = sbr.rel (%p121) target = $region16
        $region15: #{resblock_forward.1} parent=11 // pred_region
          _
        $region16: #{resblock_forward.1} parent=11 // pred_fallthru
          _
        // Predicated region
        $region17: #{resblock_forward.1} parent=11 // pred_check
          %p124 = pneg %p80
        $region18: #{resblock_forward.1} parent=11 // pred_check_branch
          %126 = sbr.rel (%p124) target = $region20
        $region19: #{resblock_forward.1} parent=11 // pred_region
          _
        $region20: #{resblock_forward.1} parent=11 // pred_fallthru
          _
      $region12: #{resblock_forward.1} parent=5 // pred_fallthru
        _
      %p127 = scmp.lt.s32.totalorder %s12, 2
      // Predicated region
      $region21: #{resblock_forward.1} parent=5 // pred_check
        %p128 = pneg %p127
      $region22: #{resblock_forward.1} parent=5 // pred_check_branch
        %130 = sbr.rel (%p128) target = $region24
      $region23: #{resblock_forward.1} parent=5 // pred_region
        // Predicated region
        $region25: #{resblock_forward.1} parent=23 // pred_check
          %p131 = pneg %p32
        $region26: #{resblock_forward.1} parent=23 // pred_check_branch
          %133 = sbr.rel (%p131) target = $region28
        $region27: #{resblock_forward.1} parent=23 // pred_region
          %p134 = scmp.lt.s32.totalorder %s12, 1
          %s135 = scalar_select %p134, %s12, 1
          %s136 = smul.addr %s135, 54
          %s137 = smul.addr %s136, 4
          %s138 = scalar_lea.vmem %s0, %s137
        $region28: #{resblock_forward.1} parent=23 // pred_fallthru
          _
      $region24: #{resblock_forward.1} parent=5 // pred_fallthru
        _
      %p139 = scmp.le.s32.totalorder 1, %s12
      %p140 = scmp.lt.s32.totalorder %s12, 3
      %p141 = pnand %p139, %p140
      %p142 = pneg %p141
      // Predicated region
      $region29: #{resblock_forward.1} parent=5 // pred_check
        _
      $region30: #{resblock_forward.1} parent=5 // pred_check_branch
        %144 = sbr.rel (%p141) target = $region32
      $region31: #{resblock_forward.1} parent=5 // pred_region
        %s145 = ssub.s32 %s12, 1
        %p146 = scmp.lt.s32.totalorder %s17, 1
        %s147 = scalar_select %p146, %s17, 1
        %s148 = smul.addr %s147, 54
        %s149 = smul.addr %s148, 4
        %s150 = scalar_lea.vmem %s0, %s149
        %p151 = pneg %p38
        %p152 = pneg %p35
        %p153 = pneg %p59
        %p154 = pneg %p56
        %p155 = pneg %p80
        %p156 = pneg %p77
        %p157 = pneg %p106
        %p158 = pneg %p103
        %s159 = sand.u32 %s93, 1
        %s160 = scalar_lea.sflag [#allocation4], %s159
        %s161 = sand.u32 %s93, 1
        %s162 = smul.addr %s161, 256
        %s163 = scalar_lea.vmem [#allocation3], %s162
        %p164 = scmp.lt.s32.totalorder %s17, 1
        %s165 = scalar_select %p164, %s17, 1
        %s166 = smul.addr %s165, 54
        %s167 = smul.addr %s166, 4
        %s168 = scalar_lea.vmem %s0, %s167
        %v170 = vld [vmem:[%s168] sm:$0xf]
        %v171 = vld [vmem:[%s168 + $0x4] sm:$0xf]
        %v172 = vld [vmem:[%s168 + $0x8] sm:$0x1]
        %v173 = vld [vmem:[%s168 + $0xc] sm:$0xf]
        %v174 = vld [vmem:[%s168 + $0x10] sm:$0xf]
        %v175 = vld [vmem:[%s168 + $0x14] sm:$0x1]
        %v176 = vld [vmem:[%s168 + $0x18] sm:$0xf]
        %v177 = vld [vmem:[%s168 + $0x1c] sm:$0xf]
        %v178 = vld [vmem:[%s168 + $0x20] sm:$0x1]
        %v179 = vld [vmem:[%s168 + $0x24] sm:$0xf]
        %v180 = vld [vmem:[%s168 + $0x28] sm:$0xf]
        %v181 = vld [vmem:[%s168 + $0x2c] sm:$0x1]
        %v182 = vld [vmem:[%s168 + $0x30] sm:$0xf]
        %v183 = vld [vmem:[%s168 + $0x34] sm:$0xf]
        %v184 = vld [vmem:[%s168 + $0x38] sm:$0x1]
        %v185 = vld [vmem:[%s168 + $0x3c] sm:$0xf]
        %v186 = vld [vmem:[%s168 + $0x40] sm:$0xf]
        %v187 = vld [vmem:[%s168 + $0x44] sm:$0x1]
        %v188 = vld [vmem:[%s168 + $0x48] sm:$0xf]
        %v189 = vld [vmem:[%s168 + $0x4c] sm:$0xf]
        %v190 = vld [vmem:[%s168 + $0x50] sm:$0x1]
        %v191 = vld [vmem:[%s168 + $0x54] sm:$0xf]
        %v192 = vld [vmem:[%s168 + $0x58] sm:$0xf]
        %v193 = vld [vmem:[%s168 + $0x5c] sm:$0x1]
        %v194 = vld [vmem:[%s168 + $0x60] sm:$0xf]
        %v195 = vld [vmem:[%s168 + $0x64] sm:$0xf]
        %v196 = vld [vmem:[%s168 + $0x68] sm:$0x1]
        %v197 = vld [vmem:[%s168 + $0x6c] sm:$0xf]
        %v198 = vld [vmem:[%s168 + $0x70] sm:$0xf]
        %v199 = vld [vmem:[%s168 + $0x74] sm:$0x1]
        %v200 = vld [vmem:[%s168 + $0x78] sm:$0xf]
        %v201 = vld [vmem:[%s168 + $0x7c] sm:$0xf]
        %v202 = vld [vmem:[%s168 + $0x80] sm:$0x1]
        %v203 = vld [vmem:[%s168 + $0x84] sm:$0xf]
        %v204 = vld [vmem:[%s168 + $0x88] sm:$0xf]
        %v205 = vld [vmem:[%s168 + $0x8c] sm:$0x1]
        %v206 = vld [vmem:[%s168 + $0x90] sm:$0xf]
        %v207 = vld [vmem:[%s168 + $0x94] sm:$0xf]
        %v208 = vld [vmem:[%s168 + $0x98] sm:$0x1]
        %v209 = vld [vmem:[%s168 + $0x9c] sm:$0xf]
        %v210 = vld [vmem:[%s168 + $0xa0] sm:$0xf]
        %v211 = vld [vmem:[%s168 + $0xa4] sm:$0x1]
        %v212 = vld [vmem:[%s168 + $0xa8] sm:$0xf]
        %v213 = vld [vmem:[%s168 + $0xac] sm:$0xf]
        %v214 = vld [vmem:[%s168 + $0xb0] sm:$0x1]
        %v215 = vld [vmem:[%s168 + $0xb4] sm:$0xf]
        %v216 = vld [vmem:[%s168 + $0xb8] sm:$0xf]
        %v217 = vld [vmem:[%s168 + $0xbc] sm:$0x1]
        %v218 = vld [vmem:[%s168 + $0xc0] sm:$0xf]
        %v219 = vld [vmem:[%s168 + $0xc4] sm:$0xf]
        %v220 = vld [vmem:[%s168 + $0xc8] sm:$0x1]
        %v221 = vld [vmem:[%s168 + $0xcc] sm:$0xf]
        %v222 = vld [vmem:[%s168 + $0xd0] sm:$0xf]
        %v223 = vld [vmem:[%s168 + $0xd4] sm:$0x1]
        %v224 = vunpack.c.l.bf16 %v170
        %v225 = vunpack.c.l.bf16 %v171
        %v226 = vunpack.c.l.bf16 %v172
        %v227 = vunpack.c.l.bf16 %v173
        %v228 = vunpack.c.l.bf16 %v174
        %v229 = vunpack.c.l.bf16 %v175
        %v230 = vunpack.c.l.bf16 %v176
        %v231 = vunpack.c.l.bf16 %v177
        %v232 = vunpack.c.l.bf16 %v178
        %v233 = vunpack.c.l.bf16 %v179
        %v234 = vunpack.c.l.bf16 %v180
        %v235 = vunpack.c.l.bf16 %v181
        %v236 = vunpack.c.l.bf16 %v182
        %v237 = vunpack.c.l.bf16 %v183
        %v238 = vunpack.c.l.bf16 %v184
        %v239 = vunpack.c.l.bf16 %v185
        %v240 = vunpack.c.l.bf16 %v186
        %v241 = vunpack.c.l.bf16 %v187
        %v242 = vunpack.c.l.bf16 %v188
        %v243 = vunpack.c.l.bf16 %v189
        %v244 = vunpack.c.l.bf16 %v190
        %v245 = vunpack.c.l.bf16 %v191
        %v246 = vunpack.c.l.bf16 %v192
        %v247 = vunpack.c.l.bf16 %v193
        %v248 = vunpack.c.l.bf16 %v194
        %v249 = vunpack.c.l.bf16 %v195
        %v250 = vunpack.c.l.bf16 %v196
        %v251 = vunpack.c.l.bf16 %v197
        %v252 = vunpack.c.l.bf16 %v198
        %v253 = vunpack.c.l.bf16 %v199
        %v254 = vunpack.c.l.bf16 %v200
        %v255 = vunpack.c.l.bf16 %v201
        %v256 = vunpack.c.l.bf16 %v202
        %v257 = vunpack.c.l.bf16 %v203
        %v258 = vunpack.c.l.bf16 %v204
        %v259 = vunpack.c.l.bf16 %v205
        %v260 = vunpack.c.l.bf16 %v206
        %v261 = vunpack.c.l.bf16 %v207
        %v262 = vunpack.c.l.bf16 %v208
        %v263 = vunpack.c.l.bf16 %v209
        %v264 = vunpack.c.l.bf16 %v210
        %v265 = vunpack.c.l.bf16 %v211
        %v266 = vunpack.c.l.bf16 %v212
        %v267 = vunpack.c.l.bf16 %v213
        %v268 = vunpack.c.l.bf16 %v214
        %v269 = vunpack.c.l.bf16 %v215
        %v270 = vunpack.c.l.bf16 %v216
        %v271 = vunpack.c.l.bf16 %v217
        %v272 = vunpack.c.l.bf16 %v218
        %v273 = vunpack.c.l.bf16 %v219
        %v274 = vunpack.c.l.bf16 %v220
        %v275 = vunpack.c.l.bf16 %v221
        %v276 = vunpack.c.l.bf16 %v222
        %v277 = vunpack.c.l.bf16 %v223
        %v278 = vpack.c.bf16 %v225, %v224
        %v279 = vpack.c.bf16 %v228, %v227
        %v280 = vpack.c.bf16 %v231, %v230
        %v281 = vpack.c.bf16 %v234, %v233
        %v282 = vpack.c.bf16 %v237, %v236
        %v283 = vpack.c.bf16 %v240, %v239
        %v284 = vpack.c.bf16 %v243, %v242
        %v285 = vpack.c.bf16 %v246, %v245
        %v286 = vpack.c.bf16 %v249, %v248
        %v287 = vpack.c.bf16 %v252, %v251
        %v288 = vpack.c.bf16 %v255, %v254
        %v289 = vpack.c.bf16 %v258, %v257
        %v290 = vpack.c.bf16 %v261, %v260
        %v291 = vpack.c.bf16 %v264, %v263
        %v292 = vpack.c.bf16 %v267, %v266
        %v293 = vpack.c.bf16 %v270, %v269
        %v294 = vpack.c.bf16 %v273, %v272
        %v295 = vpack.c.bf16 %v276, %v275
        %v296 = vld [vmem:[%s1] sm:$0xf]
        %v297 = vld [vmem:[%s1 + $0x4] sm:$0xf]
        %v298 = vld [vmem:[%s1 + $0x8] sm:$0xf]
        %v299 = vld [vmem:[%s1 + $0xc] sm:$0xf]
        %s300 = scalar_lea.vmem %s1, 48
        %v301 = vld [vmem:[%s300] sm:$0xf]
        %v302 = vld [vmem:[%s300 + $0x4] sm:$0xf]
        %v303 = vld [vmem:[%s300 + $0x8] sm:$0xf]
        %v304 = vld [vmem:[%s300 + $0xc] sm:$0xf]
        %v309 = vunpack.c.l.b16 %v301
        %v310 = vunpack.c.l.b16 %v302
        %v311 = vunpack.c.l.b16 %v303
        %v312 = vunpack.c.l.b16 %v304
        %v313 = vpack.c.b16 %v310, %v309
        %v314 = vpack.c.b16 %v312, %v311
        %vm317 = vcmask 261120
        %v319 = vsel %vm317, %v279, 0
        %v322 = vsel %vm317, %v280, 0
        %v325 = vsel %vm317, %v281, 0
        %v328 = vsel %vm317, %v282, 0
        %v331 = vsel %vm317, %v283, 0
        %v334 = vsel %vm317, %v284, 0
        %v337 = vsel %vm317, %v285, 0
        %v340 = vsel %vm317, %v286, 0
        %v343 = vsel %vm317, %v287, 0
        %v346 = vsel %vm317, %v288, 0
        %v349 = vsel %vm317, %v289, 0
        %v352 = vsel %vm317, %v290, 0
        %v355 = vsel %vm317, %v291, 0
        %v358 = vsel %vm317, %v292, 0
        %v361 = vsel %vm317, %v293, 0
        %v364 = vsel %vm317, %v294, 0
        %366 = vmatprep.subr.bf16.mxu0 0
        %367 = vmatpush1.bf16.msra.mxu0 %v313
        %368 = vmatprep.subr.bf16.mxu0 0
        %369 = vmatpush1.bf16.msra.mxu0 %v314
        %370 = vmatprep.subr.bf16.mxu0 0
        %371 = vmatpush1.bf16.msra.mxu0 0
        %372 = vmatprep.subr.bf16.mxu0 0
        %373 = vmatpush1.bf16.msra.mxu0 0
        %374 = vmatprep.subr.bf16.mxu0 0
        %375 = vmatpush1.bf16.msra.mxu0 0
        %376 = vmatprep.subr.bf16.mxu0 0
        %377 = vmatpush1.bf16.msra.mxu0 0
        %378 = vmatprep.subr.bf16.mxu0 0
        %379 = vmatpush1.bf16.msra.mxu0 0
        %380 = vmatprep.subr.bf16.mxu0 0
        %381 = vmatpush1.bf16.msra.mxu0 0
        %382 = vmatprep.subr.bf16.mxu0 0
        %383 = vmatpush1.bf16.msra.mxu0 0
        %384 = vmatprep.subr.bf16.mxu0 0
        %385 = vmatpush1.bf16.msra.mxu0 0
        %386 = vmatprep.subr.bf16.mxu0 0
        %387 = vmatpush1.bf16.msra.mxu0 0
        %388 = vmatprep.subr.bf16.mxu0 0
        %389 = vmatpush1.bf16.msra.mxu0 0
        %390 = vmatprep.subr.bf16.mxu0 0
        %391 = vmatpush1.bf16.msra.mxu0 0
        %392 = vmatprep.subr.bf16.mxu0 0
        %393 = vmatpush1.bf16.msra.mxu0 0
        %394 = vmatprep.subr.bf16.mxu0 0
        %395 = vmatpush1.bf16.msra.mxu0 0
        %396 = vmatprep.subr.bf16.mxu0 0
        %397 = vmatpush1.bf16.msra.mxu0 0
        %398 = vmatprep.mubr.bf16.mxu0 0
        %399 = vmatmul.mubr.bf16.gmra.mrb[0].mxu0 %v319
        %v400 = vpop.f32.mrb[0].mxu0
        %v401 = vadd.f32 0.0, %v400
        %v402 = vpop.f32.mrb[0].mxu0
        %v403 = vpop.f32.mrb[0].mxu0
        %v404 = vadd.f32 0.0, %v403
        %v405 = vpop.f32.mrb[0].mxu0
        %406 = vmatprep.mubr.bf16.mxu0 0
        %407 = vmatmul.mubr.bf16.gmra.mrb[0].mxu0 %v322
        %v408 = vpop.f32.mrb[0].mxu0
        %v409 = vadd.f32 0.0, %v408
        %v410 = vpop.f32.mrb[0].mxu0
        %v411 = vpop.f32.mrb[0].mxu0
        %v412 = vadd.f32 0.0, %v411
        %v413 = vpop.f32.mrb[0].mxu0
        %414 = vmatprep.mubr.bf16.mxu0 0
        %415 = vmatmul.mubr.bf16.gmra.mrb[0].mxu0 %v325
        %v416 = vpop.f32.mrb[0].mxu0
        %v417 = vadd.f32 0.0, %v416
        %v418 = vpop.f32.mrb[0].mxu0
        %v419 = vpop.f32.mrb[0].mxu0
        %v420 = vadd.f32 0.0, %v419
        %v421 = vpop.f32.mrb[0].mxu0
        %422 = vmatprep.mubr.bf16.mxu0 0
        %423 = vmatmul.mubr.bf16.gmra.mrb[0].mxu0 %v328
        %v424 = vpop.f32.mrb[0].mxu0
        %v425 = vadd.f32 0.0, %v424
        %v426 = vpop.f32.mrb[0].mxu0
        %v427 = vpop.f32.mrb[0].mxu0
        %v428 = vadd.f32 0.0, %v427
        %v429 = vpop.f32.mrb[0].mxu0
        %430 = vmatprep.mubr.bf16.mxu0 0
        %431 = vmatmul.mubr.bf16.gmra.mrb[0].mxu0 %v331
        %v432 = vpop.f32.mrb[0].mxu0
        %v433 = vadd.f32 0.0, %v432
        %v434 = vpop.f32.mrb[0].mxu0
        %v435 = vpop.f32.mrb[0].mxu0
        %v436 = vadd.f32 0.0, %v435
        %v437 = vpop.f32.mrb[0].mxu0
        %438 = vmatprep.mubr.bf16.mxu0 0
        %439 = vmatmul.mubr.bf16.gmra.mrb[0].mxu0 %v334
        %v440 = vpop.f32.mrb[0].mxu0
        %v441 = vadd.f32 0.0, %v440
        %v442 = vpop.f32.mrb[0].mxu0
        %v443 = vpop.f32.mrb[0].mxu0
        %v444 = vadd.f32 0.0, %v443
        %v445 = vpop.f32.mrb[0].mxu0
        %446 = vmatprep.mubr.bf16.mxu0 0
        %447 = vmatmul.mubr.bf16.gmra.mrb[0].mxu0 %v337
        %v448 = vpop.f32.mrb[0].mxu0
        %v449 = vadd.f32 0.0, %v448
        %v450 = vpop.f32.mrb[0].mxu0
        %v451 = vpop.f32.mrb[0].mxu0
        %v452 = vadd.f32 0.0, %v451
        %v453 = vpop.f32.mrb[0].mxu0
        %454 = vmatprep.mubr.bf16.mxu0 0
        %455 = vmatmul.mubr.bf16.gmra.mrb[0].mxu0 %v340
        %v456 = vpop.f32.mrb[0].mxu0
        %v457 = vadd.f32 0.0, %v456
        %v458 = vpop.f32.mrb[0].mxu0
        %v459 = vpop.f32.mrb[0].mxu0
        %v460 = vadd.f32 0.0, %v459
        %v461 = vpop.f32.mrb[0].mxu0
        %462 = vmatprep.mubr.bf16.mxu0 0
        %463 = vmatmul.mubr.bf16.gmra.mrb[0].mxu0 %v343
        %v464 = vpop.f32.mrb[0].mxu0
        %v465 = vadd.f32 0.0, %v464
        %v466 = vpop.f32.mrb[0].mxu0
        %v467 = vpop.f32.mrb[0].mxu0
        %v468 = vadd.f32 0.0, %v467
        %v469 = vpop.f32.mrb[0].mxu0
        %470 = vmatprep.mubr.bf16.mxu0 0
        %471 = vmatmul.mubr.bf16.gmra.mrb[0].mxu0 %v346
        %v472 = vpop.f32.mrb[0].mxu0
        %v473 = vadd.f32 0.0, %v472
        %v474 = vpop.f32.mrb[0].mxu0
        %v475 = vpop.f32.mrb[0].mxu0
        %v476 = vadd.f32 0.0, %v475
        %v477 = vpop.f32.mrb[0].mxu0
        %478 = vmatprep.mubr.bf16.mxu0 0
        %479 = vmatmul.mubr.bf16.gmra.mrb[0].mxu0 %v349
        %v480 = vpop.f32.mrb[0].mxu0
        %v481 = vadd.f32 0.0, %v480
        %v482 = vpop.f32.mrb[0].mxu0
        %v483 = vpop.f32.mrb[0].mxu0
        %v484 = vadd.f32 0.0, %v483
        %v485 = vpop.f32.mrb[0].mxu0
        %486 = vmatprep.mubr.bf16.mxu0 0
        %487 = vmatmul.mubr.bf16.gmra.mrb[0].mxu0 %v352
        %v488 = vpop.f32.mrb[0].mxu0
        %v489 = vadd.f32 0.0, %v488
        %v490 = vpop.f32.mrb[0].mxu0
        %v491 = vpop.f32.mrb[0].mxu0
        %v492 = vadd.f32 0.0, %v491
        %v493 = vpop.f32.mrb[0].mxu0
        %494 = vmatprep.mubr.bf16.mxu0 0
        %495 = vmatmul.mubr.bf16.gmra.mrb[0].mxu0 %v355
        %v496 = vpop.f32.mrb[0].mxu0
        %v497 = vadd.f32 0.0, %v496
        %v498 = vpop.f32.mrb[0].mxu0
        %v499 = vpop.f32.mrb[0].mxu0
        %v500 = vadd.f32 0.0, %v499
        %v501 = vpop.f32.mrb[0].mxu0
        %502 = vmatprep.mubr.bf16.mxu0 0
        %503 = vmatmul.mubr.bf16.gmra.mrb[0].mxu0 %v358
        %v504 = vpop.f32.mrb[0].mxu0
        %v505 = vadd.f32 0.0, %v504
        %v506 = vpop.f32.mrb[0].mxu0
        %v507 = vpop.f32.mrb[0].mxu0
        %v508 = vadd.f32 0.0, %v507
        %v509 = vpop.f32.mrb[0].mxu0
        %510 = vmatprep.mubr.bf16.mxu0 0
        %511 = vmatmul.mubr.bf16.gmra.mrb[0].mxu0 %v361
        %v512 = vpop.f32.mrb[0].mxu0
        %v513 = vadd.f32 0.0, %v512
        %v514 = vpop.f32.mrb[0].mxu0
        %v515 = vpop.f32.mrb[0].mxu0
        %v516 = vadd.f32 0.0, %v515
        %v517 = vpop.f32.mrb[0].mxu0
        %518 = vmatprep.mubr.bf16.mxu0 0
        %519 = vmatmul.mubr.bf16.gmra.mrb[0].mxu0 %v364
        %v520 = vpop.f32.mrb[0].mxu0
        %v521 = vadd.f32 0.0, %v520
        %v522 = vpop.f32.mrb[0].mxu0
        %v523 = vpop.f32.mrb[0].mxu0
        %v524 = vadd.f32 0.0, %v523
        %v525 = vpop.f32.mrb[0].mxu0
        %526 = vdwg.mxu0
        %v531 = vunpack.c.l.b16 %v296
        %v532 = vunpack.c.l.b16 %v297
        %v533 = vunpack.c.l.b16 %v298
        %v534 = vunpack.c.l.b16 %v299
        %v535 = vpack.c.b16 %v532, %v531
        %v536 = vpack.c.b16 %v534, %v533
        %v540 = vsel %vm317, %v278, 0
        %542 = vmatprep.subr.bf16.mxu0 0
        %543 = vmatpush1.bf16.msra.mxu0 %v535
        %544 = vmatprep.subr.bf16.mxu0 0
        %545 = vmatpush1.bf16.msra.mxu0 %v536
        %546 = vmatprep.subr.bf16.mxu0 0
        %547 = vmatpush1.bf16.msra.mxu0 0
        %548 = vmatprep.subr.bf16.mxu0 0
        %549 = vmatpush1.bf16.msra.mxu0 0
        %550 = vmatprep.subr.bf16.mxu0 0
        %551 = vmatpush1.bf16.msra.mxu0 0
        %552 = vmatprep.subr.bf16.mxu0 0
        %553 = vmatpush1.bf16.msra.mxu0 0
        %554 = vmatprep.subr.bf16.mxu0 0
        %555 = vmatpush1.bf16.msra.mxu0 0
        %556 = vmatprep.subr.bf16.mxu0 0
        %557 = vmatpush1.bf16.msra.mxu0 0
        %558 = vmatprep.subr.bf16.mxu0 0
        %559 = vmatpush1.bf16.msra.mxu0 0
        %560 = vmatprep.subr.bf16.mxu0 0
        %561 = vmatpush1.bf16.msra.mxu0 0
        %562 = vmatprep.subr.bf16.mxu0 0
        %563 = vmatpush1.bf16.msra.mxu0 0
        %564 = vmatprep.subr.bf16.mxu0 0
        %565 = vmatpush1.bf16.msra.mxu0 0
        %566 = vmatprep.subr.bf16.mxu0 0
        %567 = vmatpush1.bf16.msra.mxu0 0
        %568 = vmatprep.subr.bf16.mxu0 0
        %569 = vmatpush1.bf16.msra.mxu0 0
        %570 = vmatprep.subr.bf16.mxu0 0
        %571 = vmatpush1.bf16.msra.mxu0 0
        %572 = vmatprep.subr.bf16.mxu0 0
        %573 = vmatpush1.bf16.msra.mxu0 0
        %574 = vmatprep.mubr.bf16.mxu0 0
        %575 = vmatmul.mubr.bf16.gmra.mrb[0].mxu0 %v540
        %v576 = vpop.f32.mrb[0].mxu0
        %v577 = vadd.f32 %v401, %v576
        %v578 = vpop.f32.mrb[0].mxu0
        %v579 = vpop.f32.mrb[0].mxu0
        %v580 = vadd.f32 %v404, %v579
        %v581 = vpop.f32.mrb[0].mxu0
        %582 = vmatprep.mubr.bf16.mxu0 0
        %583 = vmatmul.mubr.bf16.gmra.mrb[0].mxu0 %v319
        %v584 = vpop.f32.mrb[0].mxu0
        %v585 = vadd.f32 %v409, %v584
        %v586 = vpop.f32.mrb[0].mxu0
        %v587 = vpop.f32.mrb[0].mxu0
        %v588 = vadd.f32 %v412, %v587
        %v589 = vpop.f32.mrb[0].mxu0
        %590 = vmatprep.mubr.bf16.mxu0 0
        %591 = vmatmul.mubr.bf16.gmra.mrb[0].mxu0 %v322
        %v592 = vpop.f32.mrb[0].mxu0
        %v593 = vadd.f32 %v417, %v592
        %v594 = vpop.f32.mrb[0].mxu0
        %v595 = vpop.f32.mrb[0].mxu0
        %v596 = vadd.f32 %v420, %v595
        %v597 = vpop.f32.mrb[0].mxu0
        %598 = vmatprep.mubr.bf16.mxu0 0
        %599 = vmatmul.mubr.bf16.gmra.mrb[0].mxu0 %v325
        %v600 = vpop.f32.mrb[0].mxu0
        %v601 = vadd.f32 %v425, %v600
        %v602 = vpop.f32.mrb[0].mxu0
        %v603 = vpop.f32.mrb[0].mxu0
        %v604 = vadd.f32 %v428, %v603
        %v605 = vpop.f32.mrb[0].mxu0
        %606 = vmatprep.mubr.bf16.mxu0 0
        %607 = vmatmul.mubr.bf16.gmra.mrb[0].mxu0 %v328
        %v608 = vpop.f32.mrb[0].mxu0
        %v609 = vadd.f32 %v433, %v608
        %v610 = vpop.f32.mrb[0].mxu0
        %v611 = vpop.f32.mrb[0].mxu0
        %v612 = vadd.f32 %v436, %v611
        %v613 = vpop.f32.mrb[0].mxu0
        %614 = vmatprep.mubr.bf16.mxu0 0
        %615 = vmatmul.mubr.bf16.gmra.mrb[0].mxu0 %v331
        %v616 = vpop.f32.mrb[0].mxu0
        %v617 = vadd.f32 %v441, %v616
        %v618 = vpop.f32.mrb[0].mxu0
        %v619 = vpop.f32.mrb[0].mxu0
        %v620 = vadd.f32 %v444, %v619
        %v621 = vpop.f32.mrb[0].mxu0
        %622 = vmatprep.mubr.bf16.mxu0 0
        %623 = vmatmul.mubr.bf16.gmra.mrb[0].mxu0 %v334
        %v624 = vpop.f32.mrb[0].mxu0
        %v625 = vadd.f32 %v449, %v624
        %v626 = vpop.f32.mrb[0].mxu0
        %v627 = vpop.f32.mrb[0].mxu0
        %v628 = vadd.f32 %v452, %v627
        %v629 = vpop.f32.mrb[0].mxu0
        %630 = vmatprep.mubr.bf16.mxu0 0
        %631 = vmatmul.mubr.bf16.gmra.mrb[0].mxu0 %v337
        %v632 = vpop.f32.mrb[0].mxu0
        %v633 = vadd.f32 %v457, %v632
        %v634 = vpop.f32.mrb[0].mxu0
        %v635 = vpop.f32.mrb[0].mxu0
        %v636 = vadd.f32 %v460, %v635
        %v637 = vpop.f32.mrb[0].mxu0
        %638 = vmatprep.mubr.bf16.mxu0 0
        %639 = vmatmul.mubr.bf16.gmra.mrb[0].mxu0 %v340
        %v640 = vpop.f32.mrb[0].mxu0
        %v641 = vadd.f32 %v465, %v640
        %v642 = vpop.f32.mrb[0].mxu0
        %v643 = vpop.f32.mrb[0].mxu0
        %v644 = vadd.f32 %v468, %v643
        %v645 = vpop.f32.mrb[0].mxu0
        %646 = vmatprep.mubr.bf16.mxu0 0
        %647 = vmatmul.mubr.bf16.gmra.mrb[0].mxu0 %v343
        %v648 = vpop.f32.mrb[0].mxu0
        %v649 = vadd.f32 %v473, %v648
        %v650 = vpop.f32.mrb[0].mxu0
        %v651 = vpop.f32.mrb[0].mxu0
        %v652 = vadd.f32 %v476, %v651
        %v653 = vpop.f32.mrb[0].mxu0
        %654 = vmatprep.mubr.bf16.mxu0 0
        %655 = vmatmul.mubr.bf16.gmra.mrb[0].mxu0 %v346
        %v656 = vpop.f32.mrb[0].mxu0
        %v657 = vadd.f32 %v481, %v656
        %v658 = vpop.f32.mrb[0].mxu0
        %v659 = vpop.f32.mrb[0].mxu0
        %v660 = vadd.f32 %v484, %v659
        %v661 = vpop.f32.mrb[0].mxu0
        %662 = vmatprep.mubr.bf16.mxu0 0
        %663 = vmatmul.mubr.bf16.gmra.mrb[0].mxu0 %v349
        %v664 = vpop.f32.mrb[0].mxu0
        %v665 = vadd.f32 %v489, %v664
        %v666 = vpop.f32.mrb[0].mxu0
        %v667 = vpop.f32.mrb[0].mxu0
        %v668 = vadd.f32 %v492, %v667
        %v669 = vpop.f32.mrb[0].mxu0
        %670 = vmatprep.mubr.bf16.mxu0 0
        %671 = vmatmul.mubr.bf16.gmra.mrb[0].mxu0 %v352
        %v672 = vpop.f32.mrb[0].mxu0
        %v673 = vadd.f32 %v497, %v672
        %v674 = vpop.f32.mrb[0].mxu0
        %v675 = vpop.f32.mrb[0].mxu0
        %v676 = vadd.f32 %v500, %v675
        %v677 = vpop.f32.mrb[0].mxu0
        %678 = vmatprep.mubr.bf16.mxu0 0
        %679 = vmatmul.mubr.bf16.gmra.mrb[0].mxu0 %v355
        %v680 = vpop.f32.mrb[0].mxu0
        %v681 = vadd.f32 %v505, %v680
        %v682 = vpop.f32.mrb[0].mxu0
        %v683 = vpop.f32.mrb[0].mxu0
        %v684 = vadd.f32 %v508, %v683
        %v685 = vpop.f32.mrb[0].mxu0
        %686 = vmatprep.mubr.bf16.mxu0 0
        %687 = vmatmul.mubr.bf16.gmra.mrb[0].mxu0 %v358
        %v688 = vpop.f32.mrb[0].mxu0
        %v689 = vadd.f32 %v513, %v688
        %v690 = vpop.f32.mrb[0].mxu0
        %v691 = vpop.f32.mrb[0].mxu0
        %v692 = vadd.f32 %v516, %v691
        %v693 = vpop.f32.mrb[0].mxu0
        %694 = vmatprep.mubr.bf16.mxu0 0
        %695 = vmatmul.mubr.bf16.gmra.mrb[0].mxu0 %v361
        %v696 = vpop.f32.mrb[0].mxu0
        %v697 = vadd.f32 %v521, %v696
        %v698 = vpop.f32.mrb[0].mxu0
        %v699 = vpop.f32.mrb[0].mxu0
        %v700 = vadd.f32 %v524, %v699
        %v701 = vpop.f32.mrb[0].mxu0
        %702 = vdwg.mxu0
        %s703 = scalar_lea.vmem %s1, 96
        %v704 = vld [vmem:[%s703] sm:$0xf]
        %v705 = vld [vmem:[%s703 + $0x4] sm:$0xf]
        %v706 = vld [vmem:[%s703 + $0x8] sm:$0xf]
        %v707 = vld [vmem:[%s703 + $0xc] sm:$0xf]
        %v712 = vunpack.c.l.b16 %v704
        %v713 = vunpack.c.l.b16 %v705
        %v714 = vunpack.c.l.b16 %v706
        %v715 = vunpack.c.l.b16 %v707
        %v716 = vpack.c.b16 %v713, %v712
        %v717 = vpack.c.b16 %v715, %v714
        %v721 = vsel %vm317, %v295, 0
        %723 = vmatprep.subr.bf16.mxu0 0
        %724 = vmatpush1.bf16.msra.mxu0 %v716
        %725 = vmatprep.subr.bf16.mxu0 0
        %726 = vmatpush1.bf16.msra.mxu0 %v717
        %727 = vmatprep.subr.bf16.mxu0 0
        %728 = vmatpush1.bf16.msra.mxu0 0
        %729 = vmatprep.subr.bf16.mxu0 0
        %730 = vmatpush1.bf16.msra.mxu0 0
        %731 = vmatprep.subr.bf16.mxu0 0
        %732 = vmatpush1.bf16.msra.mxu0 0
        %733 = vmatprep.subr.bf16.mxu0 0
        %734 = vmatpush1.bf16.msra.mxu0 0
        %735 = vmatprep.subr.bf16.mxu0 0
        %736 = vmatpush1.bf16.msra.mxu0 0
        %737 = vmatprep.subr.bf16.mxu0 0
        %738 = vmatpush1.bf16.msra.mxu0 0
        %739 = vmatprep.subr.bf16.mxu0 0
        %740 = vmatpush1.bf16.msra.mxu0 0
        %741 = vmatprep.subr.bf16.mxu0 0
        %742 = vmatpush1.bf16.msra.mxu0 0
        %743 = vmatprep.subr.bf16.mxu0 0
        %744 = vmatpush1.bf16.msra.mxu0 0
        %745 = vmatprep.subr.bf16.mxu0 0
        %746 = vmatpush1.bf16.msra.mxu0 0
        %747 = vmatprep.subr.bf16.mxu0 0
        %748 = vmatpush1.bf16.msra.mxu0 0
        %749 = vmatprep.subr.bf16.mxu0 0
        %750 = vmatpush1.bf16.msra.mxu0 0
        %751 = vmatprep.subr.bf16.mxu0 0
        %752 = vmatpush1.bf16.msra.mxu0 0
        %753 = vmatprep.subr.bf16.mxu0 0
        %754 = vmatpush1.bf16.msra.mxu0 0
        %755 = vmatprep.mubr.bf16.mxu0 0
        %756 = vmatmul.mubr.bf16.gmra.mrb[0].mxu0 %v322
        %v757 = vpop.f32.mrb[0].mxu0
        %v758 = vadd.f32 0.0, %v757
        %v759 = vpop.f32.mrb[0].mxu0
        %v760 = vpop.f32.mrb[0].mxu0
        %v761 = vadd.f32 0.0, %v760
        %v762 = vpop.f32.mrb[0].mxu0
        %763 = vmatprep.mubr.bf16.mxu0 0
        %764 = vmatmul.mubr.bf16.gmra.mrb[0].mxu0 %v325
        %v765 = vpop.f32.mrb[0].mxu0
        %v766 = vadd.f32 0.0, %v765
        %v767 = vpop.f32.mrb[0].mxu0
        %v768 = vpop.f32.mrb[0].mxu0
        %v769 = vadd.f32 0.0, %v768
        %v770 = vpop.f32.mrb[0].mxu0
        %771 = vmatprep.mubr.bf16.mxu0 0
        %772 = vmatmul.mubr.bf16.gmra.mrb[0].mxu0 %v328
        %v773 = vpop.f32.mrb[0].mxu0
        %v774 = vadd.f32 0.0, %v773
        %v775 = vpop.f32.mrb[0].mxu0
        %v776 = vpop.f32.mrb[0].mxu0
        %v777 = vadd.f32 0.0, %v776
        %v778 = vpop.f32.mrb[0].mxu0
        %779 = vmatprep.mubr.bf16.mxu0 0
        %780 = vmatmul.mubr.bf16.gmra.mrb[0].mxu0 %v331
        %v781 = vpop.f32.mrb[0].mxu0
        %v782 = vadd.f32 0.0, %v781
        %v783 = vpop.f32.mrb[0].mxu0
        %v784 = vpop.f32.mrb[0].mxu0
        %v785 = vadd.f32 0.0, %v784
        %v786 = vpop.f32.mrb[0].mxu0
        %787 = vmatprep.mubr.bf16.mxu0 0
        %788 = vmatmul.mubr.bf16.gmra.mrb[0].mxu0 %v334
        %v789 = vpop.f32.mrb[0].mxu0
        %v790 = vadd.f32 0.0, %v789
        %v791 = vpop.f32.mrb[0].mxu0
        %v792 = vpop.f32.mrb[0].mxu0
        %v793 = vadd.f32 0.0, %v792
        %v794 = vpop.f32.mrb[0].mxu0
        %795 = vmatprep.mubr.bf16.mxu0 0
        %796 = vmatmul.mubr.bf16.gmra.mrb[0].mxu0 %v337
        %v797 = vpop.f32.mrb[0].mxu0
        %v798 = vadd.f32 0.0, %v797
        %v799 = vpop.f32.mrb[0].mxu0
        %v800 = vpop.f32.mrb[0].mxu0
        %v801 = vadd.f32 0.0, %v800
        %v802 = vpop.f32.mrb[0].mxu0
        %803 = vmatprep.mubr.bf16.mxu0 0
        %804 = vmatmul.mubr.bf16.gmra.mrb[0].mxu0 %v340
        %v805 = vpop.f32.mrb[0].mxu0
        %v806 = vadd.f32 0.0, %v805
        %v807 = vpop.f32.mrb[0].mxu0
        %v808 = vpop.f32.mrb[0].mxu0
        %v809 = vadd.f32 0.0, %v808
        %v810 = vpop.f32.mrb[0].mxu0
        %811 = vmatprep.mubr.bf16.mxu0 0
        %812 = vmatmul.mubr.bf16.gmra.mrb[0].mxu0 %v343
        %v813 = vpop.f32.mrb[0].mxu0
        %v814 = vadd.f32 0.0, %v813
        %v815 = vpop.f32.mrb[0].mxu0
        %v816 = vpop.f32.mrb[0].mxu0
        %v817 = vadd.f32 0.0, %v816
        %v818 = vpop.f32.mrb[0].mxu0
        %819 = vmatprep.mubr.bf16.mxu0 0
        %820 = vmatmul.mubr.bf16.gmra.mrb[0].mxu0 %v346
        %v821 = vpop.f32.mrb[0].mxu0
        %v822 = vadd.f32 0.0, %v821
        %v823 = vpop.f32.mrb[0].mxu0
        %v824 = vpop.f32.mrb[0].mxu0
        %v825 = vadd.f32 0.0, %v824
        %v826 = vpop.f32.mrb[0].mxu0
        %827 = vmatprep.mubr.bf16.mxu0 0
        %828 = vmatmul.mubr.bf16.gmra.mrb[0].mxu0 %v349
        %v829 = vpop.f32.mrb[0].mxu0
        %v830 = vadd.f32 0.0, %v829
        %v831 = vpop.f32.mrb[0].mxu0
        %v832 = vpop.f32.mrb[0].mxu0
        %v833 = vadd.f32 0.0, %v832
        %v834 = vpop.f32.mrb[0].mxu0
        %835 = vmatprep.mubr.bf16.mxu0 0
        %836 = vmatmul.mubr.bf16.gmra.mrb[0].mxu0 %v352
        %v837 = vpop.f32.mrb[0].mxu0
        %v838 = vadd.f32 0.0, %v837
        %v839 = vpop.f32.mrb[0].mxu0
        %v840 = vpop.f32.mrb[0].mxu0
        %v841 = vadd.f32 0.0, %v840
        %v842 = vpop.f32.mrb[0].mxu0
        %843 = vmatprep.mubr.bf16.mxu0 0
        %844 = vmatmul.mubr.bf16.gmra.mrb[0].mxu0 %v355
        %v845 = vpop.f32.mrb[0].mxu0
        %v846 = vadd.f32 0.0, %v845
        %v847 = vpop.f32.mrb[0].mxu0
        %v848 = vpop.f32.mrb[0].mxu0
        %v849 = vadd.f32 0.0, %v848
        %v850 = vpop.f32.mrb[0].mxu0
        %851 = vmatprep.mubr.bf16.mxu0 0
        %852 = vmatmul.mubr.bf16.gmra.mrb[0].mxu0 %v358
        %v853 = vpop.f32.mrb[0].mxu0
        %v854 = vadd.f32 0.0, %v853
        %v855 = vpop.f32.mrb[0].mxu0
        %v856 = vpop.f32.mrb[0].mxu0
        %v857 = vadd.f32 0.0, %v856
        %v858 = vpop.f32.mrb[0].mxu0
        %859 = vmatprep.mubr.bf16.mxu0 0
        %860 = vmatmul.mubr.bf16.gmra.mrb[0].mxu0 %v361
        %v861 = vpop.f32.mrb[0].mxu0
        %v862 = vadd.f32 0.0, %v861
        %v863 = vpop.f32.mrb[0].mxu0
        %v864 = vpop.f32.mrb[0].mxu0
        %v865 = vadd.f32 0.0, %v864
        %v866 = vpop.f32.mrb[0].mxu0
        %867 = vmatprep.mubr.bf16.mxu0 0
        %868 = vmatmul.mubr.bf16.gmra.mrb[0].mxu0 %v364
        %v869 = vpop.f32.mrb[0].mxu0
        %v870 = vadd.f32 0.0, %v869
        %v871 = vpop.f32.mrb[0].mxu0
        %v872 = vpop.f32.mrb[0].mxu0
        %v873 = vadd.f32 0.0, %v872
        %v874 = vpop.f32.mrb[0].mxu0
        %875 = vmatprep.mubr.bf16.mxu0 0
        %876 = vmatmul.mubr.bf16.gmra.mrb[0].mxu0 %v721
        %v877 = vpop.f32.mrb[0].mxu0
        %v878 = vadd.f32 0.0, %v877
        %v879 = vpop.f32.mrb[0].mxu0
        %v880 = vpop.f32.mrb[0].mxu0
        %v881 = vadd.f32 0.0, %v880
        %v882 = vpop.f32.mrb[0].mxu0
        %883 = vdwg.mxu0
        %v884 = vadd.f32 %v577, %v758
        %v885 = vadd.f32 %v580, %v761
        %v886 = vadd.f32 %v585, %v766
        %v887 = vadd.f32 %v588, %v769
        %v888 = vadd.f32 %v593, %v774
        %v889 = vadd.f32 %v596, %v777
        %v890 = vadd.f32 %v601, %v782
        %v891 = vadd.f32 %v604, %v785
        %v892 = vadd.f32 %v609, %v790
        %v893 = vadd.f32 %v612, %v793
        %v894 = vadd.f32 %v617, %v798
        %v895 = vadd.f32 %v620, %v801
        %v896 = vadd.f32 %v625, %v806
        %v897 = vadd.f32 %v628, %v809
        %v898 = vadd.f32 %v633, %v814
        %v899 = vadd.f32 %v636, %v817
        %v900 = vadd.f32 %v641, %v822
        %v901 = vadd.f32 %v644, %v825
        %v902 = vadd.f32 %v649, %v830
        %v903 = vadd.f32 %v652, %v833
        %v904 = vadd.f32 %v657, %v838
        %v905 = vadd.f32 %v660, %v841
        %v906 = vadd.f32 %v665, %v846
        %v907 = vadd.f32 %v668, %v849
        %v908 = vadd.f32 %v673, %v854
        %v909 = vadd.f32 %v676, %v857
        %v910 = vadd.f32 %v681, %v862
        %v911 = vadd.f32 %v684, %v865
        %v912 = vadd.f32 %v689, %v870
        %v913 = vadd.f32 %v692, %v873
        %v914 = vadd.f32 %v697, %v878
        %v915 = vadd.f32 %v700, %v881
        %vm970 = vcmask 1046528
        %v971 = vrot.slane %v224, 1
        %v972 = vrot.slane %v225, 1
        %v973 = vsel %vm970, %v971, %v972
        %v974 = vrot.slane %v226, 1
        %v975 = vsel %vm970, %v972, %v974
        %v976 = vrot.slane %v227, 1
        %v977 = vrot.slane %v228, 1
        %v978 = vsel %vm970, %v976, %v977
        %v979 = vrot.slane %v229, 1
        %v980 = vsel %vm970, %v977, %v979
        %v981 = vrot.slane %v230, 1
        %v982 = vrot.slane %v231, 1
        %v983 = vsel %vm970, %v981, %v982
        %v984 = vrot.slane %v232, 1
        %v985 = vsel %vm970, %v982, %v984
        %v986 = vrot.slane %v233, 1
        %v987 = vrot.slane %v234, 1
        %v988 = vsel %vm970, %v986, %v987
        %v989 = vrot.slane %v235, 1
        %v990 = vsel %vm970, %v987, %v989
        %v991 = vrot.slane %v236, 1
        %v992 = vrot.slane %v237, 1
        %v993 = vsel %vm970, %v991, %v992
        %v994 = vrot.slane %v238, 1
        %v995 = vsel %vm970, %v992, %v994
        %v996 = vrot.slane %v239, 1
        %v997 = vrot.slane %v240, 1
        %v998 = vsel %vm970, %v996, %v997
        %v999 = vrot.slane %v241, 1
        %v1000 = vsel %vm970, %v997, %v999
        %v1001 = vrot.slane %v242, 1
        %v1002 = vrot.slane %v243, 1
        %v1003 = vsel %vm970, %v1001, %v1002
        %v1004 = vrot.slane %v244, 1
        %v1005 = vsel %vm970, %v1002, %v1004
        %v1006 = vrot.slane %v245, 1
        %v1007 = vrot.slane %v246, 1
        %v1008 = vsel %vm970, %v1006, %v1007
        %v1009 = vrot.slane %v247, 1
        %v1010 = vsel %vm970, %v1007, %v1009
        %v1011 = vrot.slane %v248, 1
        %v1012 = vrot.slane %v249, 1
        %v1013 = vsel %vm970, %v1011, %v1012
        %v1014 = vrot.slane %v250, 1
        %v1015 = vsel %vm970, %v1012, %v1014
        %v1016 = vrot.slane %v251, 1
        %v1017 = vrot.slane %v252, 1
        %v1018 = vsel %vm970, %v1016, %v1017
        %v1019 = vrot.slane %v253, 1
        %v1020 = vsel %vm970, %v1017, %v1019
        %v1021 = vrot.slane %v254, 1
        %v1022 = vrot.slane %v255, 1
        %v1023 = vsel %vm970, %v1021, %v1022
        %v1024 = vrot.slane %v256, 1
        %v1025 = vsel %vm970, %v1022, %v1024
        %v1026 = vrot.slane %v257, 1
        %v1027 = vrot.slane %v258, 1
        %v1028 = vsel %vm970, %v1026, %v1027
        %v1029 = vrot.slane %v259, 1
        %v1030 = vsel %vm970, %v1027, %v1029
        %v1031 = vrot.slane %v260, 1
        %v1032 = vrot.slane %v261, 1
        %v1033 = vsel %vm970, %v1031, %v1032
        %v1034 = vrot.slane %v262, 1
        %v1035 = vsel %vm970, %v1032, %v1034
        %v1036 = vrot.slane %v263, 1
        %v1037 = vrot.slane %v264, 1
        %v1038 = vsel %vm970, %v1036, %v1037
        %v1039 = vrot.slane %v265, 1
        %v1040 = vsel %vm970, %v1037, %v1039
        %v1041 = vrot.slane %v266, 1
        %v1042 = vrot.slane %v267, 1
        %v1043 = vsel %vm970, %v1041, %v1042
        %v1044 = vrot.slane %v268, 1
        %v1045 = vsel %vm970, %v1042, %v1044
        %v1046 = vrot.slane %v269, 1
        %v1047 = vrot.slane %v270, 1
        %v1048 = vsel %vm970, %v1046, %v1047
        %v1049 = vrot.slane %v271, 1
        %v1050 = vsel %vm970, %v1047, %v1049
        %v1051 = vrot.slane %v272, 1
        %v1052 = vrot.slane %v273, 1
        %v1053 = vsel %vm970, %v1051, %v1052
        %v1054 = vrot.slane %v274, 1
        %v1055 = vsel %vm970, %v1052, %v1054
        %v1056 = vrot.slane %v275, 1
        %v1057 = vrot.slane %v276, 1
        %v1058 = vsel %vm970, %v1056, %v1057
        %v1059 = vrot.slane %v277, 1
        %v1060 = vsel %vm970, %v1057, %v1059
        %v1097 = vpack.c.bf16 %v975, %v973
        %v1098 = vpack.c.bf16 %v980, %v978
        %v1099 = vpack.c.bf16 %v985, %v983
        %v1100 = vpack.c.bf16 %v990, %v988
        %v1101 = vpack.c.bf16 %v995, %v993
        %v1102 = vpack.c.bf16 %v1000, %v998
        %v1103 = vpack.c.bf16 %v1005, %v1003
        %v1104 = vpack.c.bf16 %v1010, %v1008
        %v1105 = vpack.c.bf16 %v1015, %v1013
        %v1106 = vpack.c.bf16 %v1020, %v1018
        %v1107 = vpack.c.bf16 %v1025, %v1023
        %v1108 = vpack.c.bf16 %v1030, %v1028
        %v1109 = vpack.c.bf16 %v1035, %v1033
        %v1110 = vpack.c.bf16 %v1040, %v1038
        %v1111 = vpack.c.bf16 %v1045, %v1043
        %v1112 = vpack.c.bf16 %v1050, %v1048
        %v1113 = vpack.c.bf16 %v1055, %v1053
        %v1114 = vpack.c.bf16 %v1060, %v1058
        %s1115 = scalar_lea.vmem %s1, 16
        %v1116 = vld [vmem:[%s1115] sm:$0xf]
        %v1117 = vld [vmem:[%s1115 + $0x4] sm:$0xf]
        %v1118 = vld [vmem:[%s1115 + $0x8] sm:$0xf]
        %v1119 = vld [vmem:[%s1115 + $0xc] sm:$0xf]
        %v1124 = vunpack.c.l.b16 %v1116
        %v1125 = vunpack.c.l.b16 %v1117
        %v1126 = vunpack.c.l.b16 %v1118
        %v1127 = vunpack.c.l.b16 %v1119
        %v1128 = vpack.c.b16 %v1125, %v1124
        %v1129 = vpack.c.b16 %v1127, %v1126
        %v1133 = vsel %vm317, %v1097, 0
        %v1136 = vsel %vm317, %v1098, 0
        %v1139 = vsel %vm317, %v1099, 0
        %v1142 = vsel %vm317, %v1100, 0
        %v1145 = vsel %vm317, %v1101, 0
        %v1148 = vsel %vm317, %v1102, 0
        %v1151 = vsel %vm317, %v1103, 0
        %v1154 = vsel %vm317, %v1104, 0
        %v1157 = vsel %vm317, %v1105, 0
        %v1160 = vsel %vm317, %v1106, 0
        %v1163 = vsel %vm317, %v1107, 0
        %v1166 = vsel %vm317, %v1108, 0
        %v1169 = vsel %vm317, %v1109, 0
        %v1172 = vsel %vm317, %v1110, 0
        %v1175 = vsel %vm317, %v1111, 0
        %v1178 = vsel %vm317, %v1112, 0
        %1180 = vmatprep.subr.bf16.mxu0 0
        %1181 = vmatpush1.bf16.msra.mxu0 %v1128
        %1182 = vmatprep.subr.bf16.mxu0 0
        %1183 = vmatpush1.bf16.msra.mxu0 %v1129
        %1184 = vmatprep.subr.bf16.mxu0 0
        %1185 = vmatpush1.bf16.msra.mxu0 0
        %1186 = vmatprep.subr.bf16.mxu0 0
        %1187 = vmatpush1.bf16.msra.mxu0 0
        %1188 = vmatprep.subr.bf16.mxu0 0
        %1189 = vmatpush1.bf16.msra.mxu0 0
        %1190 = vmatprep.subr.bf16.mxu0 0
        %1191 = vmatpush1.bf16.msra.mxu0 0
        %1192 = vmatprep.subr.bf16.mxu0 0
        %1193 = vmatpush1.bf16.msra.mxu0 0
        %1194 = vmatprep.subr.bf16.mxu0 0
        %1195 = vmatpush1.bf16.msra.mxu0 0
        %1196 = vmatprep.subr.bf16.mxu0 0
        %1197 = vmatpush1.bf16.msra.mxu0 0
        %1198 = vmatprep.subr.bf16.mxu0 0
        %1199 = vmatpush1.bf16.msra.mxu0 0
        %1200 = vmatprep.subr.bf16.mxu0 0
        %1201 = vmatpush1.bf16.msra.mxu0 0
        %1202 = vmatprep.subr.bf16.mxu0 0
        %1203 = vmatpush1.bf16.msra.mxu0 0
        %1204 = vmatprep.subr.bf16.mxu0 0
        %1205 = vmatpush1.bf16.msra.mxu0 0
        %1206 = vmatprep.subr.bf16.mxu0 0
        %1207 = vmatpush1.bf16.msra.mxu0 0
        %1208 = vmatprep.subr.bf16.mxu0 0
        %1209 = vmatpush1.bf16.msra.mxu0 0
        %1210 = vmatprep.subr.bf16.mxu0 0
        %1211 = vmatpush1.bf16.msra.mxu0 0
        %1212 = vmatprep.mubr.bf16.mxu0 0
        %1213 = vmatmul.mubr.bf16.gmra.mrb[0].mxu0 %v1133
        %v1214 = vpop.f32.mrb[0].mxu0
        %v1215 = vadd.f32 0.0, %v1214
        %v1216 = vpop.f32.mrb[0].mxu0
        %v1217 = vpop.f32.mrb[0].mxu0
        %v1218 = vadd.f32 0.0, %v1217
        %v1219 = vpop.f32.mrb[0].mxu0
        %1220 = vmatprep.mubr.bf16.mxu0 0
        %1221 = vmatmul.mubr.bf16.gmra.mrb[0].mxu0 %v1136
        %v1222 = vpop.f32.mrb[0].mxu0
        %v1223 = vadd.f32 0.0, %v1222
        %v1224 = vpop.f32.mrb[0].mxu0
        %v1225 = vpop.f32.mrb[0].mxu0
        %v1226 = vadd.f32 0.0, %v1225
        %v1227 = vpop.f32.mrb[0].mxu0
        %1228 = vmatprep.mubr.bf16.mxu0 0
        %1229 = vmatmul.mubr.bf16.gmra.mrb[0].mxu0 %v1139
        %v1230 = vpop.f32.mrb[0].mxu0
        %v1231 = vadd.f32 0.0, %v1230
        %v1232 = vpop.f32.mrb[0].mxu0
        %v1233 = vpop.f32.mrb[0].mxu0
        %v1234 = vadd.f32 0.0, %v1233
        %v1235 = vpop.f32.mrb[0].mxu0
        %1236 = vmatprep.mubr.bf16.mxu0 0
        %1237 = vmatmul.mubr.bf16.gmra.mrb[0].mxu0 %v1142
        %v1238 = vpop.f32.mrb[0].mxu0
        %v1239 = vadd.f32 0.0, %v1238
        %v1240 = vpop.f32.mrb[0].mxu0
        %v1241 = vpop.f32.mrb[0].mxu0
        %v1242 = vadd.f32 0.0, %v1241
        %v1243 = vpop.f32.mrb[0].mxu0
        %1244 = vmatprep.mubr.bf16.mxu0 0
        %1245 = vmatmul.mubr.bf16.gmra.mrb[0].mxu0 %v1145
        %v1246 = vpop.f32.mrb[0].mxu0
        %v1247 = vadd.f32 0.0, %v1246
        %v1248 = vpop.f32.mrb[0].mxu0
        %v1249 = vpop.f32.mrb[0].mxu0
        %v1250 = vadd.f32 0.0, %v1249
        %v1251 = vpop.f32.mrb[0].mxu0
        %1252 = vmatprep.mubr.bf16.mxu0 0
        %1253 = vmatmul.mubr.bf16.gmra.mrb[0].mxu0 %v1148
        %v1254 = vpop.f32.mrb[0].mxu0
        %v1255 = vadd.f32 0.0, %v1254
        %v1256 = vpop.f32.mrb[0].mxu0
        %v1257 = vpop.f32.mrb[0].mxu0
        %v1258 = vadd.f32 0.0, %v1257
        %v1259 = vpop.f32.mrb[0].mxu0
        %1260 = vmatprep.mubr.bf16.mxu0 0
        %1261 = vmatmul.mubr.bf16.gmra.mrb[0].mxu0 %v1151
        %v1262 = vpop.f32.mrb[0].mxu0
        %v1263 = vadd.f32 0.0, %v1262
        %v1264 = vpop.f32.mrb[0].mxu0
        %v1265 = vpop.f32.mrb[0].mxu0
        %v1266 = vadd.f32 0.0, %v1265
        %v1267 = vpop.f32.mrb[0].mxu0
        %1268 = vmatprep.mubr.bf16.mxu0 0
        %1269 = vmatmul.mubr.bf16.gmra.mrb[0].mxu0 %v1154
        %v1270 = vpop.f32.mrb[0].mxu0
        %v1271 = vadd.f32 0.0, %v1270
        %v1272 = vpop.f32.mrb[0].mxu0
        %v1273 = vpop.f32.mrb[0].mxu0
        %v1274 = vadd.f32 0.0, %v1273
        %v1275 = vpop.f32.mrb[0].mxu0
        %1276 = vmatprep.mubr.bf16.mxu0 0
        %1277 = vmatmul.mubr.bf16.gmra.mrb[0].mxu0 %v1157
        %v1278 = vpop.f32.mrb[0].mxu0
        %v1279 = vadd.f32 0.0, %v1278
        %v1280 = vpop.f32.mrb[0].mxu0
        %v1281 = vpop.f32.mrb[0].mxu0
        %v1282 = vadd.f32 0.0, %v1281
        %v1283 = vpop.f32.mrb[0].mxu0
        %1284 = vmatprep.mubr.bf16.mxu0 0
        %1285 = vmatmul.mubr.bf16.gmra.mrb[0].mxu0 %v1160
        %v1286 = vpop.f32.mrb[0].mxu0
        %v1287 = vadd.f32 0.0, %v1286
        %v1288 = vpop.f32.mrb[0].mxu0
        %v1289 = vpop.f32.mrb[0].mxu0
        %v1290 = vadd.f32 0.0, %v1289
        %v1291 = vpop.f32.mrb[0].mxu0
        %1292 = vmatprep.mubr.bf16.mxu0 0
        %1293 = vmatmul.mubr.bf16.gmra.mrb[0].mxu0 %v1163
        %v1294 = vpop.f32.mrb[0].mxu0
        %v1295 = vadd.f32 0.0, %v1294
        %v1296 = vpop.f32.mrb[0].mxu0
        %v1297 = vpop.f32.mrb[0].mxu0
        %v1298 = vadd.f32 0.0, %v1297
        %v1299 = vpop.f32.mrb[0].mxu0
        %1300 = vmatprep.mubr.bf16.mxu0 0
        %1301 = vmatmul.mubr.bf16.gmra.mrb[0].mxu0 %v1166
        %v1302 = vpop.f32.mrb[0].mxu0
        %v1303 = vadd.f32 0.0, %v1302
        %v1304 = vpop.f32.mrb[0].mxu0
        %v1305 = vpop.f32.mrb[0].mxu0
        %v1306 = vadd.f32 0.0, %v1305
        %v1307 = vpop.f32.mrb[0].mxu0
        %1308 = vmatprep.mubr.bf16.mxu0 0
        %1309 = vmatmul.mubr.bf16.gmra.mrb[0].mxu0 %v1169
        %v1310 = vpop.f32.mrb[0].mxu0
        %v1311 = vadd.f32 0.0, %v1310
        %v1312 = vpop.f32.mrb[0].mxu0
        %v1313 = vpop.f32.mrb[0].mxu0
        %v1314 = vadd.f32 0.0, %v1313
        %v1315 = vpop.f32.mrb[0].mxu0
        %1316 = vmatprep.mubr.bf16.mxu0 0
        %1317 = vmatmul.mubr.bf16.gmra.mrb[0].mxu0 %v1172
        %v1318 = vpop.f32.mrb[0].mxu0
        %v1319 = vadd.f32 0.0, %v1318
        %v1320 = vpop.f32.mrb[0].mxu0
        %v1321 = vpop.f32.mrb[0].mxu0
        %v1322 = vadd.f32 0.0, %v1321
        %v1323 = vpop.f32.mrb[0].mxu0
        %1324 = vmatprep.mubr.bf16.mxu0 0
        %1325 = vmatmul.mubr.bf16.gmra.mrb[0].mxu0 %v1175
        %v1326 = vpop.f32.mrb[0].mxu0
        %v1327 = vadd.f32 0.0, %v1326
        %v1328 = vpop.f32.mrb[0].mxu0
        %v1329 = vpop.f32.mrb[0].mxu0
        %v1330 = vadd.f32 0.0, %v1329
        %v1331 = vpop.f32.mrb[0].mxu0
        %1332 = vmatprep.mubr.bf16.mxu0 0
        %1333 = vmatmul.mubr.bf16.gmra.mrb[0].mxu0 %v1178
        %v1334 = vpop.f32.mrb[0].mxu0
        %v1335 = vadd.f32 0.0, %v1334
        %v1336 = vpop.f32.mrb[0].mxu0
        %v1337 = vpop.f32.mrb[0].mxu0
        %v1338 = vadd.f32 0.0, %v1337
        %v1339 = vpop.f32.mrb[0].mxu0
        %1340 = vdwg.mxu0
        %v1341 = vadd.f32 %v884, %v1215
        %v1342 = vadd.f32 %v885, %v1218
        %v1343 = vadd.f32 %v886, %v1223
        %v1344 = vadd.f32 %v887, %v1226
        %v1345 = vadd.f32 %v888, %v1231
        %v1346 = vadd.f32 %v889, %v1234
        %v1347 = vadd.f32 %v890, %v1239
        %v1348 = vadd.f32 %v891, %v1242
        %v1349 = vadd.f32 %v892, %v1247
        %v1350 = vadd.f32 %v893, %v1250
        %v1351 = vadd.f32 %v894, %v1255
        %v1352 = vadd.f32 %v895, %v1258
        %v1353 = vadd.f32 %v896, %v1263
        %v1354 = vadd.f32 %v897, %v1266
        %v1355 = vadd.f32 %v898, %v1271
        %v1356 = vadd.f32 %v899, %v1274
        %v1357 = vadd.f32 %v900, %v1279
        %v1358 = vadd.f32 %v901, %v1282
        %v1359 = vadd.f32 %v902, %v1287
        %v1360 = vadd.f32 %v903, %v1290
        %v1361 = vadd.f32 %v904, %v1295
        %v1362 = vadd.f32 %v905, %v1298
        %v1363 = vadd.f32 %v906, %v1303
        %v1364 = vadd.f32 %v907, %v1306
        %v1365 = vadd.f32 %v908, %v1311
        %v1366 = vadd.f32 %v909, %v1314
        %v1367 = vadd.f32 %v910, %v1319
        %v1368 = vadd.f32 %v911, %v1322
        %v1369 = vadd.f32 %v912, %v1327
        %v1370 = vadd.f32 %v913, %v1330
        %v1371 = vadd.f32 %v914, %v1335
        %v1372 = vadd.f32 %v915, %v1338
        %s1373 = scalar_lea.vmem %s1, 64
        %v1374 = vld [vmem:[%s1373] sm:$0xf]
        %v1375 = vld [vmem:[%s1373 + $0x4] sm:$0xf]
        %v1376 = vld [vmem:[%s1373 + $0x8] sm:$0xf]
        %v1377 = vld [vmem:[%s1373 + $0xc] sm:$0xf]
        %v1382 = vunpack.c.l.b16 %v1374
        %v1383 = vunpack.c.l.b16 %v1375
        %v1384 = vunpack.c.l.b16 %v1376
        %v1385 = vunpack.c.l.b16 %v1377
        %v1386 = vpack.c.b16 %v1383, %v1382
        %v1387 = vpack.c.b16 %v1385, %v1384
        %v1391 = vsel %vm317, %v1113, 0
        %1393 = vmatprep.subr.bf16.mxu0 0
        %1394 = vmatpush1.bf16.msra.mxu0 %v1386
        %1395 = vmatprep.subr.bf16.mxu0 0
        %1396 = vmatpush1.bf16.msra.mxu0 %v1387
        %1397 = vmatprep.subr.bf16.mxu0 0
        %1398 = vmatpush1.bf16.msra.mxu0 0
        %1399 = vmatprep.subr.bf16.mxu0 0
        %1400 = vmatpush1.bf16.msra.mxu0 0
        %1401 = vmatprep.subr.bf16.mxu0 0
        %1402 = vmatpush1.bf16.msra.mxu0 0
        %1403 = vmatprep.subr.bf16.mxu0 0
        %1404 = vmatpush1.bf16.msra.mxu0 0
        %1405 = vmatprep.subr.bf16.mxu0 0
        %1406 = vmatpush1.bf16.msra.mxu0 0
        %1407 = vmatprep.subr.bf16.mxu0 0
        %1408 = vmatpush1.bf16.msra.mxu0 0
        %1409 = vmatprep.subr.bf16.mxu0 0
        %1410 = vmatpush1.bf16.msra.mxu0 0
        %1411 = vmatprep.subr.bf16.mxu0 0
        %1412 = vmatpush1.bf16.msra.mxu0 0
        %1413 = vmatprep.subr.bf16.mxu0 0
        %1414 = vmatpush1.bf16.msra.mxu0 0
        %1415 = vmatprep.subr.bf16.mxu0 0
        %1416 = vmatpush1.bf16.msra.mxu0 0
        %1417 = vmatprep.subr.bf16.mxu0 0
        %1418 = vmatpush1.bf16.msra.mxu0 0
        %1419 = vmatprep.subr.bf16.mxu0 0
        %1420 = vmatpush1.bf16.msra.mxu0 0
        %1421 = vmatprep.subr.bf16.mxu0 0
        %1422 = vmatpush1.bf16.msra.mxu0 0
        %1423 = vmatprep.subr.bf16.mxu0 0
        %1424 = vmatpush1.bf16.msra.mxu0 0
        %1425 = vmatprep.mubr.bf16.mxu0 0
        %1426 = vmatmul.mubr.bf16.gmra.mrb[0].mxu0 %v1136
        %v1427 = vpop.f32.mrb[0].mxu0
        %v1428 = vadd.f32 0.0, %v1427
        %v1429 = vpop.f32.mrb[0].mxu0
        %v1430 = vpop.f32.mrb[0].mxu0
        %v1431 = vadd.f32 0.0, %v1430
        %v1432 = vpop.f32.mrb[0].mxu0
        %1433 = vmatprep.mubr.bf16.mxu0 0
        %1434 = vmatmul.mubr.bf16.gmra.mrb[0].mxu0 %v1139
        %v1435 = vpop.f32.mrb[0].mxu0
        %v1436 = vadd.f32 0.0, %v1435
        %v1437 = vpop.f32.mrb[0].mxu0
        %v1438 = vpop.f32.mrb[0].mxu0
        %v1439 = vadd.f32 0.0, %v1438
        %v1440 = vpop.f32.mrb[0].mxu0
        %1441 = vmatprep.mubr.bf16.mxu0 0
        %1442 = vmatmul.mubr.bf16.gmra.mrb[0].mxu0 %v1142
        %v1443 = vpop.f32.mrb[0].mxu0
        %v1444 = vadd.f32 0.0, %v1443
        %v1445 = vpop.f32.mrb[0].mxu0
        %v1446 = vpop.f32.mrb[0].mxu0
        %v1447 = vadd.f32 0.0, %v1446
        %v1448 = vpop.f32.mrb[0].mxu0
        %1449 = vmatprep.mubr.bf16.mxu0 0
        %1450 = vmatmul.mubr.bf16.gmra.mrb[0].mxu0 %v1145
        %v1451 = vpop.f32.mrb[0].mxu0
        %v1452 = vadd.f32 0.0, %v1451
        %v1453 = vpop.f32.mrb[0].mxu0
        %v1454 = vpop.f32.mrb[0].mxu0
        %v1455 = vadd.f32 0.0, %v1454
        %v1456 = vpop.f32.mrb[0].mxu0
        %1457 = vmatprep.mubr.bf16.mxu0 0
        %1458 = vmatmul.mubr.bf16.gmra.mrb[0].mxu0 %v1148
        %v1459 = vpop.f32.mrb[0].mxu0
        %v1460 = vadd.f32 0.0, %v1459
        %v1461 = vpop.f32.mrb[0].mxu0
        %v1462 = vpop.f32.mrb[0].mxu0
        %v1463 = vadd.f32 0.0, %v1462
        %v1464 = vpop.f32.mrb[0].mxu0
        %1465 = vmatprep.mubr.bf16.mxu0 0
        %1466 = vmatmul.mubr.bf16.gmra.mrb[0].mxu0 %v1151
        %v1467 = vpop.f32.mrb[0].mxu0
        %v1468 = vadd.f32 0.0, %v1467
        %v1469 = vpop.f32.mrb[0].mxu0
        %v1470 = vpop.f32.mrb[0].mxu0
        %v1471 = vadd.f32 0.0, %v1470
        %v1472 = vpop.f32.mrb[0].mxu0
        %1473 = vmatprep.mubr.bf16.mxu0 0
        %1474 = vmatmul.mubr.bf16.gmra.mrb[0].mxu0 %v1154
        %v1475 = vpop.f32.mrb[0].mxu0
        %v1476 = vadd.f32 0.0, %v1475
        %v1477 = vpop.f32.mrb[0].mxu0
        %v1478 = vpop.f32.mrb[0].mxu0
        %v1479 = vadd.f32 0.0, %v1478
        %v1480 = vpop.f32.mrb[0].mxu0
        %1481 = vmatprep.mubr.bf16.mxu0 0
        %1482 = vmatmul.mubr.bf16.gmra.mrb[0].mxu0 %v1157
        %v1483 = vpop.f32.mrb[0].mxu0
        %v1484 = vadd.f32 0.0, %v1483
        %v1485 = vpop.f32.mrb[0].mxu0
        %v1486 = vpop.f32.mrb[0].mxu0
        %v1487 = vadd.f32 0.0, %v1486
        %v1488 = vpop.f32.mrb[0].mxu0
        %1489 = vmatprep.mubr.bf16.mxu0 0
        %1490 = vmatmul.mubr.bf16.gmra.mrb[0].mxu0 %v1160
        %v1491 = vpop.f32.mrb[0].mxu0
        %v1492 = vadd.f32 0.0, %v1491
        %v1493 = vpop.f32.mrb[0].mxu0
        %v1494 = vpop.f32.mrb[0].mxu0
        %v1495 = vadd.f32 0.0, %v1494
        %v1496 = vpop.f32.mrb[0].mxu0
        %1497 = vmatprep.mubr.bf16.mxu0 0
        %1498 = vmatmul.mubr.bf16.gmra.mrb[0].mxu0 %v1163
        %v1499 = vpop.f32.mrb[0].mxu0
        %v1500 = vadd.f32 0.0, %v1499
        %v1501 = vpop.f32.mrb[0].mxu0
        %v1502 = vpop.f32.mrb[0].mxu0
        %v1503 = vadd.f32 0.0, %v1502
        %v1504 = vpop.f32.mrb[0].mxu0
        %1505 = vmatprep.mubr.bf16.mxu0 0
        %1506 = vmatmul.mubr.bf16.gmra.mrb[0].mxu0 %v1166
        %v1507 = vpop.f32.mrb[0].mxu0
        %v1508 = vadd.f32 0.0, %v1507
        %v1509 = vpop.f32.mrb[0].mxu0
        %v1510 = vpop.f32.mrb[0].mxu0
        %v1511 = vadd.f32 0.0, %v1510
        %v1512 = vpop.f32.mrb[0].mxu0
        %1513 = vmatprep.mubr.bf16.mxu0 0
        %1514 = vmatmul.mubr.bf16.gmra.mrb[0].mxu0 %v1169
        %v1515 = vpop.f32.mrb[0].mxu0
        %v1516 = vadd.f32 0.0, %v1515
        %v1517 = vpop.f32.mrb[0].mxu0
        %v1518 = vpop.f32.mrb[0].mxu0
        %v1519 = vadd.f32 0.0, %v1518
        %v1520 = vpop.f32.mrb[0].mxu0
        %1521 = vmatprep.mubr.bf16.mxu0 0
        %1522 = vmatmul.mubr.bf16.gmra.mrb[0].mxu0 %v1172
        %v1523 = vpop.f32.mrb[0].mxu0
        %v1524 = vadd.f32 0.0, %v1523
        %v1525 = vpop.f32.mrb[0].mxu0
        %v1526 = vpop.f32.mrb[0].mxu0
        %v1527 = vadd.f32 0.0, %v1526
        %v1528 = vpop.f32.mrb[0].mxu0
        %1529 = vmatprep.mubr.bf16.mxu0 0
        %1530 = vmatmul.mubr.bf16.gmra.mrb[0].mxu0 %v1175
        %v1531 = vpop.f32.mrb[0].mxu0
        %v1532 = vadd.f32 0.0, %v1531
        %v1533 = vpop.f32.mrb[0].mxu0
        %v1534 = vpop.f32.mrb[0].mxu0
        %v1535 = vadd.f32 0.0, %v1534
        %v1536 = vpop.f32.mrb[0].mxu0
        %1537 = vmatprep.mubr.bf16.mxu0 0
        %1538 = vmatmul.mubr.bf16.gmra.mrb[0].mxu0 %v1178
        %v1539 = vpop.f32.mrb[0].mxu0
        %v1540 = vadd.f32 0.0, %v1539
        %v1541 = vpop.f32.mrb[0].mxu0
        %v1542 = vpop.f32.mrb[0].mxu0
        %v1543 = vadd.f32 0.0, %v1542
        %v1544 = vpop.f32.mrb[0].mxu0
        %1545 = vmatprep.mubr.bf16.mxu0 0
        %1546 = vmatmul.mubr.bf16.gmra.mrb[0].mxu0 %v1391
        %v1547 = vpop.f32.mrb[0].mxu0
        %v1548 = vadd.f32 0.0, %v1547
        %v1549 = vpop.f32.mrb[0].mxu0
        %v1550 = vpop.f32.mrb[0].mxu0
        %v1551 = vadd.f32 0.0, %v1550
        %v1552 = vpop.f32.mrb[0].mxu0
        %1553 = vdwg.mxu0
        %v1554 = vadd.f32 %v1341, %v1428
        %v1555 = vadd.f32 %v1342, %v1431
        %v1556 = vadd.f32 %v1343, %v1436
        %v1557 = vadd.f32 %v1344, %v1439
        %v1558 = vadd.f32 %v1345, %v1444
        %v1559 = vadd.f32 %v1346, %v1447
        %v1560 = vadd.f32 %v1347, %v1452
        %v1561 = vadd.f32 %v1348, %v1455
        %v1562 = vadd.f32 %v1349, %v1460
        %v1563 = vadd.f32 %v1350, %v1463
        %v1564 = vadd.f32 %v1351, %v1468
        %v1565 = vadd.f32 %v1352, %v1471
        %v1566 = vadd.f32 %v1353, %v1476
        %v1567 = vadd.f32 %v1354, %v1479
        %v1568 = vadd.f32 %v1355, %v1484
        %v1569 = vadd.f32 %v1356, %v1487
        %v1570 = vadd.f32 %v1357, %v1492
        %v1571 = vadd.f32 %v1358, %v1495
        %v1572 = vadd.f32 %v1359, %v1500
        %v1573 = vadd.f32 %v1360, %v1503
        %v1574 = vadd.f32 %v1361, %v1508
        %v1575 = vadd.f32 %v1362, %v1511
        %v1576 = vadd.f32 %v1363, %v1516
        %v1577 = vadd.f32 %v1364, %v1519
        %v1578 = vadd.f32 %v1365, %v1524
        %v1579 = vadd.f32 %v1366, %v1527
        %v1580 = vadd.f32 %v1367, %v1532
        %v1581 = vadd.f32 %v1368, %v1535
        %v1582 = vadd.f32 %v1369, %v1540
        %v1583 = vadd.f32 %v1370, %v1543
        %v1584 = vadd.f32 %v1371, %v1548
        %v1585 = vadd.f32 %v1372, %v1551
        %s1586 = scalar_lea.vmem %s1, 112
        %v1587 = vld [vmem:[%s1586] sm:$0xf]
        %v1588 = vld [vmem:[%s1586 + $0x4] sm:$0xf]
        %v1589 = vld [vmem:[%s1586 + $0x8] sm:$0xf]
        %v1590 = vld [vmem:[%s1586 + $0xc] sm:$0xf]
        %v1595 = vunpack.c.l.b16 %v1587
        %v1596 = vunpack.c.l.b16 %v1588
        %v1597 = vunpack.c.l.b16 %v1589
        %v1598 = vunpack.c.l.b16 %v1590
        %v1599 = vpack.c.b16 %v1596, %v1595
        %v1600 = vpack.c.b16 %v1598, %v1597
        %v1604 = vsel %vm317, %v1114, 0
        %1606 = vmatprep.subr.bf16.mxu0 0
        %1607 = vmatpush1.bf16.msra.mxu0 %v1599
        %1608 = vmatprep.subr.bf16.mxu0 0
        %1609 = vmatpush1.bf16.msra.mxu0 %v1600
        %1610 = vmatprep.subr.bf16.mxu0 0
        %1611 = vmatpush1.bf16.msra.mxu0 0
        %1612 = vmatprep.subr.bf16.mxu0 0
        %1613 = vmatpush1.bf16.msra.mxu0 0
        %1614 = vmatprep.subr.bf16.mxu0 0
        %1615 = vmatpush1.bf16.msra.mxu0 0
        %1616 = vmatprep.subr.bf16.mxu0 0
        %1617 = vmatpush1.bf16.msra.mxu0 0
        %1618 = vmatprep.subr.bf16.mxu0 0
        %1619 = vmatpush1.bf16.msra.mxu0 0
        %1620 = vmatprep.subr.bf16.mxu0 0
        %1621 = vmatpush1.bf16.msra.mxu0 0
        %1622 = vmatprep.subr.bf16.mxu0 0
        %1623 = vmatpush1.bf16.msra.mxu0 0
        %1624 = vmatprep.subr.bf16.mxu0 0
        %1625 = vmatpush1.bf16.msra.mxu0 0
        %1626 = vmatprep.subr.bf16.mxu0 0
        %1627 = vmatpush1.bf16.msra.mxu0 0
        %1628 = vmatprep.subr.bf16.mxu0 0
        %1629 = vmatpush1.bf16.msra.mxu0 0
        %1630 = vmatprep.subr.bf16.mxu0 0
        %1631 = vmatpush1.bf16.msra.mxu0 0
        %1632 = vmatprep.subr.bf16.mxu0 0
        %1633 = vmatpush1.bf16.msra.mxu0 0
        %1634 = vmatprep.subr.bf16.mxu0 0
        %1635 = vmatpush1.bf16.msra.mxu0 0
        %1636 = vmatprep.subr.bf16.mxu0 0
        %1637 = vmatpush1.bf16.msra.mxu0 0
        %1638 = vmatprep.mubr.bf16.mxu0 0
        %1639 = vmatmul.mubr.bf16.gmra.mrb[0].mxu0 %v1139
        %v1640 = vpop.f32.mrb[0].mxu0
        %v1641 = vadd.f32 0.0, %v1640
        %v1642 = vpop.f32.mrb[0].mxu0
        %v1643 = vpop.f32.mrb[0].mxu0
        %v1644 = vadd.f32 0.0, %v1643
        %v1645 = vpop.f32.mrb[0].mxu0
        %1646 = vmatprep.mubr.bf16.mxu0 0
        %1647 = vmatmul.mubr.bf16.gmra.mrb[0].mxu0 %v1142
        %v1648 = vpop.f32.mrb[0].mxu0
        %v1649 = vadd.f32 0.0, %v1648
        %v1650 = vpop.f32.mrb[0].mxu0
        %v1651 = vpop.f32.mrb[0].mxu0
        %v1652 = vadd.f32 0.0, %v1651
        %v1653 = vpop.f32.mrb[0].mxu0
        %1654 = vmatprep.mubr.bf16.mxu0 0
        %1655 = vmatmul.mubr.bf16.gmra.mrb[0].mxu0 %v1145
        %v1656 = vpop.f32.mrb[0].mxu0
        %v1657 = vadd.f32 0.0, %v1656
        %v1658 = vpop.f32.mrb[0].mxu0
        %v1659 = vpop.f32.mrb[0].mxu0
        %v1660 = vadd.f32 0.0, %v1659
        %v1661 = vpop.f32.mrb[0].mxu0
        %1662 = vmatprep.mubr.bf16.mxu0 0
        %1663 = vmatmul.mubr.bf16.gmra.mrb[0].mxu0 %v1148
        %v1664 = vpop.f32.mrb[0].mxu0
        %v1665 = vadd.f32 0.0, %v1664
        %v1666 = vpop.f32.mrb[0].mxu0
        %v1667 = vpop.f32.mrb[0].mxu0
        %v1668 = vadd.f32 0.0, %v1667
        %v1669 = vpop.f32.mrb[0].mxu0
        %1670 = vmatprep.mubr.bf16.mxu0 0
        %1671 = vmatmul.mubr.bf16.gmra.mrb[0].mxu0 %v1151
        %v1672 = vpop.f32.mrb[0].mxu0
        %v1673 = vadd.f32 0.0, %v1672
        %v1674 = vpop.f32.mrb[0].mxu0
        %v1675 = vpop.f32.mrb[0].mxu0
        %v1676 = vadd.f32 0.0, %v1675
        %v1677 = vpop.f32.mrb[0].mxu0
        %1678 = vmatprep.mubr.bf16.mxu0 0
        %1679 = vmatmul.mubr.bf16.gmra.mrb[0].mxu0 %v1154
        %v1680 = vpop.f32.mrb[0].mxu0
        %v1681 = vadd.f32 0.0, %v1680
        %v1682 = vpop.f32.mrb[0].mxu0
        %v1683 = vpop.f32.mrb[0].mxu0
        %v1684 = vadd.f32 0.0, %v1683
        %v1685 = vpop.f32.mrb[0].mxu0
        %1686 = vmatprep.mubr.bf16.mxu0 0
        %1687 = vmatmul.mubr.bf16.gmra.mrb[0].mxu0 %v1157
        %v1688 = vpop.f32.mrb[0].mxu0
        %v1689 = vadd.f32 0.0, %v1688
        %v1690 = vpop.f32.mrb[0].mxu0
        %v1691 = vpop.f32.mrb[0].mxu0
        %v1692 = vadd.f32 0.0, %v1691
        %v1693 = vpop.f32.mrb[0].mxu0
        %1694 = vmatprep.mubr.bf16.mxu0 0
        %1695 = vmatmul.mubr.bf16.gmra.mrb[0].mxu0 %v1160
        %v1696 = vpop.f32.mrb[0].mxu0
        %v1697 = vadd.f32 0.0, %v1696
        %v1698 = vpop.f32.mrb[0].mxu0
        %v1699 = vpop.f32.mrb[0].mxu0
        %v1700 = vadd.f32 0.0, %v1699
        %v1701 = vpop.f32.mrb[0].mxu0
        %1702 = vmatprep.mubr.bf16.mxu0 0
        %1703 = vmatmul.mubr.bf16.gmra.mrb[0].mxu0 %v1163
        %v1704 = vpop.f32.mrb[0].mxu0
        %v1705 = vadd.f32 0.0, %v1704
        %v1706 = vpop.f32.mrb[0].mxu0
        %v1707 = vpop.f32.mrb[0].mxu0
        %v1708 = vadd.f32 0.0, %v1707
        %v1709 = vpop.f32.mrb[0].mxu0
        %1710 = vmatprep.mubr.bf16.mxu0 0
        %1711 = vmatmul.mubr.bf16.gmra.mrb[0].mxu0 %v1166
        %v1712 = vpop.f32.mrb[0].mxu0
        %v1713 = vadd.f32 0.0, %v1712
        %v1714 = vpop.f32.mrb[0].mxu0
        %v1715 = vpop.f32.mrb[0].mxu0
        %v1716 = vadd.f32 0.0, %v1715
        %v1717 = vpop.f32.mrb[0].mxu0
        %1718 = vmatprep.mubr.bf16.mxu0 0
        %1719 = vmatmul.mubr.bf16.gmra.mrb[0].mxu0 %v1169
        %v1720 = vpop.f32.mrb[0].mxu0
        %v1721 = vadd.f32 0.0, %v1720
        %v1722 = vpop.f32.mrb[0].mxu0
        %v1723 = vpop.f32.mrb[0].mxu0
        %v1724 = vadd.f32 0.0, %v1723
        %v1725 = vpop.f32.mrb[0].mxu0
        %1726 = vmatprep.mubr.bf16.mxu0 0
        %1727 = vmatmul.mubr.bf16.gmra.mrb[0].mxu0 %v1172
        %v1728 = vpop.f32.mrb[0].mxu0
        %v1729 = vadd.f32 0.0, %v1728
        %v1730 = vpop.f32.mrb[0].mxu0
        %v1731 = vpop.f32.mrb[0].mxu0
        %v1732 = vadd.f32 0.0, %v1731
        %v1733 = vpop.f32.mrb[0].mxu0
        %1734 = vmatprep.mubr.bf16.mxu0 0
        %1735 = vmatmul.mubr.bf16.gmra.mrb[0].mxu0 %v1175
        %v1736 = vpop.f32.mrb[0].mxu0
        %v1737 = vadd.f32 0.0, %v1736
        %v1738 = vpop.f32.mrb[0].mxu0
        %v1739 = vpop.f32.mrb[0].mxu0
        %v1740 = vadd.f32 0.0, %v1739
        %v1741 = vpop.f32.mrb[0].mxu0
        %1742 = vmatprep.mubr.bf16.mxu0 0
        %1743 = vmatmul.mubr.bf16.gmra.mrb[0].mxu0 %v1178
        %v1744 = vpop.f32.mrb[0].mxu0
        %v1745 = vadd.f32 0.0, %v1744
        %v1746 = vpop.f32.mrb[0].mxu0
        %v1747 = vpop.f32.mrb[0].mxu0
        %v1748 = vadd.f32 0.0, %v1747
        %v1749 = vpop.f32.mrb[0].mxu0
        %1750 = vmatprep.mubr.bf16.mxu0 0
        %1751 = vmatmul.mubr.bf16.gmra.mrb[0].mxu0 %v1391
        %v1752 = vpop.f32.mrb[0].mxu0
        %v1753 = vadd.f32 0.0, %v1752
        %v1754 = vpop.f32.mrb[0].mxu0
        %v1755 = vpop.f32.mrb[0].mxu0
        %v1756 = vadd.f32 0.0, %v1755
        %v1757 = vpop.f32.mrb[0].mxu0
        %1758 = vmatprep.mubr.bf16.mxu0 0
        %1759 = vmatmul.mubr.bf16.gmra.mrb[0].mxu0 %v1604
        %v1760 = vpop.f32.mrb[0].mxu0
        %v1761 = vadd.f32 0.0, %v1760
        %v1762 = vpop.f32.mrb[0].mxu0
        %v1763 = vpop.f32.mrb[0].mxu0
        %v1764 = vadd.f32 0.0, %v1763
        %v1765 = vpop.f32.mrb[0].mxu0
        %1766 = vdwg.mxu0
        %v1767 = vadd.f32 %v1554, %v1641
        %v1768 = vadd.f32 %v1555, %v1644
        %v1769 = vadd.f32 %v1556, %v1649
        %v1770 = vadd.f32 %v1557, %v1652
        %v1771 = vadd.f32 %v1558, %v1657
        %v1772 = vadd.f32 %v1559, %v1660
        %v1773 = vadd.f32 %v1560, %v1665
        %v1774 = vadd.f32 %v1561, %v1668
        %v1775 = vadd.f32 %v1562, %v1673
        %v1776 = vadd.f32 %v1563, %v1676
        %v1777 = vadd.f32 %v1564, %v1681
        %v1778 = vadd.f32 %v1565, %v1684
        %v1779 = vadd.f32 %v1566, %v1689
        %v1780 = vadd.f32 %v1567, %v1692
        %v1781 = vadd.f32 %v1568, %v1697
        %v1782 = vadd.f32 %v1569, %v1700
        %v1783 = vadd.f32 %v1570, %v1705
        %v1784 = vadd.f32 %v1571, %v1708
        %v1785 = vadd.f32 %v1572, %v1713
        %v1786 = vadd.f32 %v1573, %v1716
        %v1787 = vadd.f32 %v1574, %v1721
        %v1788 = vadd.f32 %v1575, %v1724
        %v1789 = vadd.f32 %v1576, %v1729
        %v1790 = vadd.f32 %v1577, %v1732
        %v1791 = vadd.f32 %v1578, %v1737
        %v1792 = vadd.f32 %v1579, %v1740
        %v1793 = vadd.f32 %v1580, %v1745
        %v1794 = vadd.f32 %v1581, %v1748
        %v1795 = vadd.f32 %v1582, %v1753
        %v1796 = vadd.f32 %v1583, %v1756
        %v1797 = vadd.f32 %v1584, %v1761
        %v1798 = vadd.f32 %v1585, %v1764
        %vm1799 = vcmask 1045504
        %v1800 = vrot.slane %v224, 2
        %v1801 = vrot.slane %v225, 2
        %v1802 = vsel %vm1799, %v1800, %v1801
        %v1803 = vrot.slane %v226, 2
        %v1804 = vsel %vm1799, %v1801, %v1803
        %v1805 = vrot.slane %v227, 2
        %v1806 = vrot.slane %v228, 2
        %v1807 = vsel %vm1799, %v1805, %v1806
        %v1808 = vrot.slane %v229, 2
        %v1809 = vsel %vm1799, %v1806, %v1808
        %v1810 = vrot.slane %v230, 2
        %v1811 = vrot.slane %v231, 2
        %v1812 = vsel %vm1799, %v1810, %v1811
        %v1813 = vrot.slane %v232, 2
        %v1814 = vsel %vm1799, %v1811, %v1813
        %v1815 = vrot.slane %v233, 2
        %v1816 = vrot.slane %v234, 2
        %v1817 = vsel %vm1799, %v1815, %v1816
        %v1818 = vrot.slane %v235, 2
        %v1819 = vsel %vm1799, %v1816, %v1818
        %v1820 = vrot.slane %v236, 2
        %v1821 = vrot.slane %v237, 2
        %v1822 = vsel %vm1799, %v1820, %v1821
        %v1823 = vrot.slane %v238, 2
        %v1824 = vsel %vm1799, %v1821, %v1823
        %v1825 = vrot.slane %v239, 2
        %v1826 = vrot.slane %v240, 2
        %v1827 = vsel %vm1799, %v1825, %v1826
        %v1828 = vrot.slane %v241, 2
        %v1829 = vsel %vm1799, %v1826, %v1828
        %v1830 = vrot.slane %v242, 2
        %v1831 = vrot.slane %v243, 2
        %v1832 = vsel %vm1799, %v1830, %v1831
        %v1833 = vrot.slane %v244, 2
        %v1834 = vsel %vm1799, %v1831, %v1833
        %v1835 = vrot.slane %v245, 2
        %v1836 = vrot.slane %v246, 2
        %v1837 = vsel %vm1799, %v1835, %v1836
        %v1838 = vrot.slane %v247, 2
        %v1839 = vsel %vm1799, %v1836, %v1838
        %v1840 = vrot.slane %v248, 2
        %v1841 = vrot.slane %v249, 2
        %v1842 = vsel %vm1799, %v1840, %v1841
        %v1843 = vrot.slane %v250, 2
        %v1844 = vsel %vm1799, %v1841, %v1843
        %v1845 = vrot.slane %v251, 2
        %v1846 = vrot.slane %v252, 2
        %v1847 = vsel %vm1799, %v1845, %v1846
        %v1848 = vrot.slane %v253, 2
        %v1849 = vsel %vm1799, %v1846, %v1848
        %v1850 = vrot.slane %v254, 2
        %v1851 = vrot.slane %v255, 2
        %v1852 = vsel %vm1799, %v1850, %v1851
        %v1853 = vrot.slane %v256, 2
        %v1854 = vsel %vm1799, %v1851, %v1853
        %v1855 = vrot.slane %v257, 2
        %v1856 = vrot.slane %v258, 2
        %v1857 = vsel %vm1799, %v1855, %v1856
        %v1858 = vrot.slane %v259, 2
        %v1859 = vsel %vm1799, %v1856, %v1858
        %v1860 = vrot.slane %v260, 2
        %v1861 = vrot.slane %v261, 2
        %v1862 = vsel %vm1799, %v1860, %v1861
        %v1863 = vrot.slane %v262, 2
        %v1864 = vsel %vm1799, %v1861, %v1863
        %v1865 = vrot.slane %v263, 2
        %v1866 = vrot.slane %v264, 2
        %v1867 = vsel %vm1799, %v1865, %v1866
        %v1868 = vrot.slane %v265, 2
        %v1869 = vsel %vm1799, %v1866, %v1868
        %v1870 = vrot.slane %v266, 2
        %v1871 = vrot.slane %v267, 2
        %v1872 = vsel %vm1799, %v1870, %v1871
        %v1873 = vrot.slane %v268, 2
        %v1874 = vsel %vm1799, %v1871, %v1873
        %v1875 = vrot.slane %v269, 2
        %v1876 = vrot.slane %v270, 2
        %v1877 = vsel %vm1799, %v1875, %v1876
        %v1878 = vrot.slane %v271, 2
        %v1879 = vsel %vm1799, %v1876, %v1878
        %v1880 = vrot.slane %v272, 2
        %v1881 = vrot.slane %v273, 2
        %v1882 = vsel %vm1799, %v1880, %v1881
        %v1883 = vrot.slane %v274, 2
        %v1884 = vsel %vm1799, %v1881, %v1883
        %v1885 = vrot.slane %v275, 2
        %v1886 = vrot.slane %v276, 2
        %v1887 = vsel %vm1799, %v1885, %v1886
        %v1888 = vrot.slane %v277, 2
        %v1889 = vsel %vm1799, %v1886, %v1888
        %v1926 = vpack.c.bf16 %v1804, %v1802
        %v1927 = vpack.c.bf16 %v1809, %v1807
        %v1928 = vpack.c.bf16 %v1814, %v1812
        %v1929 = vpack.c.bf16 %v1819, %v1817
        %v1930 = vpack.c.bf16 %v1824, %v1822
        %v1931 = vpack.c.bf16 %v1829, %v1827
        %v1932 = vpack.c.bf16 %v1834, %v1832
        %v1933 = vpack.c.bf16 %v1839, %v1837
        %v1934 = vpack.c.bf16 %v1844, %v1842
        %v1935 = vpack.c.bf16 %v1849, %v1847
        %v1936 = vpack.c.bf16 %v1854, %v1852
        %v1937 = vpack.c.bf16 %v1859, %v1857
        %v1938 = vpack.c.bf16 %v1864, %v1862
        %v1939 = vpack.c.bf16 %v1869, %v1867
        %v1940 = vpack.c.bf16 %v1874, %v1872
        %v1941 = vpack.c.bf16 %v1879, %v1877
        %v1942 = vpack.c.bf16 %v1884, %v1882
        %v1943 = vpack.c.bf16 %v1889, %v1887
        %s1944 = scalar_lea.vmem %s1, 32
        %v1945 = vld [vmem:[%s1944] sm:$0xf]
        %v1946 = vld [vmem:[%s1944 + $0x4] sm:$0xf]
        %v1947 = vld [vmem:[%s1944 + $0x8] sm:$0xf]
        %v1948 = vld [vmem:[%s1944 + $0xc] sm:$0xf]
        %v1953 = vunpack.c.l.b16 %v1945
        %v1954 = vunpack.c.l.b16 %v1946
        %v1955 = vunpack.c.l.b16 %v1947
        %v1956 = vunpack.c.l.b16 %v1948
        %v1957 = vpack.c.b16 %v1954, %v1953
        %v1958 = vpack.c.b16 %v1956, %v1955
        %v1962 = vsel %vm317, %v1926, 0
        %v1965 = vsel %vm317, %v1927, 0
        %v1968 = vsel %vm317, %v1928, 0
        %v1971 = vsel %vm317, %v1929, 0
        %v1974 = vsel %vm317, %v1930, 0
        %v1977 = vsel %vm317, %v1931, 0
        %v1980 = vsel %vm317, %v1932, 0
        %v1983 = vsel %vm317, %v1933, 0
        %v1986 = vsel %vm317, %v1934, 0
        %v1989 = vsel %vm317, %v1935, 0
        %v1992 = vsel %vm317, %v1936, 0
        %v1995 = vsel %vm317, %v1937, 0
        %v1998 = vsel %vm317, %v1938, 0
        %v2001 = vsel %vm317, %v1939, 0
        %v2004 = vsel %vm317, %v1940, 0
        %v2007 = vsel %vm317, %v1941, 0
        %2009 = vmatprep.subr.bf16.mxu0 0
        %2010 = vmatpush1.bf16.msra.mxu0 %v1957
        %2011 = vmatprep.subr.bf16.mxu0 0
        %2012 = vmatpush1.bf16.msra.mxu0 %v1958
        %2013 = vmatprep.subr.bf16.mxu0 0
        %2014 = vmatpush1.bf16.msra.mxu0 0
        %2015 = vmatprep.subr.bf16.mxu0 0
        %2016 = vmatpush1.bf16.msra.mxu0 0
        %2017 = vmatprep.subr.bf16.mxu0 0
        %2018 = vmatpush1.bf16.msra.mxu0 0
        %2019 = vmatprep.subr.bf16.mxu0 0
        %2020 = vmatpush1.bf16.msra.mxu0 0
        %2021 = vmatprep.subr.bf16.mxu0 0
        %2022 = vmatpush1.bf16.msra.mxu0 0
        %2023 = vmatprep.subr.bf16.mxu0 0
        %2024 = vmatpush1.bf16.msra.mxu0 0
        %2025 = vmatprep.subr.bf16.mxu0 0
        %2026 = vmatpush1.bf16.msra.mxu0 0
        %2027 = vmatprep.subr.bf16.mxu0 0
        %2028 = vmatpush1.bf16.msra.mxu0 0
        %2029 = vmatprep.subr.bf16.mxu0 0
        %2030 = vmatpush1.bf16.msra.mxu0 0
        %2031 = vmatprep.subr.bf16.mxu0 0
        %2032 = vmatpush1.bf16.msra.mxu0 0
        %2033 = vmatprep.subr.bf16.mxu0 0
        %2034 = vmatpush1.bf16.msra.mxu0 0
        %2035 = vmatprep.subr.bf16.mxu0 0
        %2036 = vmatpush1.bf16.msra.mxu0 0
        %2037 = vmatprep.subr.bf16.mxu0 0
        %2038 = vmatpush1.bf16.msra.mxu0 0
        %2039 = vmatprep.subr.bf16.mxu0 0
        %2040 = vmatpush1.bf16.msra.mxu0 0
        %2041 = vmatprep.mubr.bf16.mxu0 0
        %2042 = vmatmul.mubr.bf16.gmra.mrb[0].mxu0 %v1962
        %v2043 = vpop.f32.mrb[0].mxu0
        %v2044 = vadd.f32 0.0, %v2043
        %v2045 = vpop.f32.mrb[0].mxu0
        %v2046 = vpop.f32.mrb[0].mxu0
        %v2047 = vadd.f32 0.0, %v2046
        %v2048 = vpop.f32.mrb[0].mxu0
        %2049 = vmatprep.mubr.bf16.mxu0 0
        %2050 = vmatmul.mubr.bf16.gmra.mrb[0].mxu0 %v1965
        %v2051 = vpop.f32.mrb[0].mxu0
        %v2052 = vadd.f32 0.0, %v2051
        %v2053 = vpop.f32.mrb[0].mxu0
        %v2054 = vpop.f32.mrb[0].mxu0
        %v2055 = vadd.f32 0.0, %v2054
        %v2056 = vpop.f32.mrb[0].mxu0
        %2057 = vmatprep.mubr.bf16.mxu0 0
        %2058 = vmatmul.mubr.bf16.gmra.mrb[0].mxu0 %v1968
        %v2059 = vpop.f32.mrb[0].mxu0
        %v2060 = vadd.f32 0.0, %v2059
        %v2061 = vpop.f32.mrb[0].mxu0
        %v2062 = vpop.f32.mrb[0].mxu0
        %v2063 = vadd.f32 0.0, %v2062
        %v2064 = vpop.f32.mrb[0].mxu0
        %2065 = vmatprep.mubr.bf16.mxu0 0
        %2066 = vmatmul.mubr.bf16.gmra.mrb[0].mxu0 %v1971
        %v2067 = vpop.f32.mrb[0].mxu0
        %v2068 = vadd.f32 0.0, %v2067
        %v2069 = vpop.f32.mrb[0].mxu0
        %v2070 = vpop.f32.mrb[0].mxu0
        %v2071 = vadd.f32 0.0, %v2070
        %v2072 = vpop.f32.mrb[0].mxu0
        %2073 = vmatprep.mubr.bf16.mxu0 0
        %2074 = vmatmul.mubr.bf16.gmra.mrb[0].mxu0 %v1974
        %v2075 = vpop.f32.mrb[0].mxu0
        %v2076 = vadd.f32 0.0, %v2075
        %v2077 = vpop.f32.mrb[0].mxu0
        %v2078 = vpop.f32.mrb[0].mxu0
        %v2079 = vadd.f32 0.0, %v2078
        %v2080 = vpop.f32.mrb[0].mxu0
        %2081 = vmatprep.mubr.bf16.mxu0 0
        %2082 = vmatmul.mubr.bf16.gmra.mrb[0].mxu0 %v1977
        %v2083 = vpop.f32.mrb[0].mxu0
        %v2084 = vadd.f32 0.0, %v2083
        %v2085 = vpop.f32.mrb[0].mxu0
        %v2086 = vpop.f32.mrb[0].mxu0
        %v2087 = vadd.f32 0.0, %v2086
        %v2088 = vpop.f32.mrb[0].mxu0
        %2089 = vmatprep.mubr.bf16.mxu0 0
        %2090 = vmatmul.mubr.bf16.gmra.mrb[0].mxu0 %v1980
        %v2091 = vpop.f32.mrb[0].mxu0
        %v2092 = vadd.f32 0.0, %v2091
        %v2093 = vpop.f32.mrb[0].mxu0
        %v2094 = vpop.f32.mrb[0].mxu0
        %v2095 = vadd.f32 0.0, %v2094
        %v2096 = vpop.f32.mrb[0].mxu0
        %2097 = vmatprep.mubr.bf16.mxu0 0
        %2098 = vmatmul.mubr.bf16.gmra.mrb[0].mxu0 %v1983
        %v2099 = vpop.f32.mrb[0].mxu0
        %v2100 = vadd.f32 0.0, %v2099
        %v2101 = vpop.f32.mrb[0].mxu0
        %v2102 = vpop.f32.mrb[0].mxu0
        %v2103 = vadd.f32 0.0, %v2102
        %v2104 = vpop.f32.mrb[0].mxu0
        %2105 = vmatprep.mubr.bf16.mxu0 0
        %2106 = vmatmul.mubr.bf16.gmra.mrb[0].mxu0 %v1986
        %v2107 = vpop.f32.mrb[0].mxu0
        %v2108 = vadd.f32 0.0, %v2107
        %v2109 = vpop.f32.mrb[0].mxu0
        %v2110 = vpop.f32.mrb[0].mxu0
        %v2111 = vadd.f32 0.0, %v2110
        %v2112 = vpop.f32.mrb[0].mxu0
        %2113 = vmatprep.mubr.bf16.mxu0 0
        %2114 = vmatmul.mubr.bf16.gmra.mrb[0].mxu0 %v1989
        %v2115 = vpop.f32.mrb[0].mxu0
        %v2116 = vadd.f32 0.0, %v2115
        %v2117 = vpop.f32.mrb[0].mxu0
        %v2118 = vpop.f32.mrb[0].mxu0
        %v2119 = vadd.f32 0.0, %v2118
        %v2120 = vpop.f32.mrb[0].mxu0
        %2121 = vmatprep.mubr.bf16.mxu0 0
        %2122 = vmatmul.mubr.bf16.gmra.mrb[0].mxu0 %v1992
        %v2123 = vpop.f32.mrb[0].mxu0
        %v2124 = vadd.f32 0.0, %v2123
        %v2125 = vpop.f32.mrb[0].mxu0
        %v2126 = vpop.f32.mrb[0].mxu0
        %v2127 = vadd.f32 0.0, %v2126
        %v2128 = vpop.f32.mrb[0].mxu0
        %2129 = vmatprep.mubr.bf16.mxu0 0
        %2130 = vmatmul.mubr.bf16.gmra.mrb[0].mxu0 %v1995
        %v2131 = vpop.f32.mrb[0].mxu0
        %v2132 = vadd.f32 0.0, %v2131
        %v2133 = vpop.f32.mrb[0].mxu0
        %v2134 = vpop.f32.mrb[0].mxu0
        %v2135 = vadd.f32 0.0, %v2134
        %v2136 = vpop.f32.mrb[0].mxu0
        %2137 = vmatprep.mubr.bf16.mxu0 0
        %2138 = vmatmul.mubr.bf16.gmra.mrb[0].mxu0 %v1998
        %v2139 = vpop.f32.mrb[0].mxu0
        %v2140 = vadd.f32 0.0, %v2139
        %v2141 = vpop.f32.mrb[0].mxu0
        %v2142 = vpop.f32.mrb[0].mxu0
        %v2143 = vadd.f32 0.0, %v2142
        %v2144 = vpop.f32.mrb[0].mxu0
        %2145 = vmatprep.mubr.bf16.mxu0 0
        %2146 = vmatmul.mubr.bf16.gmra.mrb[0].mxu0 %v2001
        %v2147 = vpop.f32.mrb[0].mxu0
        %v2148 = vadd.f32 0.0, %v2147
        %v2149 = vpop.f32.mrb[0].mxu0
        %v2150 = vpop.f32.mrb[0].mxu0
        %v2151 = vadd.f32 0.0, %v2150
        %v2152 = vpop.f32.mrb[0].mxu0
        %2153 = vmatprep.mubr.bf16.mxu0 0
        %2154 = vmatmul.mubr.bf16.gmra.mrb[0].mxu0 %v2004
        %v2155 = vpop.f32.mrb[0].mxu0
        %v2156 = vadd.f32 0.0, %v2155
        %v2157 = vpop.f32.mrb[0].mxu0
        %v2158 = vpop.f32.mrb[0].mxu0
        %v2159 = vadd.f32 0.0, %v2158
        %v2160 = vpop.f32.mrb[0].mxu0
        %2161 = vmatprep.mubr.bf16.mxu0 0
        %2162 = vmatmul.mubr.bf16.gmra.mrb[0].mxu0 %v2007
        %v2163 = vpop.f32.mrb[0].mxu0
        %v2164 = vadd.f32 0.0, %v2163
        %v2165 = vpop.f32.mrb[0].mxu0
        %v2166 = vpop.f32.mrb[0].mxu0
        %v2167 = vadd.f32 0.0, %v2166
        %v2168 = vpop.f32.mrb[0].mxu0
        %2169 = vdwg.mxu0
        %v2170 = vadd.f32 %v1767, %v2044
        %v2171 = vadd.f32 %v1768, %v2047
        %v2172 = vadd.f32 %v1769, %v2052
        %v2173 = vadd.f32 %v1770, %v2055
        %v2174 = vadd.f32 %v1771, %v2060
        %v2175 = vadd.f32 %v1772, %v2063
        %v2176 = vadd.f32 %v1773, %v2068
        %v2177 = vadd.f32 %v1774, %v2071
        %v2178 = vadd.f32 %v1775, %v2076
        %v2179 = vadd.f32 %v1776, %v2079
        %v2180 = vadd.f32 %v1777, %v2084
        %v2181 = vadd.f32 %v1778, %v2087
        %v2182 = vadd.f32 %v1779, %v2092
        %v2183 = vadd.f32 %v1780, %v2095
        %v2184 = vadd.f32 %v1781, %v2100
        %v2185 = vadd.f32 %v1782, %v2103
        %v2186 = vadd.f32 %v1783, %v2108
        %v2187 = vadd.f32 %v1784, %v2111
        %v2188 = vadd.f32 %v1785, %v2116
        %v2189 = vadd.f32 %v1786, %v2119
        %v2190 = vadd.f32 %v1787, %v2124
        %v2191 = vadd.f32 %v1788, %v2127
        %v2192 = vadd.f32 %v1789, %v2132
        %v2193 = vadd.f32 %v1790, %v2135
        %v2194 = vadd.f32 %v1791, %v2140
        %v2195 = vadd.f32 %v1792, %v2143
        %v2196 = vadd.f32 %v1793, %v2148
        %v2197 = vadd.f32 %v1794, %v2151
        %v2198 = vadd.f32 %v1795, %v2156
        %v2199 = vadd.f32 %v1796, %v2159
        %v2200 = vadd.f32 %v1797, %v2164
        %v2201 = vadd.f32 %v1798, %v2167
        %s2202 = scalar_lea.vmem %s1, 80
        %v2203 = vld [vmem:[%s2202] sm:$0xf]
        %v2204 = vld [vmem:[%s2202 + $0x4] sm:$0xf]
        %v2205 = vld [vmem:[%s2202 + $0x8] sm:$0xf]
        %v2206 = vld [vmem:[%s2202 + $0xc] sm:$0xf]
        %v2211 = vunpack.c.l.b16 %v2203
        %v2212 = vunpack.c.l.b16 %v2204
        %v2213 = vunpack.c.l.b16 %v2205
        %v2214 = vunpack.c.l.b16 %v2206
        %v2215 = vpack.c.b16 %v2212, %v2211
        %v2216 = vpack.c.b16 %v2214, %v2213
        %v2220 = vsel %vm317, %v1942, 0
        %2222 = vmatprep.subr.bf16.mxu0 0
        %2223 = vmatpush1.bf16.msra.mxu0 %v2215
        %2224 = vmatprep.subr.bf16.mxu0 0
        %2225 = vmatpush1.bf16.msra.mxu0 %v2216
        %2226 = vmatprep.subr.bf16.mxu0 0
        %2227 = vmatpush1.bf16.msra.mxu0 0
        %2228 = vmatprep.subr.bf16.mxu0 0
        %2229 = vmatpush1.bf16.msra.mxu0 0
        %2230 = vmatprep.subr.bf16.mxu0 0
        %2231 = vmatpush1.bf16.msra.mxu0 0
        %2232 = vmatprep.subr.bf16.mxu0 0
        %2233 = vmatpush1.bf16.msra.mxu0 0
        %2234 = vmatprep.subr.bf16.mxu0 0
        %2235 = vmatpush1.bf16.msra.mxu0 0
        %2236 = vmatprep.subr.bf16.mxu0 0
        %2237 = vmatpush1.bf16.msra.mxu0 0
        %2238 = vmatprep.subr.bf16.mxu0 0
        %2239 = vmatpush1.bf16.msra.mxu0 0
        %2240 = vmatprep.subr.bf16.mxu0 0
        %2241 = vmatpush1.bf16.msra.mxu0 0
        %2242 = vmatprep.subr.bf16.mxu0 0
        %2243 = vmatpush1.bf16.msra.mxu0 0
        %2244 = vmatprep.subr.bf16.mxu0 0
        %2245 = vmatpush1.bf16.msra.mxu0 0
        %2246 = vmatprep.subr.bf16.mxu0 0
        %2247 = vmatpush1.bf16.msra.mxu0 0
        %2248 = vmatprep.subr.bf16.mxu0 0
        %2249 = vmatpush1.bf16.msra.mxu0 0
        %2250 = vmatprep.subr.bf16.mxu0 0
        %2251 = vmatpush1.bf16.msra.mxu0 0
        %2252 = vmatprep.subr.bf16.mxu0 0
        %2253 = vmatpush1.bf16.msra.mxu0 0
        %2254 = vmatprep.mubr.bf16.mxu0 0
        %2255 = vmatmul.mubr.bf16.gmra.mrb[0].mxu0 %v1965
        %v2256 = vpop.f32.mrb[0].mxu0
        %v2257 = vadd.f32 0.0, %v2256
        %v2258 = vpop.f32.mrb[0].mxu0
        %v2259 = vpop.f32.mrb[0].mxu0
        %v2260 = vadd.f32 0.0, %v2259
        %v2261 = vpop.f32.mrb[0].mxu0
        %2262 = vmatprep.mubr.bf16.mxu0 0
        %2263 = vmatmul.mubr.bf16.gmra.mrb[0].mxu0 %v1968
        %v2264 = vpop.f32.mrb[0].mxu0
        %v2265 = vadd.f32 0.0, %v2264
        %v2266 = vpop.f32.mrb[0].mxu0
        %v2267 = vpop.f32.mrb[0].mxu0
        %v2268 = vadd.f32 0.0, %v2267
        %v2269 = vpop.f32.mrb[0].mxu0
        %2270 = vmatprep.mubr.bf16.mxu0 0
        %2271 = vmatmul.mubr.bf16.gmra.mrb[0].mxu0 %v1971
        %v2272 = vpop.f32.mrb[0].mxu0
        %v2273 = vadd.f32 0.0, %v2272
        %v2274 = vpop.f32.mrb[0].mxu0
        %v2275 = vpop.f32.mrb[0].mxu0
        %v2276 = vadd.f32 0.0, %v2275
        %v2277 = vpop.f32.mrb[0].mxu0
        %2278 = vmatprep.mubr.bf16.mxu0 0
        %2279 = vmatmul.mubr.bf16.gmra.mrb[0].mxu0 %v1974
        %v2280 = vpop.f32.mrb[0].mxu0
        %v2281 = vadd.f32 0.0, %v2280
        %v2282 = vpop.f32.mrb[0].mxu0
        %v2283 = vpop.f32.mrb[0].mxu0
        %v2284 = vadd.f32 0.0, %v2283
        %v2285 = vpop.f32.mrb[0].mxu0
        %2286 = vmatprep.mubr.bf16.mxu0 0
        %2287 = vmatmul.mubr.bf16.gmra.mrb[0].mxu0 %v1977
        %v2288 = vpop.f32.mrb[0].mxu0
        %v2289 = vadd.f32 0.0, %v2288
        %v2290 = vpop.f32.mrb[0].mxu0
        %v2291 = vpop.f32.mrb[0].mxu0
        %v2292 = vadd.f32 0.0, %v2291
        %v2293 = vpop.f32.mrb[0].mxu0
        %2294 = vmatprep.mubr.bf16.mxu0 0
        %2295 = vmatmul.mubr.bf16.gmra.mrb[0].mxu0 %v1980
        %v2296 = vpop.f32.mrb[0].mxu0
        %v2297 = vadd.f32 0.0, %v2296
        %v2298 = vpop.f32.mrb[0].mxu0
        %v2299 = vpop.f32.mrb[0].mxu0
        %v2300 = vadd.f32 0.0, %v2299
        %v2301 = vpop.f32.mrb[0].mxu0
        %2302 = vmatprep.mubr.bf16.mxu0 0
        %2303 = vmatmul.mubr.bf16.gmra.mrb[0].mxu0 %v1983
        %v2304 = vpop.f32.mrb[0].mxu0
        %v2305 = vadd.f32 0.0, %v2304
        %v2306 = vpop.f32.mrb[0].mxu0
        %v2307 = vpop.f32.mrb[0].mxu0
        %v2308 = vadd.f32 0.0, %v2307
        %v2309 = vpop.f32.mrb[0].mxu0
        %2310 = vmatprep.mubr.bf16.mxu0 0
        %2311 = vmatmul.mubr.bf16.gmra.mrb[0].mxu0 %v1986
        %v2312 = vpop.f32.mrb[0].mxu0
        %v2313 = vadd.f32 0.0, %v2312
        %v2314 = vpop.f32.mrb[0].mxu0
        %v2315 = vpop.f32.mrb[0].mxu0
        %v2316 = vadd.f32 0.0, %v2315
        %v2317 = vpop.f32.mrb[0].mxu0
        %2318 = vmatprep.mubr.bf16.mxu0 0
        %2319 = vmatmul.mubr.bf16.gmra.mrb[0].mxu0 %v1989
        %v2320 = vpop.f32.mrb[0].mxu0
        %v2321 = vadd.f32 0.0, %v2320
        %v2322 = vpop.f32.mrb[0].mxu0
        %v2323 = vpop.f32.mrb[0].mxu0
        %v2324 = vadd.f32 0.0, %v2323
        %v2325 = vpop.f32.mrb[0].mxu0
        %2326 = vmatprep.mubr.bf16.mxu0 0
        %2327 = vmatmul.mubr.bf16.gmra.mrb[0].mxu0 %v1992
        %v2328 = vpop.f32.mrb[0].mxu0
        %v2329 = vadd.f32 0.0, %v2328
        %v2330 = vpop.f32.mrb[0].mxu0
        %v2331 = vpop.f32.mrb[0].mxu0
        %v2332 = vadd.f32 0.0, %v2331
        %v2333 = vpop.f32.mrb[0].mxu0
        %2334 = vmatprep.mubr.bf16.mxu0 0
        %2335 = vmatmul.mubr.bf16.gmra.mrb[0].mxu0 %v1995
        %v2336 = vpop.f32.mrb[0].mxu0
        %v2337 = vadd.f32 0.0, %v2336
        %v2338 = vpop.f32.mrb[0].mxu0
        %v2339 = vpop.f32.mrb[0].mxu0
        %v2340 = vadd.f32 0.0, %v2339
        %v2341 = vpop.f32.mrb[0].mxu0
        %2342 = vmatprep.mubr.bf16.mxu0 0
        %2343 = vmatmul.mubr.bf16.gmra.mrb[0].mxu0 %v1998
        %v2344 = vpop.f32.mrb[0].mxu0
        %v2345 = vadd.f32 0.0, %v2344
        %v2346 = vpop.f32.mrb[0].mxu0
        %v2347 = vpop.f32.mrb[0].mxu0
        %v2348 = vadd.f32 0.0, %v2347
        %v2349 = vpop.f32.mrb[0].mxu0
        %2350 = vmatprep.mubr.bf16.mxu0 0
        %2351 = vmatmul.mubr.bf16.gmra.mrb[0].mxu0 %v2001
        %v2352 = vpop.f32.mrb[0].mxu0
        %v2353 = vadd.f32 0.0, %v2352
        %v2354 = vpop.f32.mrb[0].mxu0
        %v2355 = vpop.f32.mrb[0].mxu0
        %v2356 = vadd.f32 0.0, %v2355
        %v2357 = vpop.f32.mrb[0].mxu0
        %2358 = vmatprep.mubr.bf16.mxu0 0
        %2359 = vmatmul.mubr.bf16.gmra.mrb[0].mxu0 %v2004
        %v2360 = vpop.f32.mrb[0].mxu0
        %v2361 = vadd.f32 0.0, %v2360
        %v2362 = vpop.f32.mrb[0].mxu0
        %v2363 = vpop.f32.mrb[0].mxu0
        %v2364 = vadd.f32 0.0, %v2363
        %v2365 = vpop.f32.mrb[0].mxu0
        %2366 = vmatprep.mubr.bf16.mxu0 0
        %2367 = vmatmul.mubr.bf16.gmra.mrb[0].mxu0 %v2007
        %v2368 = vpop.f32.mrb[0].mxu0
        %v2369 = vadd.f32 0.0, %v2368
        %v2370 = vpop.f32.mrb[0].mxu0
        %v2371 = vpop.f32.mrb[0].mxu0
        %v2372 = vadd.f32 0.0, %v2371
        %v2373 = vpop.f32.mrb[0].mxu0
        %2374 = vmatprep.mubr.bf16.mxu0 0
        %2375 = vmatmul.mubr.bf16.gmra.mrb[0].mxu0 %v2220
        %v2376 = vpop.f32.mrb[0].mxu0
        %v2377 = vadd.f32 0.0, %v2376
        %v2378 = vpop.f32.mrb[0].mxu0
        %v2379 = vpop.f32.mrb[0].mxu0
        %v2380 = vadd.f32 0.0, %v2379
        %v2381 = vpop.f32.mrb[0].mxu0
        %2382 = vdwg.mxu0
        %v2383 = vadd.f32 %v2170, %v2257
        %v2384 = vadd.f32 %v2171, %v2260
        %v2385 = vadd.f32 %v2172, %v2265
        %v2386 = vadd.f32 %v2173, %v2268
        %v2387 = vadd.f32 %v2174, %v2273
        %v2388 = vadd.f32 %v2175, %v2276
        %v2389 = vadd.f32 %v2176, %v2281
        %v2390 = vadd.f32 %v2177, %v2284
        %v2391 = vadd.f32 %v2178, %v2289
        %v2392 = vadd.f32 %v2179, %v2292
        %v2393 = vadd.f32 %v2180, %v2297
        %v2394 = vadd.f32 %v2181, %v2300
        %v2395 = vadd.f32 %v2182, %v2305
        %v2396 = vadd.f32 %v2183, %v2308
        %v2397 = vadd.f32 %v2184, %v2313
        %v2398 = vadd.f32 %v2185, %v2316
        %v2399 = vadd.f32 %v2186, %v2321
        %v2400 = vadd.f32 %v2187, %v2324
        %v2401 = vadd.f32 %v2188, %v2329
        %v2402 = vadd.f32 %v2189, %v2332
        %v2403 = vadd.f32 %v2190, %v2337
        %v2404 = vadd.f32 %v2191, %v2340
        %v2405 = vadd.f32 %v2192, %v2345
        %v2406 = vadd.f32 %v2193, %v2348
        %v2407 = vadd.f32 %v2194, %v2353
        %v2408 = vadd.f32 %v2195, %v2356
        %v2409 = vadd.f32 %v2196, %v2361
        %v2410 = vadd.f32 %v2197, %v2364
        %v2411 = vadd.f32 %v2198, %v2369
        %v2412 = vadd.f32 %v2199, %v2372
        %v2413 = vadd.f32 %v2200, %v2377
        %v2414 = vadd.f32 %v2201, %v2380
        %s2415 = scalar_lea.vmem %s1, 128
        %v2416 = vld [vmem:[%s2415] sm:$0xf]
        %v2417 = vld [vmem:[%s2415 + $0x4] sm:$0xf]
        %v2418 = vld [vmem:[%s2415 + $0x8] sm:$0xf]
        %v2419 = vld [vmem:[%s2415 + $0xc] sm:$0xf]
        %v2424 = vunpack.c.l.b16 %v2416
        %v2425 = vunpack.c.l.b16 %v2417
        %v2426 = vunpack.c.l.b16 %v2418
        %v2427 = vunpack.c.l.b16 %v2419
        %v2428 = vpack.c.b16 %v2425, %v2424
        %v2429 = vpack.c.b16 %v2427, %v2426
        %v2433 = vsel %vm317, %v1943, 0
        %2435 = vmatprep.subr.bf16.mxu0 0
        %2436 = vmatpush1.bf16.msra.mxu0 %v2428
        %2437 = vmatprep.subr.bf16.mxu0 0
        %2438 = vmatpush1.bf16.msra.mxu0 %v2429
        %2439 = vmatprep.subr.bf16.mxu0 0
        %2440 = vmatpush1.bf16.msra.mxu0 0
        %2441 = vmatprep.subr.bf16.mxu0 0
        %2442 = vmatpush1.bf16.msra.mxu0 0
        %2443 = vmatprep.subr.bf16.mxu0 0
        %2444 = vmatpush1.bf16.msra.mxu0 0
        %2445 = vmatprep.subr.bf16.mxu0 0
        %2446 = vmatpush1.bf16.msra.mxu0 0
        %2447 = vmatprep.subr.bf16.mxu0 0
        %2448 = vmatpush1.bf16.msra.mxu0 0
        %2449 = vmatprep.subr.bf16.mxu0 0
        %2450 = vmatpush1.bf16.msra.mxu0 0
        %2451 = vmatprep.subr.bf16.mxu0 0
        %2452 = vmatpush1.bf16.msra.mxu0 0
        %2453 = vmatprep.subr.bf16.mxu0 0
        %2454 = vmatpush1.bf16.msra.mxu0 0
        %2455 = vmatprep.subr.bf16.mxu0 0
        %2456 = vmatpush1.bf16.msra.mxu0 0
        %2457 = vmatprep.subr.bf16.mxu0 0
        %2458 = vmatpush1.bf16.msra.mxu0 0
        %2459 = vmatprep.subr.bf16.mxu0 0
        %2460 = vmatpush1.bf16.msra.mxu0 0
        %2461 = vmatprep.subr.bf16.mxu0 0
        %2462 = vmatpush1.bf16.msra.mxu0 0
        %2463 = vmatprep.subr.bf16.mxu0 0
        %2464 = vmatpush1.bf16.msra.mxu0 0
        %2465 = vmatprep.subr.bf16.mxu0 0
        %2466 = vmatpush1.bf16.msra.mxu0 0
        %2467 = vmatprep.mubr.bf16.mxu0 0
        %2468 = vmatmul.mubr.bf16.gmra.mrb[0].mxu0 %v1968
        %v2469 = vpop.f32.mrb[0].mxu0
        %v2470 = vadd.f32 0.0, %v2469
        %v2471 = vpop.f32.mrb[0].mxu0
        %v2472 = vpop.f32.mrb[0].mxu0
        %v2473 = vadd.f32 0.0, %v2472
        %v2474 = vpop.f32.mrb[0].mxu0
        %2475 = vmatprep.mubr.bf16.mxu0 0
        %2476 = vmatmul.mubr.bf16.gmra.mrb[0].mxu0 %v1971
        %v2477 = vpop.f32.mrb[0].mxu0
        %v2478 = vadd.f32 0.0, %v2477
        %v2479 = vpop.f32.mrb[0].mxu0
        %v2480 = vpop.f32.mrb[0].mxu0
        %v2481 = vadd.f32 0.0, %v2480
        %v2482 = vpop.f32.mrb[0].mxu0
        %2483 = vmatprep.mubr.bf16.mxu0 0
        %2484 = vmatmul.mubr.bf16.gmra.mrb[0].mxu0 %v1974
        %v2485 = vpop.f32.mrb[0].mxu0
        %v2486 = vadd.f32 0.0, %v2485
        %v2487 = vpop.f32.mrb[0].mxu0
        %v2488 = vpop.f32.mrb[0].mxu0
        %v2489 = vadd.f32 0.0, %v2488
        %v2490 = vpop.f32.mrb[0].mxu0
        %2491 = vmatprep.mubr.bf16.mxu0 0
        %2492 = vmatmul.mubr.bf16.gmra.mrb[0].mxu0 %v1977
        %v2493 = vpop.f32.mrb[0].mxu0
        %v2494 = vadd.f32 0.0, %v2493
        %v2495 = vpop.f32.mrb[0].mxu0
        %v2496 = vpop.f32.mrb[0].mxu0
        %v2497 = vadd.f32 0.0, %v2496
        %v2498 = vpop.f32.mrb[0].mxu0
        %2499 = vmatprep.mubr.bf16.mxu0 0
        %2500 = vmatmul.mubr.bf16.gmra.mrb[0].mxu0 %v1980
        %v2501 = vpop.f32.mrb[0].mxu0
        %v2502 = vadd.f32 0.0, %v2501
        %v2503 = vpop.f32.mrb[0].mxu0
        %v2504 = vpop.f32.mrb[0].mxu0
        %v2505 = vadd.f32 0.0, %v2504
        %v2506 = vpop.f32.mrb[0].mxu0
        %2507 = vmatprep.mubr.bf16.mxu0 0
        %2508 = vmatmul.mubr.bf16.gmra.mrb[0].mxu0 %v1983
        %v2509 = vpop.f32.mrb[0].mxu0
        %v2510 = vadd.f32 0.0, %v2509
        %v2511 = vpop.f32.mrb[0].mxu0
        %v2512 = vpop.f32.mrb[0].mxu0
        %v2513 = vadd.f32 0.0, %v2512
        %v2514 = vpop.f32.mrb[0].mxu0
        %2515 = vmatprep.mubr.bf16.mxu0 0
        %2516 = vmatmul.mubr.bf16.gmra.mrb[0].mxu0 %v1986
        %v2517 = vpop.f32.mrb[0].mxu0
        %v2518 = vadd.f32 0.0, %v2517
        %v2519 = vpop.f32.mrb[0].mxu0
        %v2520 = vpop.f32.mrb[0].mxu0
        %v2521 = vadd.f32 0.0, %v2520
        %v2522 = vpop.f32.mrb[0].mxu0
        %2523 = vmatprep.mubr.bf16.mxu0 0
        %2524 = vmatmul.mubr.bf16.gmra.mrb[0].mxu0 %v1989
        %v2525 = vpop.f32.mrb[0].mxu0
        %v2526 = vadd.f32 0.0, %v2525
        %v2527 = vpop.f32.mrb[0].mxu0
        %v2528 = vpop.f32.mrb[0].mxu0
        %v2529 = vadd.f32 0.0, %v2528
        %v2530 = vpop.f32.mrb[0].mxu0
        %2531 = vmatprep.mubr.bf16.mxu0 0
        %2532 = vmatmul.mubr.bf16.gmra.mrb[0].mxu0 %v1992
        %v2533 = vpop.f32.mrb[0].mxu0
        %v2534 = vadd.f32 0.0, %v2533
        %v2535 = vpop.f32.mrb[0].mxu0
        %v2536 = vpop.f32.mrb[0].mxu0
        %v2537 = vadd.f32 0.0, %v2536
        %v2538 = vpop.f32.mrb[0].mxu0
        %2539 = vmatprep.mubr.bf16.mxu0 0
        %2540 = vmatmul.mubr.bf16.gmra.mrb[0].mxu0 %v1995
        %v2541 = vpop.f32.mrb[0].mxu0
        %v2542 = vadd.f32 0.0, %v2541
        %v2543 = vpop.f32.mrb[0].mxu0
        %v2544 = vpop.f32.mrb[0].mxu0
        %v2545 = vadd.f32 0.0, %v2544
        %v2546 = vpop.f32.mrb[0].mxu0
        %2547 = vmatprep.mubr.bf16.mxu0 0
        %2548 = vmatmul.mubr.bf16.gmra.mrb[0].mxu0 %v1998
        %v2549 = vpop.f32.mrb[0].mxu0
        %v2550 = vadd.f32 0.0, %v2549
        %v2551 = vpop.f32.mrb[0].mxu0
        %v2552 = vpop.f32.mrb[0].mxu0
        %v2553 = vadd.f32 0.0, %v2552
        %v2554 = vpop.f32.mrb[0].mxu0
        %2555 = vmatprep.mubr.bf16.mxu0 0
        %2556 = vmatmul.mubr.bf16.gmra.mrb[0].mxu0 %v2001
        %v2557 = vpop.f32.mrb[0].mxu0
        %v2558 = vadd.f32 0.0, %v2557
        %v2559 = vpop.f32.mrb[0].mxu0
        %v2560 = vpop.f32.mrb[0].mxu0
        %v2561 = vadd.f32 0.0, %v2560
        %v2562 = vpop.f32.mrb[0].mxu0
        %2563 = vmatprep.mubr.bf16.mxu0 0
        %2564 = vmatmul.mubr.bf16.gmra.mrb[0].mxu0 %v2004
        %v2565 = vpop.f32.mrb[0].mxu0
        %v2566 = vadd.f32 0.0, %v2565
        %v2567 = vpop.f32.mrb[0].mxu0
        %v2568 = vpop.f32.mrb[0].mxu0
        %v2569 = vadd.f32 0.0, %v2568
        %v2570 = vpop.f32.mrb[0].mxu0
        %2571 = vmatprep.mubr.bf16.mxu0 0
        %2572 = vmatmul.mubr.bf16.gmra.mrb[0].mxu0 %v2007
        %v2573 = vpop.f32.mrb[0].mxu0
        %v2574 = vadd.f32 0.0, %v2573
        %v2575 = vpop.f32.mrb[0].mxu0
        %v2576 = vpop.f32.mrb[0].mxu0
        %v2577 = vadd.f32 0.0, %v2576
        %v2578 = vpop.f32.mrb[0].mxu0
        %2579 = vmatprep.mubr.bf16.mxu0 0
        %2580 = vmatmul.mubr.bf16.gmra.mrb[0].mxu0 %v2220
        %v2581 = vpop.f32.mrb[0].mxu0
        %v2582 = vadd.f32 0.0, %v2581
        %v2583 = vpop.f32.mrb[0].mxu0
        %v2584 = vpop.f32.mrb[0].mxu0
        %v2585 = vadd.f32 0.0, %v2584
        %v2586 = vpop.f32.mrb[0].mxu0
        %2587 = vmatprep.mubr.bf16.mxu0 0
        %2588 = vmatmul.mubr.bf16.gmra.mrb[0].mxu0 %v2433
        %v2589 = vpop.f32.mrb[0].mxu0
        %v2590 = vadd.f32 0.0, %v2589
        %v2591 = vpop.f32.mrb[0].mxu0
        %v2592 = vpop.f32.mrb[0].mxu0
        %v2593 = vadd.f32 0.0, %v2592
        %v2594 = vpop.f32.mrb[0].mxu0
        %2595 = vdwg.mxu0
        %v2596 = vadd.f32 %v2383, %v2470
        %v2597 = vadd.f32 %v2384, %v2473
        %v2598 = vadd.f32 %v2385, %v2478
        %v2599 = vadd.f32 %v2386, %v2481
        %v2600 = vadd.f32 %v2387, %v2486
        %v2601 = vadd.f32 %v2388, %v2489
        %v2602 = vadd.f32 %v2389, %v2494
        %v2603 = vadd.f32 %v2390, %v2497
        %v2604 = vadd.f32 %v2391, %v2502
        %v2605 = vadd.f32 %v2392, %v2505
        %v2606 = vadd.f32 %v2393, %v2510
        %v2607 = vadd.f32 %v2394, %v2513
        %v2608 = vadd.f32 %v2395, %v2518
        %v2609 = vadd.f32 %v2396, %v2521
        %v2610 = vadd.f32 %v2397, %v2526
        %v2611 = vadd.f32 %v2398, %v2529
        %v2612 = vadd.f32 %v2399, %v2534
        %v2613 = vadd.f32 %v2400, %v2537
        %v2614 = vadd.f32 %v2401, %v2542
        %v2615 = vadd.f32 %v2402, %v2545
        %v2616 = vadd.f32 %v2403, %v2550
        %v2617 = vadd.f32 %v2404, %v2553
        %v2618 = vadd.f32 %v2405, %v2558
        %v2619 = vadd.f32 %v2406, %v2561
        %v2620 = vadd.f32 %v2407, %v2566
        %v2621 = vadd.f32 %v2408, %v2569
        %v2622 = vadd.f32 %v2409, %v2574
        %v2623 = vadd.f32 %v2410, %v2577
        %v2624 = vadd.f32 %v2411, %v2582
        %v2625 = vadd.f32 %v2412, %v2585
        %v2626 = vadd.f32 %v2413, %v2590
        %v2627 = vadd.f32 %v2414, %v2593
        %v2628 = vsel %vm317, %v2596, 0.0
        %v2629 = vsel %vm317, %v2597, 0.0
        %v2630 = vadd.f32 %v2628, %v2629
        %v2631 = vsel %vm317, %v2598, 0.0
        %v2632 = vadd.f32 %v2630, %v2631
        %v2633 = vsel %vm317, %v2599, 0.0
        %v2634 = vadd.f32 %v2632, %v2633
        %v2635 = vsel %vm317, %v2600, 0.0
        %v2636 = vadd.f32 %v2634, %v2635
        %v2637 = vsel %vm317, %v2601, 0.0
        %v2638 = vadd.f32 %v2636, %v2637
        %v2639 = vsel %vm317, %v2602, 0.0
        %v2640 = vadd.f32 %v2638, %v2639
        %v2641 = vsel %vm317, %v2603, 0.0
        %v2642 = vadd.f32 %v2640, %v2641
        %v2643 = vsel %vm317, %v2604, 0.0
        %v2644 = vadd.f32 %v2642, %v2643
        %v2645 = vsel %vm317, %v2605, 0.0
        %v2646 = vadd.f32 %v2644, %v2645
        %v2647 = vsel %vm317, %v2606, 0.0
        %v2648 = vadd.f32 %v2646, %v2647
        %v2649 = vsel %vm317, %v2607, 0.0
        %v2650 = vadd.f32 %v2648, %v2649
        %v2651 = vsel %vm317, %v2608, 0.0
        %v2652 = vadd.f32 %v2650, %v2651
        %v2653 = vsel %vm317, %v2609, 0.0
        %v2654 = vadd.f32 %v2652, %v2653
        %v2655 = vsel %vm317, %v2610, 0.0
        %v2656 = vadd.f32 %v2654, %v2655
        %v2657 = vsel %vm317, %v2611, 0.0
        %v2658 = vadd.f32 %v2656, %v2657
        %v2659 = vsel %vm317, %v2612, 0.0
        %v2660 = vadd.f32 %v2658, %v2659
        %v2661 = vsel %vm317, %v2613, 0.0
        %v2662 = vadd.f32 %v2660, %v2661
        %v2663 = vsel %vm317, %v2614, 0.0
        %v2664 = vadd.f32 %v2662, %v2663
        %v2665 = vsel %vm317, %v2615, 0.0
        %v2666 = vadd.f32 %v2664, %v2665
        %v2667 = vsel %vm317, %v2616, 0.0
        %v2668 = vadd.f32 %v2666, %v2667
        %v2669 = vsel %vm317, %v2617, 0.0
        %v2670 = vadd.f32 %v2668, %v2669
        %v2671 = vsel %vm317, %v2618, 0.0
        %v2672 = vadd.f32 %v2670, %v2671
        %v2673 = vsel %vm317, %v2619, 0.0
        %v2674 = vadd.f32 %v2672, %v2673
        %v2675 = vsel %vm317, %v2620, 0.0
        %v2676 = vadd.f32 %v2674, %v2675
        %v2677 = vsel %vm317, %v2621, 0.0
        %v2678 = vadd.f32 %v2676, %v2677
        %v2679 = vsel %vm317, %v2622, 0.0
        %v2680 = vadd.f32 %v2678, %v2679
        %v2681 = vsel %vm317, %v2623, 0.0
        %v2682 = vadd.f32 %v2680, %v2681
        %v2683 = vsel %vm317, %v2624, 0.0
        %v2684 = vadd.f32 %v2682, %v2683
        %v2685 = vsel %vm317, %v2625, 0.0
        %v2686 = vadd.f32 %v2684, %v2685
        %v2687 = vsel %vm317, %v2626, 0.0
        %v2688 = vadd.f32 %v2686, %v2687
        %v2689 = vsel %vm317, %v2627, 0.0
        %v2690 = vadd.f32 %v2688, %v2689
        %v2691 = vrot.slane %v2690, 4
        %v2692 = vadd.f32 %v2690, %v2691
        %v2693 = vrot.slane %v2692, 2
        %v2694 = vadd.f32 %v2692, %v2693
        %v2695 = vrot.slane %v2694, 1
        %v2696 = vadd.f32 %v2694, %v2695
        %v2697 = vrcp.pop 256.0
        %v2698 = vmul.f32 %v2696, %v2697
        %v2699 = vsub.f32 %v2596, %v2698
        %v2700 = vsub.f32 %v2597, %v2698
        %v2701 = vsub.f32 %v2598, %v2698
        %v2702 = vsub.f32 %v2599, %v2698
        %v2703 = vsub.f32 %v2600, %v2698
        %v2704 = vsub.f32 %v2601, %v2698
        %v2705 = vsub.f32 %v2602, %v2698
        %v2706 = vsub.f32 %v2603, %v2698
        %v2707 = vsub.f32 %v2604, %v2698
        %v2708 = vsub.f32 %v2605, %v2698
        %v2709 = vsub.f32 %v2606, %v2698
        %v2710 = vsub.f32 %v2607, %v2698
        %v2711 = vsub.f32 %v2608, %v2698
        %v2712 = vsub.f32 %v2609, %v2698
        %v2713 = vsub.f32 %v2610, %v2698
        %v2714 = vsub.f32 %v2611, %v2698
        %v2715 = vsub.f32 %v2612, %v2698
        %v2716 = vsub.f32 %v2613, %v2698
        %v2717 = vsub.f32 %v2614, %v2698
        %v2718 = vsub.f32 %v2615, %v2698
        %v2719 = vsub.f32 %v2616, %v2698
        %v2720 = vsub.f32 %v2617, %v2698
        %v2721 = vsub.f32 %v2618, %v2698
        %v2722 = vsub.f32 %v2619, %v2698
        %v2723 = vsub.f32 %v2620, %v2698
        %v2724 = vsub.f32 %v2621, %v2698
        %v2725 = vsub.f32 %v2622, %v2698
        %v2726 = vsub.f32 %v2623, %v2698
        %v2727 = vsub.f32 %v2624, %v2698
        %v2728 = vsub.f32 %v2625, %v2698
        %v2729 = vsub.f32 %v2626, %v2698
        %v2730 = vsub.f32 %v2627, %v2698
        %v2731 = vmul.f32 %v2699, %v2699
        %v2732 = vmul.f32 %v2700, %v2700
        %v2733 = vmul.f32 %v2701, %v2701
        %v2734 = vmul.f32 %v2702, %v2702
        %v2735 = vmul.f32 %v2703, %v2703
        %v2736 = vmul.f32 %v2704, %v2704
        %v2737 = vmul.f32 %v2705, %v2705
        %v2738 = vmul.f32 %v2706, %v2706
        %v2739 = vmul.f32 %v2707, %v2707
        %v2740 = vmul.f32 %v2708, %v2708
        %v2741 = vmul.f32 %v2709, %v2709
        %v2742 = vmul.f32 %v2710, %v2710
        %v2743 = vmul.f32 %v2711, %v2711
        %v2744 = vmul.f32 %v2712, %v2712
        %v2745 = vmul.f32 %v2713, %v2713
        %v2746 = vmul.f32 %v2714, %v2714
        %v2747 = vmul.f32 %v2715, %v2715
        %v2748 = vmul.f32 %v2716, %v2716
        %v2749 = vmul.f32 %v2717, %v2717
        %v2750 = vmul.f32 %v2718, %v2718
        %v2751 = vmul.f32 %v2719, %v2719
        %v2752 = vmul.f32 %v2720, %v2720
        %v2753 = vmul.f32 %v2721, %v2721
        %v2754 = vmul.f32 %v2722, %v2722
        %v2755 = vmul.f32 %v2723, %v2723
        %v2756 = vmul.f32 %v2724, %v2724
        %v2757 = vmul.f32 %v2725, %v2725
        %v2758 = vmul.f32 %v2726, %v2726
        %v2759 = vmul.f32 %v2727, %v2727
        %v2760 = vmul.f32 %v2728, %v2728
        %v2761 = vmul.f32 %v2729, %v2729
        %v2762 = vmul.f32 %v2730, %v2730
        %v2763 = vsel %vm317, %v2731, 0.0
        %v2764 = vsel %vm317, %v2732, 0.0
        %v2765 = vadd.f32 %v2763, %v2764
        %v2766 = vsel %vm317, %v2733, 0.0
        %v2767 = vadd.f32 %v2765, %v2766
        %v2768 = vsel %vm317, %v2734, 0.0
        %v2769 = vadd.f32 %v2767, %v2768
        %v2770 = vsel %vm317, %v2735, 0.0
        %v2771 = vadd.f32 %v2769, %v2770
        %v2772 = vsel %vm317, %v2736, 0.0
        %v2773 = vadd.f32 %v2771, %v2772
        %v2774 = vsel %vm317, %v2737, 0.0
        %v2775 = vadd.f32 %v2773, %v2774
        %v2776 = vsel %vm317, %v2738, 0.0
        %v2777 = vadd.f32 %v2775, %v2776
        %v2778 = vsel %vm317, %v2739, 0.0
        %v2779 = vadd.f32 %v2777, %v2778
        %v2780 = vsel %vm317, %v2740, 0.0
        %v2781 = vadd.f32 %v2779, %v2780
        %v2782 = vsel %vm317, %v2741, 0.0
        %v2783 = vadd.f32 %v2781, %v2782
        %v2784 = vsel %vm317, %v2742, 0.0
        %v2785 = vadd.f32 %v2783, %v2784
        %v2786 = vsel %vm317, %v2743, 0.0
        %v2787 = vadd.f32 %v2785, %v2786
        %v2788 = vsel %vm317, %v2744, 0.0
        %v2789 = vadd.f32 %v2787, %v2788
        %v2790 = vsel %vm317, %v2745, 0.0
        %v2791 = vadd.f32 %v2789, %v2790
        %v2792 = vsel %vm317, %v2746, 0.0
        %v2793 = vadd.f32 %v2791, %v2792
        %v2794 = vsel %vm317, %v2747, 0.0
        %v2795 = vadd.f32 %v2793, %v2794
        %v2796 = vsel %vm317, %v2748, 0.0
        %v2797 = vadd.f32 %v2795, %v2796
        %v2798 = vsel %vm317, %v2749, 0.0
        %v2799 = vadd.f32 %v2797, %v2798
        %v2800 = vsel %vm317, %v2750, 0.0
        %v2801 = vadd.f32 %v2799, %v2800
        %v2802 = vsel %vm317, %v2751, 0.0
        %v2803 = vadd.f32 %v2801, %v2802
        %v2804 = vsel %vm317, %v2752, 0.0
        %v2805 = vadd.f32 %v2803, %v2804
        %v2806 = vsel %vm317, %v2753, 0.0
        %v2807 = vadd.f32 %v2805, %v2806
        %v2808 = vsel %vm317, %v2754, 0.0
        %v2809 = vadd.f32 %v2807, %v2808
        %v2810 = vsel %vm317, %v2755, 0.0
        %v2811 = vadd.f32 %v2809, %v2810
        %v2812 = vsel %vm317, %v2756, 0.0
        %v2813 = vadd.f32 %v2811, %v2812
        %v2814 = vsel %vm317, %v2757, 0.0
        %v2815 = vadd.f32 %v2813, %v2814
        %v2816 = vsel %vm317, %v2758, 0.0
        %v2817 = vadd.f32 %v2815, %v2816
        %v2818 = vsel %vm317, %v2759, 0.0
        %v2819 = vadd.f32 %v2817, %v2818
        %v2820 = vsel %vm317, %v2760, 0.0
        %v2821 = vadd.f32 %v2819, %v2820
        %v2822 = vsel %vm317, %v2761, 0.0
        %v2823 = vadd.f32 %v2821, %v2822
        %v2824 = vsel %vm317, %v2762, 0.0
        %v2825 = vadd.f32 %v2823, %v2824
        %v2826 = vrot.slane %v2825, 4
        %v2827 = vadd.f32 %v2825, %v2826
        %v2828 = vrot.slane %v2827, 2
        %v2829 = vadd.f32 %v2827, %v2828
        %v2830 = vrot.slane %v2829, 1
        %v2831 = vadd.f32 %v2829, %v2830
        %v2832 = vmul.f32 %v2831, %v2697
        %v2833 = vadd.f32 %v2832, 1e-05
        %v2834 = vrsqrt.pop %v2833
        %v2835 = vmul.f32 %v2699, %v2834
        %v2836 = vmul.f32 %v2700, %v2834
        %v2837 = vmul.f32 %v2701, %v2834
        %v2838 = vmul.f32 %v2702, %v2834
        %v2839 = vmul.f32 %v2703, %v2834
        %v2840 = vmul.f32 %v2704, %v2834
        %v2841 = vmul.f32 %v2705, %v2834
        %v2842 = vmul.f32 %v2706, %v2834
        %v2843 = vmul.f32 %v2707, %v2834
        %v2844 = vmul.f32 %v2708, %v2834
        %v2845 = vmul.f32 %v2709, %v2834
        %v2846 = vmul.f32 %v2710, %v2834
        %v2847 = vmul.f32 %v2711, %v2834
        %v2848 = vmul.f32 %v2712, %v2834
        %v2849 = vmul.f32 %v2713, %v2834
        %v2850 = vmul.f32 %v2714, %v2834
        %v2851 = vmul.f32 %v2715, %v2834
        %v2852 = vmul.f32 %v2716, %v2834
        %v2853 = vmul.f32 %v2717, %v2834
        %v2854 = vmul.f32 %v2718, %v2834
        %v2855 = vmul.f32 %v2719, %v2834
        %v2856 = vmul.f32 %v2720, %v2834
        %v2857 = vmul.f32 %v2721, %v2834
        %v2858 = vmul.f32 %v2722, %v2834
        %v2859 = vmul.f32 %v2723, %v2834
        %v2860 = vmul.f32 %v2724, %v2834
        %v2861 = vmul.f32 %v2725, %v2834
        %v2862 = vmul.f32 %v2726, %v2834
        %v2863 = vmul.f32 %v2727, %v2834
        %v2864 = vmul.f32 %v2728, %v2834
        %v2865 = vmul.f32 %v2729, %v2834
        %v2866 = vmul.f32 %v2730, %v2834
        %v2867 = vmax.f32 %v2835, 0.0
        %v2868 = vmax.f32 %v2836, 0.0
        %v2869 = vmax.f32 %v2837, 0.0
        %v2870 = vmax.f32 %v2838, 0.0
        %v2871 = vmax.f32 %v2839, 0.0
        %v2872 = vmax.f32 %v2840, 0.0
        %v2873 = vmax.f32 %v2841, 0.0
        %v2874 = vmax.f32 %v2842, 0.0
        %v2875 = vmax.f32 %v2843, 0.0
        %v2876 = vmax.f32 %v2844, 0.0
        %v2877 = vmax.f32 %v2845, 0.0
        %v2878 = vmax.f32 %v2846, 0.0
        %v2879 = vmax.f32 %v2847, 0.0
        %v2880 = vmax.f32 %v2848, 0.0
        %v2881 = vmax.f32 %v2849, 0.0
        %v2882 = vmax.f32 %v2850, 0.0
        %v2883 = vmax.f32 %v2851, 0.0
        %v2884 = vmax.f32 %v2852, 0.0
        %v2885 = vmax.f32 %v2853, 0.0
        %v2886 = vmax.f32 %v2854, 0.0
        %v2887 = vmax.f32 %v2855, 0.0
        %v2888 = vmax.f32 %v2856, 0.0
        %v2889 = vmax.f32 %v2857, 0.0
        %v2890 = vmax.f32 %v2858, 0.0
        %v2891 = vmax.f32 %v2859, 0.0
        %v2892 = vmax.f32 %v2860, 0.0
        %v2893 = vmax.f32 %v2861, 0.0
        %v2894 = vmax.f32 %v2862, 0.0
        %v2895 = vmax.f32 %v2863, 0.0
        %v2896 = vmax.f32 %v2864, 0.0
        %v2897 = vmax.f32 %v2865, 0.0
        %v2898 = vmax.f32 %v2866, 0.0
        %2899 = vst.msk [vmem:[#allocation2] sm:$0xff] %vm317, 0.0
        %2900 = vst.msk [vmem:[#allocation2 + $0x8] sm:$0xff] %vm317, 0.0
        %2901 = vst.msk [vmem:[#allocation2 + $0x10] sm:$0xff] %vm317, 0.0
        %vm2902 = vcmask 253952
        %2903 = vst.msk [vmem:[#allocation2 + $0x18] sm:$0x1] %vm2902, 0.0
        %2904 = vst.msk [vmem:[#allocation2 + $0x20] sm:$0xff] %vm317, 0.0
        %2905 = vst.msk [vmem:[#allocation2 + $0x28] sm:$0xff] %vm317, 0.0
        %2906 = vst.msk [vmem:[#allocation2 + $0x30] sm:$0xff] %vm317, 0.0
        %2907 = vst.msk [vmem:[#allocation2 + $0x38] sm:$0x1] %vm2902, 0.0
        %2908 = vst.msk [vmem:[#allocation2 + $0x40] sm:$0xff] %vm317, 0.0
        %2909 = vst.msk [vmem:[#allocation2 + $0x48] sm:$0xff] %vm317, 0.0
        %2910 = vst.msk [vmem:[#allocation2 + $0x50] sm:$0xff] %vm317, 0.0
        %2911 = vst.msk [vmem:[#allocation2 + $0x58] sm:$0x1] %vm2902, 0.0
        %2912 = vst.msk [vmem:[#allocation2 + $0x60] sm:$0xff] %vm317, 0.0
        %2913 = vst.msk [vmem:[#allocation2 + $0x68] sm:$0xff] %vm317, 0.0
        %2914 = vst.msk [vmem:[#allocation2 + $0x70] sm:$0xff] %vm317, 0.0
        %2915 = vst.msk [vmem:[#allocation2 + $0x78] sm:$0x1] %vm2902, 0.0
        %2916 = vst.msk [vmem:[#allocation2 + $0x80] sm:$0xff] %vm317, 0.0
        %2917 = vst.msk [vmem:[#allocation2 + $0x88] sm:$0xff] %vm317, 0.0
        %2918 = vst.msk [vmem:[#allocation2 + $0x90] sm:$0xff] %vm317, 0.0
        %2919 = vst.msk [vmem:[#allocation2 + $0x98] sm:$0x1] %vm2902, 0.0
        %2920 = vst.msk [vmem:[#allocation2 + $0xa0] sm:$0xff] %vm317, 0.0
        %2921 = vst.msk [vmem:[#allocation2 + $0xa8] sm:$0xff] %vm317, 0.0
        %2922 = vst.msk [vmem:[#allocation2 + $0xb0] sm:$0xff] %vm317, 0.0
        %2923 = vst.msk [vmem:[#allocation2 + $0xb8] sm:$0x1] %vm2902, 0.0
        %2924 = vst.msk [vmem:[#allocation2 + $0xc0] sm:$0xff] %vm317, 0.0
        %2925 = vst.msk [vmem:[#allocation2 + $0xc8] sm:$0xff] %vm317, 0.0
        %2926 = vst.msk [vmem:[#allocation2 + $0xd0] sm:$0xff] %vm317, 0.0
        %2927 = vst.msk [vmem:[#allocation2 + $0xd8] sm:$0x1] %vm2902, 0.0
        %2928 = vst.msk [vmem:[#allocation2 + $0xe0] sm:$0xff] %vm317, 0.0
        %2929 = vst.msk [vmem:[#allocation2 + $0xe8] sm:$0xff] %vm317, 0.0
        %2930 = vst.msk [vmem:[#allocation2 + $0xf0] sm:$0xff] %vm317, 0.0
        %2931 = vst.msk [vmem:[#allocation2 + $0xf8] sm:$0x1] %vm2902, 0.0
        %2932 = vst.msk [vmem:[#allocation2 + $0x100] sm:$0xff] %vm317, 0.0
        %2933 = vst.msk [vmem:[#allocation2 + $0x108] sm:$0xff] %vm317, 0.0
        %2934 = vst.msk [vmem:[#allocation2 + $0x110] sm:$0xff] %vm317, 0.0
        %2935 = vst.msk [vmem:[#allocation2 + $0x118] sm:$0x1] %vm2902, 0.0
        %2936 = vst.msk [vmem:[#allocation2 + $0x120] sm:$0xff] %vm317, 0.0
        %2937 = vst.msk [vmem:[#allocation2 + $0x128] sm:$0xff] %vm317, 0.0
        %2938 = vst.msk [vmem:[#allocation2 + $0x130] sm:$0xff] %vm317, 0.0
        %2939 = vst.msk [vmem:[#allocation2 + $0x138] sm:$0x1] %vm2902, 0.0
        %2940 = vst.msk [vmem:[#allocation2 + $0x140] sm:$0xff] %vm317, 0.0
        %2941 = vst.msk [vmem:[#allocation2 + $0x148] sm:$0xff] %vm317, 0.0
        %2942 = vst.msk [vmem:[#allocation2 + $0x150] sm:$0xff] %vm317, 0.0
        %2943 = vst.msk [vmem:[#allocation2 + $0x158] sm:$0x1] %vm2902, 0.0
        %2944 = vst.msk [vmem:[#allocation2 + $0x160] sm:$0xff] %vm317, 0.0
        %2945 = vst.msk [vmem:[#allocation2 + $0x168] sm:$0xff] %vm317, 0.0
        %2946 = vst.msk [vmem:[#allocation2 + $0x170] sm:$0xff] %vm317, 0.0
        %2947 = vst.msk [vmem:[#allocation2 + $0x178] sm:$0x1] %vm2902, 0.0
        %2948 = vst.msk [vmem:[#allocation2 + $0x180] sm:$0xff] %vm317, 0.0
        %2949 = vst.msk [vmem:[#allocation2 + $0x188] sm:$0xff] %vm317, 0.0
        %2950 = vst.msk [vmem:[#allocation2 + $0x190] sm:$0xff] %vm317, 0.0
        %2951 = vst.msk [vmem:[#allocation2 + $0x198] sm:$0x1] %vm2902, 0.0
        %2952 = vst.msk [vmem:[#allocation2 + $0x1a0] sm:$0xff] %vm317, 0.0
        %2953 = vst.msk [vmem:[#allocation2 + $0x1a8] sm:$0xff] %vm317, 0.0
        %2954 = vst.msk [vmem:[#allocation2 + $0x1b0] sm:$0xff] %vm317, 0.0
        %2955 = vst.msk [vmem:[#allocation2 + $0x1b8] sm:$0x1] %vm2902, 0.0
        %2956 = vst.msk [vmem:[#allocation2 + $0x1c0] sm:$0xff] %vm317, 0.0
        %2957 = vst.msk [vmem:[#allocation2 + $0x1c8] sm:$0xff] %vm317, 0.0
        %2958 = vst.msk [vmem:[#allocation2 + $0x1d0] sm:$0xff] %vm317, 0.0
        %2959 = vst.msk [vmem:[#allocation2 + $0x1d8] sm:$0x1] %vm2902, 0.0
        %2960 = vst.msk [vmem:[#allocation2 + $0x1e0] sm:$0xff] %vm317, 0.0
        %2961 = vst.msk [vmem:[#allocation2 + $0x1e8] sm:$0xff] %vm317, 0.0
        %2962 = vst.msk [vmem:[#allocation2 + $0x1f0] sm:$0xff] %vm317, 0.0
        %2963 = vst.msk [vmem:[#allocation2 + $0x1f8] sm:$0x1] %vm2902, 0.0
        %2964 = vst.msk [vmem:[#allocation2 + $0x200] sm:$0xff] %vm317, 0.0
        %2965 = vst.msk [vmem:[#allocation2 + $0x208] sm:$0xff] %vm317, 0.0
        %2966 = vst.msk [vmem:[#allocation2 + $0x210] sm:$0xff] %vm317, 0.0
        %2967 = vst.msk [vmem:[#allocation2 + $0x218] sm:$0x1] %vm2902, 0.0
        %2968 = vst.msk [vmem:[#allocation2 + $0x220] sm:$0xff] %vm317, 0.0
        %2969 = vst.msk [vmem:[#allocation2 + $0x228] sm:$0xff] %vm317, 0.0
        %2970 = vst.msk [vmem:[#allocation2 + $0x230] sm:$0xff] %vm317, 0.0
        %2971 = vst.msk [vmem:[#allocation2 + $0x238] sm:$0x1] %vm2902, 0.0
        %s2972 = scalar_lea.vmem [#allocation2], 32
        %2973 = vst.msk [vmem:[%s2972 + $0x8] sm:$0xff] %vm317, %v2867
        %2974 = vst.msk [vmem:[%s2972 + $0x10] sm:$0xff] %vm317, %v2868
        %2975 = vst.msk [vmem:[%s2972 + $0x28] sm:$0xff] %vm317, %v2869
        %2976 = vst.msk [vmem:[%s2972 + $0x30] sm:$0xff] %vm317, %v2870
        %2977 = vst.msk [vmem:[%s2972 + $0x48] sm:$0xff] %vm317, %v2871
        %2978 = vst.msk [vmem:[%s2972 + $0x50] sm:$0xff] %vm317, %v2872
        %2979 = vst.msk [vmem:[%s2972 + $0x68] sm:$0xff] %vm317, %v2873
        %2980 = vst.msk [vmem:[%s2972 + $0x70] sm:$0xff] %vm317, %v2874
        %2981 = vst.msk [vmem:[%s2972 + $0x88] sm:$0xff] %vm317, %v2875
        %2982 = vst.msk [vmem:[%s2972 + $0x90] sm:$0xff] %vm317, %v2876
        %2983 = vst.msk [vmem:[%s2972 + $0xa8] sm:$0xff] %vm317, %v2877
        %2984 = vst.msk [vmem:[%s2972 + $0xb0] sm:$0xff] %vm317, %v2878
        %2985 = vst.msk [vmem:[%s2972 + $0xc8] sm:$0xff] %vm317, %v2879
        %2986 = vst.msk [vmem:[%s2972 + $0xd0] sm:$0xff] %vm317, %v2880
        %2987 = vst.msk [vmem:[%s2972 + $0xe8] sm:$0xff] %vm317, %v2881
        %2988 = vst.msk [vmem:[%s2972 + $0xf0] sm:$0xff] %vm317, %v2882
        %2989 = vst.msk [vmem:[%s2972 + $0x108] sm:$0xff] %vm317, %v2883
        %2990 = vst.msk [vmem:[%s2972 + $0x110] sm:$0xff] %vm317, %v2884
        %2991 = vst.msk [vmem:[%s2972 + $0x128] sm:$0xff] %vm317, %v2885
        %2992 = vst.msk [vmem:[%s2972 + $0x130] sm:$0xff] %vm317, %v2886
        %2993 = vst.msk [vmem:[%s2972 + $0x148] sm:$0xff] %vm317, %v2887
        %2994 = vst.msk [vmem:[%s2972 + $0x150] sm:$0xff] %vm317, %v2888
        %2995 = vst.msk [vmem:[%s2972 + $0x168] sm:$0xff] %vm317, %v2889
        %2996 = vst.msk [vmem:[%s2972 + $0x170] sm:$0xff] %vm317, %v2890
        %2997 = vst.msk [vmem:[%s2972 + $0x188] sm:$0xff] %vm317, %v2891
        %2998 = vst.msk [vmem:[%s2972 + $0x190] sm:$0xff] %vm317, %v2892
        %2999 = vst.msk [vmem:[%s2972 + $0x1a8] sm:$0xff] %vm317, %v2893
        %3000 = vst.msk [vmem:[%s2972 + $0x1b0] sm:$0xff] %vm317, %v2894
        %3001 = vst.msk [vmem:[%s2972 + $0x1c8] sm:$0xff] %vm317, %v2895
        %3002 = vst.msk [vmem:[%s2972 + $0x1d0] sm:$0xff] %vm317, %v2896
        %3003 = vst.msk [vmem:[%s2972 + $0x1e8] sm:$0xff] %vm317, %v2897
        %3004 = vst.msk [vmem:[%s2972 + $0x1f0] sm:$0xff] %vm317, %v2898
        %v3005 = vld [vmem:[#allocation2] sm:$0xff]
        %v3006 = vld [vmem:[#allocation2 + $0x8] sm:$0xff]
        %v3007 = vld [vmem:[#allocation2 + $0x10] sm:$0xff]
        %v3008 = vld [vmem:[#allocation2 + $0x18] sm:$0x1]
        %v3009 = vld [vmem:[#allocation2 + $0x20] sm:$0xff]
        %v3010 = vld [vmem:[#allocation2 + $0x28] sm:$0xff]
        %v3011 = vld [vmem:[#allocation2 + $0x30] sm:$0xff]
        %v3012 = vld [vmem:[#allocation2 + $0x38] sm:$0x1]
        %v3013 = vld [vmem:[#allocation2 + $0x40] sm:$0xff]
        %v3014 = vld [vmem:[#allocation2 + $0x48] sm:$0xff]
        %v3015 = vld [vmem:[#allocation2 + $0x50] sm:$0xff]
        %v3016 = vld [vmem:[#allocation2 + $0x58] sm:$0x1]
        %v3017 = vld [vmem:[#allocation2 + $0x60] sm:$0xff]
        %v3018 = vld [vmem:[#allocation2 + $0x68] sm:$0xff]
        %v3019 = vld [vmem:[#allocation2 + $0x70] sm:$0xff]
        %v3020 = vld [vmem:[#allocation2 + $0x78] sm:$0x1]
        %v3021 = vld [vmem:[#allocation2 + $0x80] sm:$0xff]
        %v3022 = vld [vmem:[#allocation2 + $0x88] sm:$0xff]
        %v3023 = vld [vmem:[#allocation2 + $0x90] sm:$0xff]
        %v3024 = vld [vmem:[#allocation2 + $0x98] sm:$0x1]
        %v3025 = vld [vmem:[#allocation2 + $0xa0] sm:$0xff]
        %v3026 = vld [vmem:[#allocation2 + $0xa8] sm:$0xff]
        %v3027 = vld [vmem:[#allocation2 + $0xb0] sm:$0xff]
        %v3028 = vld [vmem:[#allocation2 + $0xb8] sm:$0x1]
        %v3029 = vld [vmem:[#allocation2 + $0xc0] sm:$0xff]
        %v3030 = vld [vmem:[#allocation2 + $0xc8] sm:$0xff]
        %v3031 = vld [vmem:[#allocation2 + $0xd0] sm:$0xff]
        %v3032 = vld [vmem:[#allocation2 + $0xd8] sm:$0x1]
        %v3033 = vld [vmem:[#allocation2 + $0xe0] sm:$0xff]
        %v3034 = vld [vmem:[#allocation2 + $0xe8] sm:$0xff]
        %v3035 = vld [vmem:[#allocation2 + $0xf0] sm:$0xff]
        %v3036 = vld [vmem:[#allocation2 + $0xf8] sm:$0x1]
        %v3037 = vld [vmem:[#allocation2 + $0x100] sm:$0xff]
        %v3038 = vld [vmem:[#allocation2 + $0x108] sm:$0xff]
        %v3039 = vld [vmem:[#allocation2 + $0x110] sm:$0xff]
        %v3040 = vld [vmem:[#allocation2 + $0x118] sm:$0x1]
        %v3041 = vld [vmem:[#allocation2 + $0x120] sm:$0xff]
        %v3042 = vld [vmem:[#allocation2 + $0x128] sm:$0xff]
        %v3043 = vld [vmem:[#allocation2 + $0x130] sm:$0xff]
        %v3044 = vld [vmem:[#allocation2 + $0x138] sm:$0x1]
        %v3045 = vld [vmem:[#allocation2 + $0x140] sm:$0xff]
        %v3046 = vld [vmem:[#allocation2 + $0x148] sm:$0xff]
        %v3047 = vld [vmem:[#allocation2 + $0x150] sm:$0xff]
        %v3048 = vld [vmem:[#allocation2 + $0x158] sm:$0x1]
        %v3049 = vld [vmem:[#allocation2 + $0x160] sm:$0xff]
        %v3050 = vld [vmem:[#allocation2 + $0x168] sm:$0xff]
        %v3051 = vld [vmem:[#allocation2 + $0x170] sm:$0xff]
        %v3052 = vld [vmem:[#allocation2 + $0x178] sm:$0x1]
        %v3053 = vld [vmem:[#allocation2 + $0x180] sm:$0xff]
        %v3054 = vld [vmem:[#allocation2 + $0x188] sm:$0xff]
        %v3055 = vld [vmem:[#allocation2 + $0x190] sm:$0xff]
        %v3056 = vld [vmem:[#allocation2 + $0x198] sm:$0x1]
        %v3057 = vld [vmem:[#allocation2 + $0x1a0] sm:$0xff]
        %v3058 = vld [vmem:[#allocation2 + $0x1a8] sm:$0xff]
        %v3059 = vld [vmem:[#allocation2 + $0x1b0] sm:$0xff]
        %v3060 = vld [vmem:[#allocation2 + $0x1b8] sm:$0x1]
        %v3061 = vld [vmem:[#allocation2 + $0x1c0] sm:$0xff]
        %v3062 = vld [vmem:[#allocation2 + $0x1c8] sm:$0xff]
        %v3063 = vld [vmem:[#allocation2 + $0x1d0] sm:$0xff]
        %v3064 = vld [vmem:[#allocation2 + $0x1d8] sm:$0x1]
        %v3065 = vld [vmem:[#allocation2 + $0x1e0] sm:$0xff]
        %v3066 = vld [vmem:[#allocation2 + $0x1e8] sm:$0xff]
        %v3067 = vld [vmem:[#allocation2 + $0x1f0] sm:$0xff]
        %v3068 = vld [vmem:[#allocation2 + $0x1f8] sm:$0x1]
        %v3069 = vld [vmem:[#allocation2 + $0x200] sm:$0xff]
        %v3070 = vld [vmem:[#allocation2 + $0x208] sm:$0xff]
        %v3071 = vld [vmem:[#allocation2 + $0x210] sm:$0xff]
        %v3072 = vld [vmem:[#allocation2 + $0x218] sm:$0x1]
        %v3073 = vld [vmem:[#allocation2 + $0x220] sm:$0xff]
        %v3074 = vld [vmem:[#allocation2 + $0x228] sm:$0xff]
        %v3075 = vld [vmem:[#allocation2 + $0x230] sm:$0xff]
        %v3076 = vld [vmem:[#allocation2 + $0x238] sm:$0x1]
        %vm3131 = vcmask 1040384
        %v3132 = vrot.slane %v3005, 7
        %v3133 = vrot.slane %v3006, 7
        %v3134 = vsel %vm3131, %v3132, %v3133
        %v3135 = vrot.slane %v3007, 7
        %v3136 = vsel %vm3131, %v3133, %v3135
        %v3137 = vrot.slane %v3009, 7
        %v3138 = vrot.slane %v3010, 7
        %v3139 = vsel %vm3131, %v3137, %v3138
        %v3140 = vrot.slane %v3011, 7
        %v3141 = vsel %vm3131, %v3138, %v3140
        %v3142 = vrot.slane %v3013, 7
        %v3143 = vrot.slane %v3014, 7
        %v3144 = vsel %vm3131, %v3142, %v3143
        %v3145 = vrot.slane %v3015, 7
        %v3146 = vsel %vm3131, %v3143, %v3145
        %v3147 = vrot.slane %v3017, 7
        %v3148 = vrot.slane %v3018, 7
        %v3149 = vsel %vm3131, %v3147, %v3148
        %v3150 = vrot.slane %v3019, 7
        %v3151 = vsel %vm3131, %v3148, %v3150
        %v3152 = vrot.slane %v3021, 7
        %v3153 = vrot.slane %v3022, 7
        %v3154 = vsel %vm3131, %v3152, %v3153
        %v3155 = vrot.slane %v3023, 7
        %v3156 = vsel %vm3131, %v3153, %v3155
        %v3157 = vrot.slane %v3025, 7
        %v3158 = vrot.slane %v3026, 7
        %v3159 = vsel %vm3131, %v3157, %v3158
        %v3160 = vrot.slane %v3027, 7
        %v3161 = vsel %vm3131, %v3158, %v3160
        %v3162 = vrot.slane %v3029, 7
        %v3163 = vrot.slane %v3030, 7
        %v3164 = vsel %vm3131, %v3162, %v3163
        %v3165 = vrot.slane %v3031, 7
        %v3166 = vsel %vm3131, %v3163, %v3165
        %v3167 = vrot.slane %v3033, 7
        %v3168 = vrot.slane %v3034, 7
        %v3169 = vsel %vm3131, %v3167, %v3168
        %v3170 = vrot.slane %v3035, 7
        %v3171 = vsel %vm3131, %v3168, %v3170
        %v3172 = vrot.slane %v3037, 7
        %v3173 = vrot.slane %v3038, 7
        %v3174 = vsel %vm3131, %v3172, %v3173
        %v3175 = vrot.slane %v3039, 7
        %v3176 = vsel %vm3131, %v3173, %v3175
        %v3177 = vrot.slane %v3041, 7
        %v3178 = vrot.slane %v3042, 7
        %v3179 = vsel %vm3131, %v3177, %v3178
        %v3180 = vrot.slane %v3043, 7
        %v3181 = vsel %vm3131, %v3178, %v3180
        %v3182 = vrot.slane %v3045, 7
        %v3183 = vrot.slane %v3046, 7
        %v3184 = vsel %vm3131, %v3182, %v3183
        %v3185 = vrot.slane %v3047, 7
        %v3186 = vsel %vm3131, %v3183, %v3185
        %v3187 = vrot.slane %v3049, 7
        %v3188 = vrot.slane %v3050, 7
        %v3189 = vsel %vm3131, %v3187, %v3188
        %v3190 = vrot.slane %v3051, 7
        %v3191 = vsel %vm3131, %v3188, %v3190
        %v3192 = vrot.slane %v3053, 7
        %v3193 = vrot.slane %v3054, 7
        %v3194 = vsel %vm3131, %v3192, %v3193
        %v3195 = vrot.slane %v3055, 7
        %v3196 = vsel %vm3131, %v3193, %v3195
        %v3197 = vrot.slane %v3057, 7
        %v3198 = vrot.slane %v3058, 7
        %v3199 = vsel %vm3131, %v3197, %v3198
        %v3200 = vrot.slane %v3059, 7
        %v3201 = vsel %vm3131, %v3198, %v3200
        %v3202 = vrot.slane %v3061, 7
        %v3203 = vrot.slane %v3062, 7
        %v3204 = vsel %vm3131, %v3202, %v3203
        %v3205 = vrot.slane %v3063, 7
        %v3206 = vsel %vm3131, %v3203, %v3205
        %v3207 = vrot.slane %v3065, 7
        %v3208 = vrot.slane %v3066, 7
        %v3209 = vsel %vm3131, %v3207, %v3208
        %v3210 = vrot.slane %v3067, 7
        %v3211 = vsel %vm3131, %v3208, %v3210
        %v3212 = vrot.slane %v3069, 7
        %v3213 = vrot.slane %v3070, 7
        %v3214 = vsel %vm3131, %v3212, %v3213
        %v3215 = vrot.slane %v3071, 7
        %v3216 = vsel %vm3131, %v3213, %v3215
        %v3217 = vrot.slane %v3073, 7
        %v3218 = vrot.slane %v3074, 7
        %v3219 = vsel %vm3131, %v3217, %v3218
        %v3220 = vrot.slane %v3075, 7
        %v3221 = vsel %vm3131, %v3218, %v3220
        %v3258 = vpack.c.bf16 %v3136, %v3134
        %v3259 = vpack.c.bf16 %v3141, %v3139
        %v3260 = vpack.c.bf16 %v3146, %v3144
        %v3261 = vpack.c.bf16 %v3151, %v3149
        %v3262 = vpack.c.bf16 %v3156, %v3154
        %v3263 = vpack.c.bf16 %v3161, %v3159
        %v3264 = vpack.c.bf16 %v3166, %v3164
        %v3265 = vpack.c.bf16 %v3171, %v3169
        %v3266 = vpack.c.bf16 %v3176, %v3174
        %v3267 = vpack.c.bf16 %v3181, %v3179
        %v3268 = vpack.c.bf16 %v3186, %v3184
        %v3269 = vpack.c.bf16 %v3191, %v3189
        %v3270 = vpack.c.bf16 %v3196, %v3194
        %v3271 = vpack.c.bf16 %v3201, %v3199
        %v3272 = vpack.c.bf16 %v3206, %v3204
        %v3273 = vpack.c.bf16 %v3211, %v3209
        %v3274 = vpack.c.bf16 %v3216, %v3214
        %v3275 = vpack.c.bf16 %v3221, %v3219
        %v3276 = vld [vmem:[%s2] sm:$0xf]
        %v3277 = vld [vmem:[%s2 + $0x4] sm:$0xf]
        %v3278 = vld [vmem:[%s2 + $0x8] sm:$0xf]
        %v3279 = vld [vmem:[%s2 + $0xc] sm:$0xf]
        %s3280 = scalar_lea.vmem %s2, 48
        %v3281 = vld [vmem:[%s3280] sm:$0xf]
        %v3282 = vld [vmem:[%s3280 + $0x4] sm:$0xf]
        %v3283 = vld [vmem:[%s3280 + $0x8] sm:$0xf]
        %v3284 = vld [vmem:[%s3280 + $0xc] sm:$0xf]
        %v3289 = vunpack.c.l.b16 %v3281
        %v3290 = vunpack.c.l.b16 %v3282
        %v3291 = vunpack.c.l.b16 %v3283
        %v3292 = vunpack.c.l.b16 %v3284
        %v3293 = vpack.c.b16 %v3290, %v3289
        %v3294 = vpack.c.b16 %v3292, %v3291
        %v3298 = vsel %vm317, %v3259, 0
        %v3301 = vsel %vm317, %v3260, 0
        %v3304 = vsel %vm317, %v3261, 0
        %v3307 = vsel %vm317, %v3262, 0
        %v3310 = vsel %vm317, %v3263, 0
        %v3313 = vsel %vm317, %v3264, 0
        %v3316 = vsel %vm317, %v3265, 0
        %v3319 = vsel %vm317, %v3266, 0
        %v3322 = vsel %vm317, %v3267, 0
        %v3325 = vsel %vm317, %v3268, 0
        %v3328 = vsel %vm317, %v3269, 0
        %v3331 = vsel %vm317, %v3270, 0
        %v3334 = vsel %vm317, %v3271, 0
        %v3337 = vsel %vm317, %v3272, 0
        %v3340 = vsel %vm317, %v3273, 0
        %v3343 = vsel %vm317, %v3274, 0
        %3345 = vmatprep.subr.bf16.mxu0 0
        %3346 = vmatpush1.bf16.msra.mxu0 %v3293
        %3347 = vmatprep.subr.bf16.mxu0 0
        %3348 = vmatpush1.bf16.msra.mxu0 %v3294
        %3349 = vmatprep.subr.bf16.mxu0 0
        %3350 = vmatpush1.bf16.msra.mxu0 0
        %3351 = vmatprep.subr.bf16.mxu0 0
        %3352 = vmatpush1.bf16.msra.mxu0 0
        %3353 = vmatprep.subr.bf16.mxu0 0
        %3354 = vmatpush1.bf16.msra.mxu0 0
        %3355 = vmatprep.subr.bf16.mxu0 0
        %3356 = vmatpush1.bf16.msra.mxu0 0
        %3357 = vmatprep.subr.bf16.mxu0 0
        %3358 = vmatpush1.bf16.msra.mxu0 0
        %3359 = vmatprep.subr.bf16.mxu0 0
        %3360 = vmatpush1.bf16.msra.mxu0 0
        %3361 = vmatprep.subr.bf16.mxu0 0
        %3362 = vmatpush1.bf16.msra.mxu0 0
        %3363 = vmatprep.subr.bf16.mxu0 0
        %3364 = vmatpush1.bf16.msra.mxu0 0
        %3365 = vmatprep.subr.bf16.mxu0 0
        %3366 = vmatpush1.bf16.msra.mxu0 0
        %3367 = vmatprep.subr.bf16.mxu0 0
        %3368 = vmatpush1.bf16.msra.mxu0 0
        %3369 = vmatprep.subr.bf16.mxu0 0
        %3370 = vmatpush1.bf16.msra.mxu0 0
        %3371 = vmatprep.subr.bf16.mxu0 0
        %3372 = vmatpush1.bf16.msra.mxu0 0
        %3373 = vmatprep.subr.bf16.mxu0 0
        %3374 = vmatpush1.bf16.msra.mxu0 0
        %3375 = vmatprep.subr.bf16.mxu0 0
        %3376 = vmatpush1.bf16.msra.mxu0 0
        %3377 = vmatprep.mubr.bf16.mxu0 0
        %3378 = vmatmul.mubr.bf16.gmra.mrb[0].mxu0 %v3298
        %v3379 = vpop.f32.mrb[0].mxu0
        %v3380 = vadd.f32 0.0, %v3379
        %v3381 = vpop.f32.mrb[0].mxu0
        %v3382 = vpop.f32.mrb[0].mxu0
        %v3383 = vadd.f32 0.0, %v3382
        %v3384 = vpop.f32.mrb[0].mxu0
        %3385 = vmatprep.mubr.bf16.mxu0 0
        %3386 = vmatmul.mubr.bf16.gmra.mrb[0].mxu0 %v3301
        %v3387 = vpop.f32.mrb[0].mxu0
        %v3388 = vadd.f32 0.0, %v3387
        %v3389 = vpop.f32.mrb[0].mxu0
        %v3390 = vpop.f32.mrb[0].mxu0
        %v3391 = vadd.f32 0.0, %v3390
        %v3392 = vpop.f32.mrb[0].mxu0
        %3393 = vmatprep.mubr.bf16.mxu0 0
        %3394 = vmatmul.mubr.bf16.gmra.mrb[0].mxu0 %v3304
        %v3395 = vpop.f32.mrb[0].mxu0
        %v3396 = vadd.f32 0.0, %v3395
        %v3397 = vpop.f32.mrb[0].mxu0
        %v3398 = vpop.f32.mrb[0].mxu0
        %v3399 = vadd.f32 0.0, %v3398
        %v3400 = vpop.f32.mrb[0].mxu0
        %3401 = vmatprep.mubr.bf16.mxu0 0
        %3402 = vmatmul.mubr.bf16.gmra.mrb[0].mxu0 %v3307
        %v3403 = vpop.f32.mrb[0].mxu0
        %v3404 = vadd.f32 0.0, %v3403
        %v3405 = vpop.f32.mrb[0].mxu0
        %v3406 = vpop.f32.mrb[0].mxu0
        %v3407 = vadd.f32 0.0, %v3406
        %v3408 = vpop.f32.mrb[0].mxu0
        %3409 = vmatprep.mubr.bf16.mxu0 0
        %3410 = vmatmul.mubr.bf16.gmra.mrb[0].mxu0 %v3310
        %v3411 = vpop.f32.mrb[0].mxu0
        %v3412 = vadd.f32 0.0, %v3411
        %v3413 = vpop.f32.mrb[0].mxu0
        %v3414 = vpop.f32.mrb[0].mxu0
        %v3415 = vadd.f32 0.0, %v3414
        %v3416 = vpop.f32.mrb[0].mxu0
        %3417 = vmatprep.mubr.bf16.mxu0 0
        %3418 = vmatmul.mubr.bf16.gmra.mrb[0].mxu0 %v3313
        %v3419 = vpop.f32.mrb[0].mxu0
        %v3420 = vadd.f32 0.0, %v3419
        %v3421 = vpop.f32.mrb[0].mxu0
        %v3422 = vpop.f32.mrb[0].mxu0
        %v3423 = vadd.f32 0.0, %v3422
        %v3424 = vpop.f32.mrb[0].mxu0
        %3425 = vmatprep.mubr.bf16.mxu0 0
        %3426 = vmatmul.mubr.bf16.gmra.mrb[0].mxu0 %v3316
        %v3427 = vpop.f32.mrb[0].mxu0
        %v3428 = vadd.f32 0.0, %v3427
        %v3429 = vpop.f32.mrb[0].mxu0
        %v3430 = vpop.f32.mrb[0].mxu0
        %v3431 = vadd.f32 0.0, %v3430
        %v3432 = vpop.f32.mrb[0].mxu0
        %3433 = vmatprep.mubr.bf16.mxu0 0
        %3434 = vmatmul.mubr.bf16.gmra.mrb[0].mxu0 %v3319
        %v3435 = vpop.f32.mrb[0].mxu0
        %v3436 = vadd.f32 0.0, %v3435
        %v3437 = vpop.f32.mrb[0].mxu0
        %v3438 = vpop.f32.mrb[0].mxu0
        %v3439 = vadd.f32 0.0, %v3438
        %v3440 = vpop.f32.mrb[0].mxu0
        %3441 = vmatprep.mubr.bf16.mxu0 0
        %3442 = vmatmul.mubr.bf16.gmra.mrb[0].mxu0 %v3322
        %v3443 = vpop.f32.mrb[0].mxu0
        %v3444 = vadd.f32 0.0, %v3443
        %v3445 = vpop.f32.mrb[0].mxu0
        %v3446 = vpop.f32.mrb[0].mxu0
        %v3447 = vadd.f32 0.0, %v3446
        %v3448 = vpop.f32.mrb[0].mxu0
        %3449 = vmatprep.mubr.bf16.mxu0 0
        %3450 = vmatmul.mubr.bf16.gmra.mrb[0].mxu0 %v3325
        %v3451 = vpop.f32.mrb[0].mxu0
        %v3452 = vadd.f32 0.0, %v3451
        %v3453 = vpop.f32.mrb[0].mxu0
        %v3454 = vpop.f32.mrb[0].mxu0
        %v3455 = vadd.f32 0.0, %v3454
        %v3456 = vpop.f32.mrb[0].mxu0
        %3457 = vmatprep.mubr.bf16.mxu0 0
        %3458 = vmatmul.mubr.bf16.gmra.mrb[0].mxu0 %v3328
        %v3459 = vpop.f32.mrb[0].mxu0
        %v3460 = vadd.f32 0.0, %v3459
        %v3461 = vpop.f32.mrb[0].mxu0
        %v3462 = vpop.f32.mrb[0].mxu0
        %v3463 = vadd.f32 0.0, %v3462
        %v3464 = vpop.f32.mrb[0].mxu0
        %3465 = vmatprep.mubr.bf16.mxu0 0
        %3466 = vmatmul.mubr.bf16.gmra.mrb[0].mxu0 %v3331
        %v3467 = vpop.f32.mrb[0].mxu0
        %v3468 = vadd.f32 0.0, %v3467
        %v3469 = vpop.f32.mrb[0].mxu0
        %v3470 = vpop.f32.mrb[0].mxu0
        %v3471 = vadd.f32 0.0, %v3470
        %v3472 = vpop.f32.mrb[0].mxu0
        %3473 = vmatprep.mubr.bf16.mxu0 0
        %3474 = vmatmul.mubr.bf16.gmra.mrb[0].mxu0 %v3334
        %v3475 = vpop.f32.mrb[0].mxu0
        %v3476 = vadd.f32 0.0, %v3475
        %v3477 = vpop.f32.mrb[0].mxu0
        %v3478 = vpop.f32.mrb[0].mxu0
        %v3479 = vadd.f32 0.0, %v3478
        %v3480 = vpop.f32.mrb[0].mxu0
        %3481 = vmatprep.mubr.bf16.mxu0 0
        %3482 = vmatmul.mubr.bf16.gmra.mrb[0].mxu0 %v3337
        %v3483 = vpop.f32.mrb[0].mxu0
        %v3484 = vadd.f32 0.0, %v3483
        %v3485 = vpop.f32.mrb[0].mxu0
        %v3486 = vpop.f32.mrb[0].mxu0
        %v3487 = vadd.f32 0.0, %v3486
        %v3488 = vpop.f32.mrb[0].mxu0
        %3489 = vmatprep.mubr.bf16.mxu0 0
        %3490 = vmatmul.mubr.bf16.gmra.mrb[0].mxu0 %v3340
        %v3491 = vpop.f32.mrb[0].mxu0
        %v3492 = vadd.f32 0.0, %v3491
        %v3493 = vpop.f32.mrb[0].mxu0
        %v3494 = vpop.f32.mrb[0].mxu0
        %v3495 = vadd.f32 0.0, %v3494
        %v3496 = vpop.f32.mrb[0].mxu0
        %3497 = vmatprep.mubr.bf16.mxu0 0
        %3498 = vmatmul.mubr.bf16.gmra.mrb[0].mxu0 %v3343
        %v3499 = vpop.f32.mrb[0].mxu0
        %v3500 = vadd.f32 0.0, %v3499
        %v3501 = vpop.f32.mrb[0].mxu0
        %v3502 = vpop.f32.mrb[0].mxu0
        %v3503 = vadd.f32 0.0, %v3502
        %v3504 = vpop.f32.mrb[0].mxu0
        %3505 = vdwg.mxu0
        %v3510 = vunpack.c.l.b16 %v3276
        %v3511 = vunpack.c.l.b16 %v3277
        %v3512 = vunpack.c.l.b16 %v3278
        %v3513 = vunpack.c.l.b16 %v3279
        %v3514 = vpack.c.b16 %v3511, %v3510
        %v3515 = vpack.c.b16 %v3513, %v3512
        %v3519 = vsel %vm317, %v3258, 0
        %3521 = vmatprep.subr.bf16.mxu0 0
        %3522 = vmatpush1.bf16.msra.mxu0 %v3514
        %3523 = vmatprep.subr.bf16.mxu0 0
        %3524 = vmatpush1.bf16.msra.mxu0 %v3515
        %3525 = vmatprep.subr.bf16.mxu0 0
        %3526 = vmatpush1.bf16.msra.mxu0 0
        %3527 = vmatprep.subr.bf16.mxu0 0
        %3528 = vmatpush1.bf16.msra.mxu0 0
        %3529 = vmatprep.subr.bf16.mxu0 0
        %3530 = vmatpush1.bf16.msra.mxu0 0
        %3531 = vmatprep.subr.bf16.mxu0 0
        %3532 = vmatpush1.bf16.msra.mxu0 0
        %3533 = vmatprep.subr.bf16.mxu0 0
        %3534 = vmatpush1.bf16.msra.mxu0 0
        %3535 = vmatprep.subr.bf16.mxu0 0
        %3536 = vmatpush1.bf16.msra.mxu0 0
        %3537 = vmatprep.subr.bf16.mxu0 0
        %3538 = vmatpush1.bf16.msra.mxu0 0
        %3539 = vmatprep.subr.bf16.mxu0 0
        %3540 = vmatpush1.bf16.msra.mxu0 0
        %3541 = vmatprep.subr.bf16.mxu0 0
        %3542 = vmatpush1.bf16.msra.mxu0 0
        %3543 = vmatprep.subr.bf16.mxu0 0
        %3544 = vmatpush1.bf16.msra.mxu0 0
        %3545 = vmatprep.subr.bf16.mxu0 0
        %3546 = vmatpush1.bf16.msra.mxu0 0
        %3547 = vmatprep.subr.bf16.mxu0 0
        %3548 = vmatpush1.bf16.msra.mxu0 0
        %3549 = vmatprep.subr.bf16.mxu0 0
        %3550 = vmatpush1.bf16.msra.mxu0 0
        %3551 = vmatprep.subr.bf16.mxu0 0
        %3552 = vmatpush1.bf16.msra.mxu0 0
        %3553 = vmatprep.mubr.bf16.mxu0 0
        %3554 = vmatmul.mubr.bf16.gmra.mrb[0].mxu0 %v3519
        %v3555 = vpop.f32.mrb[0].mxu0
        %v3556 = vadd.f32 %v3380, %v3555
        %v3557 = vpop.f32.mrb[0].mxu0
        %v3558 = vpop.f32.mrb[0].mxu0
        %v3559 = vadd.f32 %v3383, %v3558
        %v3560 = vpop.f32.mrb[0].mxu0
        %3561 = vmatprep.mubr.bf16.mxu0 0
        %3562 = vmatmul.mubr.bf16.gmra.mrb[0].mxu0 %v3298
        %v3563 = vpop.f32.mrb[0].mxu0
        %v3564 = vadd.f32 %v3388, %v3563
        %v3565 = vpop.f32.mrb[0].mxu0
        %v3566 = vpop.f32.mrb[0].mxu0
        %v3567 = vadd.f32 %v3391, %v3566
        %v3568 = vpop.f32.mrb[0].mxu0
        %3569 = vmatprep.mubr.bf16.mxu0 0
        %3570 = vmatmul.mubr.bf16.gmra.mrb[0].mxu0 %v3301
        %v3571 = vpop.f32.mrb[0].mxu0
        %v3572 = vadd.f32 %v3396, %v3571
        %v3573 = vpop.f32.mrb[0].mxu0
        %v3574 = vpop.f32.mrb[0].mxu0
        %v3575 = vadd.f32 %v3399, %v3574
        %v3576 = vpop.f32.mrb[0].mxu0
        %3577 = vmatprep.mubr.bf16.mxu0 0
        %3578 = vmatmul.mubr.bf16.gmra.mrb[0].mxu0 %v3304
        %v3579 = vpop.f32.mrb[0].mxu0
        %v3580 = vadd.f32 %v3404, %v3579
        %v3581 = vpop.f32.mrb[0].mxu0
        %v3582 = vpop.f32.mrb[0].mxu0
        %v3583 = vadd.f32 %v3407, %v3582
        %v3584 = vpop.f32.mrb[0].mxu0
        %3585 = vmatprep.mubr.bf16.mxu0 0
        %3586 = vmatmul.mubr.bf16.gmra.mrb[0].mxu0 %v3307
        %v3587 = vpop.f32.mrb[0].mxu0
        %v3588 = vadd.f32 %v3412, %v3587
        %v3589 = vpop.f32.mrb[0].mxu0
        %v3590 = vpop.f32.mrb[0].mxu0
        %v3591 = vadd.f32 %v3415, %v3590
        %v3592 = vpop.f32.mrb[0].mxu0
        %3593 = vmatprep.mubr.bf16.mxu0 0
        %3594 = vmatmul.mubr.bf16.gmra.mrb[0].mxu0 %v3310
        %v3595 = vpop.f32.mrb[0].mxu0
        %v3596 = vadd.f32 %v3420, %v3595
        %v3597 = vpop.f32.mrb[0].mxu0
        %v3598 = vpop.f32.mrb[0].mxu0
        %v3599 = vadd.f32 %v3423, %v3598
        %v3600 = vpop.f32.mrb[0].mxu0
        %3601 = vmatprep.mubr.bf16.mxu0 0
        %3602 = vmatmul.mubr.bf16.gmra.mrb[0].mxu0 %v3313
        %v3603 = vpop.f32.mrb[0].mxu0
        %v3604 = vadd.f32 %v3428, %v3603
        %v3605 = vpop.f32.mrb[0].mxu0
        %v3606 = vpop.f32.mrb[0].mxu0
        %v3607 = vadd.f32 %v3431, %v3606
        %v3608 = vpop.f32.mrb[0].mxu0
        %3609 = vmatprep.mubr.bf16.mxu0 0
        %3610 = vmatmul.mubr.bf16.gmra.mrb[0].mxu0 %v3316
        %v3611 = vpop.f32.mrb[0].mxu0
        %v3612 = vadd.f32 %v3436, %v3611
        %v3613 = vpop.f32.mrb[0].mxu0
        %v3614 = vpop.f32.mrb[0].mxu0
        %v3615 = vadd.f32 %v3439, %v3614
        %v3616 = vpop.f32.mrb[0].mxu0
        %3617 = vmatprep.mubr.bf16.mxu0 0
        %3618 = vmatmul.mubr.bf16.gmra.mrb[0].mxu0 %v3319
        %v3619 = vpop.f32.mrb[0].mxu0
        %v3620 = vadd.f32 %v3444, %v3619
        %v3621 = vpop.f32.mrb[0].mxu0
        %v3622 = vpop.f32.mrb[0].mxu0
        %v3623 = vadd.f32 %v3447, %v3622
        %v3624 = vpop.f32.mrb[0].mxu0
        %3625 = vmatprep.mubr.bf16.mxu0 0
        %3626 = vmatmul.mubr.bf16.gmra.mrb[0].mxu0 %v3322
        %v3627 = vpop.f32.mrb[0].mxu0
        %v3628 = vadd.f32 %v3452, %v3627
        %v3629 = vpop.f32.mrb[0].mxu0
        %v3630 = vpop.f32.mrb[0].mxu0
        %v3631 = vadd.f32 %v3455, %v3630
        %v3632 = vpop.f32.mrb[0].mxu0
        %3633 = vmatprep.mubr.bf16.mxu0 0
        %3634 = vmatmul.mubr.bf16.gmra.mrb[0].mxu0 %v3325
        %v3635 = vpop.f32.mrb[0].mxu0
        %v3636 = vadd.f32 %v3460, %v3635
        %v3637 = vpop.f32.mrb[0].mxu0
        %v3638 = vpop.f32.mrb[0].mxu0
        %v3639 = vadd.f32 %v3463, %v3638
        %v3640 = vpop.f32.mrb[0].mxu0
        %3641 = vmatprep.mubr.bf16.mxu0 0
        %3642 = vmatmul.mubr.bf16.gmra.mrb[0].mxu0 %v3328
        %v3643 = vpop.f32.mrb[0].mxu0
        %v3644 = vadd.f32 %v3468, %v3643
        %v3645 = vpop.f32.mrb[0].mxu0
        %v3646 = vpop.f32.mrb[0].mxu0
        %v3647 = vadd.f32 %v3471, %v3646
        %v3648 = vpop.f32.mrb[0].mxu0
        %3649 = vmatprep.mubr.bf16.mxu0 0
        %3650 = vmatmul.mubr.bf16.gmra.mrb[0].mxu0 %v3331
        %v3651 = vpop.f32.mrb[0].mxu0
        %v3652 = vadd.f32 %v3476, %v3651
        %v3653 = vpop.f32.mrb[0].mxu0
        %v3654 = vpop.f32.mrb[0].mxu0
        %v3655 = vadd.f32 %v3479, %v3654
        %v3656 = vpop.f32.mrb[0].mxu0
        %3657 = vmatprep.mubr.bf16.mxu0 0
        %3658 = vmatmul.mubr.bf16.gmra.mrb[0].mxu0 %v3334
        %v3659 = vpop.f32.mrb[0].mxu0
        %v3660 = vadd.f32 %v3484, %v3659
        %v3661 = vpop.f32.mrb[0].mxu0
        %v3662 = vpop.f32.mrb[0].mxu0
        %v3663 = vadd.f32 %v3487, %v3662
        %v3664 = vpop.f32.mrb[0].mxu0
        %3665 = vmatprep.mubr.bf16.mxu0 0
        %3666 = vmatmul.mubr.bf16.gmra.mrb[0].mxu0 %v3337
        %v3667 = vpop.f32.mrb[0].mxu0
        %v3668 = vadd.f32 %v3492, %v3667
        %v3669 = vpop.f32.mrb[0].mxu0
        %v3670 = vpop.f32.mrb[0].mxu0
        %v3671 = vadd.f32 %v3495, %v3670
        %v3672 = vpop.f32.mrb[0].mxu0
        %3673 = vmatprep.mubr.bf16.mxu0 0
        %3674 = vmatmul.mubr.bf16.gmra.mrb[0].mxu0 %v3340
        %v3675 = vpop.f32.mrb[0].mxu0
        %v3676 = vadd.f32 %v3500, %v3675
        %v3677 = vpop.f32.mrb[0].mxu0
        %v3678 = vpop.f32.mrb[0].mxu0
        %v3679 = vadd.f32 %v3503, %v3678
        %v3680 = vpop.f32.mrb[0].mxu0
        %3681 = vdwg.mxu0
        %s3682 = scalar_lea.vmem %s2, 96
        %v3683 = vld [vmem:[%s3682] sm:$0xf]
        %v3684 = vld [vmem:[%s3682 + $0x4] sm:$0xf]
        %v3685 = vld [vmem:[%s3682 + $0x8] sm:$0xf]
        %v3686 = vld [vmem:[%s3682 + $0xc] sm:$0xf]
        %v3691 = vunpack.c.l.b16 %v3683
        %v3692 = vunpack.c.l.b16 %v3684
        %v3693 = vunpack.c.l.b16 %v3685
        %v3694 = vunpack.c.l.b16 %v3686
        %v3695 = vpack.c.b16 %v3692, %v3691
        %v3696 = vpack.c.b16 %v3694, %v3693
        %v3700 = vsel %vm317, %v3275, 0
        %3702 = vmatprep.subr.bf16.mxu0 0
        %3703 = vmatpush1.bf16.msra.mxu0 %v3695
        %3704 = vmatprep.subr.bf16.mxu0 0
        %3705 = vmatpush1.bf16.msra.mxu0 %v3696
        %3706 = vmatprep.subr.bf16.mxu0 0
        %3707 = vmatpush1.bf16.msra.mxu0 0
        %3708 = vmatprep.subr.bf16.mxu0 0
        %3709 = vmatpush1.bf16.msra.mxu0 0
        %3710 = vmatprep.subr.bf16.mxu0 0
        %3711 = vmatpush1.bf16.msra.mxu0 0
        %3712 = vmatprep.subr.bf16.mxu0 0
        %3713 = vmatpush1.bf16.msra.mxu0 0
        %3714 = vmatprep.subr.bf16.mxu0 0
        %3715 = vmatpush1.bf16.msra.mxu0 0
        %3716 = vmatprep.subr.bf16.mxu0 0
        %3717 = vmatpush1.bf16.msra.mxu0 0
        %3718 = vmatprep.subr.bf16.mxu0 0
        %3719 = vmatpush1.bf16.msra.mxu0 0
        %3720 = vmatprep.subr.bf16.mxu0 0
        %3721 = vmatpush1.bf16.msra.mxu0 0
        %3722 = vmatprep.subr.bf16.mxu0 0
        %3723 = vmatpush1.bf16.msra.mxu0 0
        %3724 = vmatprep.subr.bf16.mxu0 0
        %3725 = vmatpush1.bf16.msra.mxu0 0
        %3726 = vmatprep.subr.bf16.mxu0 0
        %3727 = vmatpush1.bf16.msra.mxu0 0
        %3728 = vmatprep.subr.bf16.mxu0 0
        %3729 = vmatpush1.bf16.msra.mxu0 0
        %3730 = vmatprep.subr.bf16.mxu0 0
        %3731 = vmatpush1.bf16.msra.mxu0 0
        %3732 = vmatprep.subr.bf16.mxu0 0
        %3733 = vmatpush1.bf16.msra.mxu0 0
        %3734 = vmatprep.mubr.bf16.mxu0 0
        %3735 = vmatmul.mubr.bf16.gmra.mrb[0].mxu0 %v3301
        %v3736 = vpop.f32.mrb[0].mxu0
        %v3737 = vadd.f32 0.0, %v3736
        %v3738 = vpop.f32.mrb[0].mxu0
        %v3739 = vpop.f32.mrb[0].mxu0
        %v3740 = vadd.f32 0.0, %v3739
        %v3741 = vpop.f32.mrb[0].mxu0
        %3742 = vmatprep.mubr.bf16.mxu0 0
        %3743 = vmatmul.mubr.bf16.gmra.mrb[0].mxu0 %v3304
        %v3744 = vpop.f32.mrb[0].mxu0
        %v3745 = vadd.f32 0.0, %v3744
        %v3746 = vpop.f32.mrb[0].mxu0
        %v3747 = vpop.f32.mrb[0].mxu0
        %v3748 = vadd.f32 0.0, %v3747
        %v3749 = vpop.f32.mrb[0].mxu0
        %3750 = vmatprep.mubr.bf16.mxu0 0
        %3751 = vmatmul.mubr.bf16.gmra.mrb[0].mxu0 %v3307
        %v3752 = vpop.f32.mrb[0].mxu0
        %v3753 = vadd.f32 0.0, %v3752
        %v3754 = vpop.f32.mrb[0].mxu0
        %v3755 = vpop.f32.mrb[0].mxu0
        %v3756 = vadd.f32 0.0, %v3755
        %v3757 = vpop.f32.mrb[0].mxu0
        %3758 = vmatprep.mubr.bf16.mxu0 0
        %3759 = vmatmul.mubr.bf16.gmra.mrb[0].mxu0 %v3310
        %v3760 = vpop.f32.mrb[0].mxu0
        %v3761 = vadd.f32 0.0, %v3760
        %v3762 = vpop.f32.mrb[0].mxu0
        %v3763 = vpop.f32.mrb[0].mxu0
        %v3764 = vadd.f32 0.0, %v3763
        %v3765 = vpop.f32.mrb[0].mxu0
        %3766 = vmatprep.mubr.bf16.mxu0 0
        %3767 = vmatmul.mubr.bf16.gmra.mrb[0].mxu0 %v3313
        %v3768 = vpop.f32.mrb[0].mxu0
        %v3769 = vadd.f32 0.0, %v3768
        %v3770 = vpop.f32.mrb[0].mxu0
        %v3771 = vpop.f32.mrb[0].mxu0
        %v3772 = vadd.f32 0.0, %v3771
        %v3773 = vpop.f32.mrb[0].mxu0
        %3774 = vmatprep.mubr.bf16.mxu0 0
        %3775 = vmatmul.mubr.bf16.gmra.mrb[0].mxu0 %v3316
        %v3776 = vpop.f32.mrb[0].mxu0
        %v3777 = vadd.f32 0.0, %v3776
        %v3778 = vpop.f32.mrb[0].mxu0
        %v3779 = vpop.f32.mrb[0].mxu0
        %v3780 = vadd.f32 0.0, %v3779
        %v3781 = vpop.f32.mrb[0].mxu0
        %3782 = vmatprep.mubr.bf16.mxu0 0
        %3783 = vmatmul.mubr.bf16.gmra.mrb[0].mxu0 %v3319
        %v3784 = vpop.f32.mrb[0].mxu0
        %v3785 = vadd.f32 0.0, %v3784
        %v3786 = vpop.f32.mrb[0].mxu0
        %v3787 = vpop.f32.mrb[0].mxu0
        %v3788 = vadd.f32 0.0, %v3787
        %v3789 = vpop.f32.mrb[0].mxu0
        %3790 = vmatprep.mubr.bf16.mxu0 0
        %3791 = vmatmul.mubr.bf16.gmra.mrb[0].mxu0 %v3322
        %v3792 = vpop.f32.mrb[0].mxu0
        %v3793 = vadd.f32 0.0, %v3792
        %v3794 = vpop.f32.mrb[0].mxu0
        %v3795 = vpop.f32.mrb[0].mxu0
        %v3796 = vadd.f32 0.0, %v3795
        %v3797 = vpop.f32.mrb[0].mxu0
        %3798 = vmatprep.mubr.bf16.mxu0 0
        %3799 = vmatmul.mubr.bf16.gmra.mrb[0].mxu0 %v3325
        %v3800 = vpop.f32.mrb[0].mxu0
        %v3801 = vadd.f32 0.0, %v3800
        %v3802 = vpop.f32.mrb[0].mxu0
        %v3803 = vpop.f32.mrb[0].mxu0
        %v3804 = vadd.f32 0.0, %v3803
        %v3805 = vpop.f32.mrb[0].mxu0
        %3806 = vmatprep.mubr.bf16.mxu0 0
        %3807 = vmatmul.mubr.bf16.gmra.mrb[0].mxu0 %v3328
        %v3808 = vpop.f32.mrb[0].mxu0
        %v3809 = vadd.f32 0.0, %v3808
        %v3810 = vpop.f32.mrb[0].mxu0
        %v3811 = vpop.f32.mrb[0].mxu0
        %v3812 = vadd.f32 0.0, %v3811
        %v3813 = vpop.f32.mrb[0].mxu0
        %3814 = vmatprep.mubr.bf16.mxu0 0
        %3815 = vmatmul.mubr.bf16.gmra.mrb[0].mxu0 %v3331
        %v3816 = vpop.f32.mrb[0].mxu0
        %v3817 = vadd.f32 0.0, %v3816
        %v3818 = vpop.f32.mrb[0].mxu0
        %v3819 = vpop.f32.mrb[0].mxu0
        %v3820 = vadd.f32 0.0, %v3819
        %v3821 = vpop.f32.mrb[0].mxu0
        %3822 = vmatprep.mubr.bf16.mxu0 0
        %3823 = vmatmul.mubr.bf16.gmra.mrb[0].mxu0 %v3334
        %v3824 = vpop.f32.mrb[0].mxu0
        %v3825 = vadd.f32 0.0, %v3824
        %v3826 = vpop.f32.mrb[0].mxu0
        %v3827 = vpop.f32.mrb[0].mxu0
        %v3828 = vadd.f32 0.0, %v3827
        %v3829 = vpop.f32.mrb[0].mxu0
        %3830 = vmatprep.mubr.bf16.mxu0 0
        %3831 = vmatmul.mubr.bf16.gmra.mrb[0].mxu0 %v3337
        %v3832 = vpop.f32.mrb[0].mxu0
        %v3833 = vadd.f32 0.0, %v3832
        %v3834 = vpop.f32.mrb[0].mxu0
        %v3835 = vpop.f32.mrb[0].mxu0
        %v3836 = vadd.f32 0.0, %v3835
        %v3837 = vpop.f32.mrb[0].mxu0
        %3838 = vmatprep.mubr.bf16.mxu0 0
        %3839 = vmatmul.mubr.bf16.gmra.mrb[0].mxu0 %v3340
        %v3840 = vpop.f32.mrb[0].mxu0
        %v3841 = vadd.f32 0.0, %v3840
        %v3842 = vpop.f32.mrb[0].mxu0
        %v3843 = vpop.f32.mrb[0].mxu0
        %v3844 = vadd.f32 0.0, %v3843
        %v3845 = vpop.f32.mrb[0].mxu0
        %3846 = vmatprep.mubr.bf16.mxu0 0
        %3847 = vmatmul.mubr.bf16.gmra.mrb[0].mxu0 %v3343
        %v3848 = vpop.f32.mrb[0].mxu0
        %v3849 = vadd.f32 0.0, %v3848
        %v3850 = vpop.f32.mrb[0].mxu0
        %v3851 = vpop.f32.mrb[0].mxu0
        %v3852 = vadd.f32 0.0, %v3851
        %v3853 = vpop.f32.mrb[0].mxu0
        %3854 = vmatprep.mubr.bf16.mxu0 0
        %3855 = vmatmul.mubr.bf16.gmra.mrb[0].mxu0 %v3700
        %v3856 = vpop.f32.mrb[0].mxu0
        %v3857 = vadd.f32 0.0, %v3856
        %v3858 = vpop.f32.mrb[0].mxu0
        %v3859 = vpop.f32.mrb[0].mxu0
        %v3860 = vadd.f32 0.0, %v3859
        %v3861 = vpop.f32.mrb[0].mxu0
        %3862 = vdwg.mxu0
        %v3863 = vadd.f32 %v3556, %v3737
        %v3864 = vadd.f32 %v3559, %v3740
        %v3865 = vadd.f32 %v3564, %v3745
        %v3866 = vadd.f32 %v3567, %v3748
        %v3867 = vadd.f32 %v3572, %v3753
        %v3868 = vadd.f32 %v3575, %v3756
        %v3869 = vadd.f32 %v3580, %v3761
        %v3870 = vadd.f32 %v3583, %v3764
        %v3871 = vadd.f32 %v3588, %v3769
        %v3872 = vadd.f32 %v3591, %v3772
        %v3873 = vadd.f32 %v3596, %v3777
        %v3874 = vadd.f32 %v3599, %v3780
        %v3875 = vadd.f32 %v3604, %v3785
        %v3876 = vadd.f32 %v3607, %v3788
        %v3877 = vadd.f32 %v3612, %v3793
        %v3878 = vadd.f32 %v3615, %v3796
        %v3879 = vadd.f32 %v3620, %v3801
        %v3880 = vadd.f32 %v3623, %v3804
        %v3881 = vadd.f32 %v3628, %v3809
        %v3882 = vadd.f32 %v3631, %v3812
        %v3883 = vadd.f32 %v3636, %v3817
        %v3884 = vadd.f32 %v3639, %v3820
        %v3885 = vadd.f32 %v3644, %v3825
        %v3886 = vadd.f32 %v3647, %v3828
        %v3887 = vadd.f32 %v3652, %v3833
        %v3888 = vadd.f32 %v3655, %v3836
        %v3889 = vadd.f32 %v3660, %v3841
        %v3890 = vadd.f32 %v3663, %v3844
        %v3891 = vadd.f32 %v3668, %v3849
        %v3892 = vadd.f32 %v3671, %v3852
        %v3893 = vadd.f32 %v3676, %v3857
        %v3894 = vadd.f32 %v3679, %v3860
        %v3895 = vpack.c.bf16 %v3007, %v3006
        %v3896 = vpack.c.bf16 %v3011, %v3010
        %v3897 = vpack.c.bf16 %v3015, %v3014
        %v3898 = vpack.c.bf16 %v3019, %v3018
        %v3899 = vpack.c.bf16 %v3023, %v3022
        %v3900 = vpack.c.bf16 %v3027, %v3026
        %v3901 = vpack.c.bf16 %v3031, %v3030
        %v3902 = vpack.c.bf16 %v3035, %v3034
        %v3903 = vpack.c.bf16 %v3039, %v3038
        %v3904 = vpack.c.bf16 %v3043, %v3042
        %v3905 = vpack.c.bf16 %v3047, %v3046
        %v3906 = vpack.c.bf16 %v3051, %v3050
        %v3907 = vpack.c.bf16 %v3055, %v3054
        %v3908 = vpack.c.bf16 %v3059, %v3058
        %v3909 = vpack.c.bf16 %v3063, %v3062
        %v3910 = vpack.c.bf16 %v3067, %v3066
        %v3911 = vpack.c.bf16 %v3071, %v3070
        %v3912 = vpack.c.bf16 %v3075, %v3074
        %s3913 = scalar_lea.vmem %s2, 16
        %v3914 = vld [vmem:[%s3913] sm:$0xf]
        %v3915 = vld [vmem:[%s3913 + $0x4] sm:$0xf]
        %v3916 = vld [vmem:[%s3913 + $0x8] sm:$0xf]
        %v3917 = vld [vmem:[%s3913 + $0xc] sm:$0xf]
        %v3922 = vunpack.c.l.b16 %v3914
        %v3923 = vunpack.c.l.b16 %v3915
        %v3924 = vunpack.c.l.b16 %v3916
        %v3925 = vunpack.c.l.b16 %v3917
        %v3926 = vpack.c.b16 %v3923, %v3922
        %v3927 = vpack.c.b16 %v3925, %v3924
        %v3931 = vsel %vm317, %v3895, 0
        %v3934 = vsel %vm317, %v3896, 0
        %v3937 = vsel %vm317, %v3897, 0
        %v3940 = vsel %vm317, %v3898, 0
        %v3943 = vsel %vm317, %v3899, 0
        %v3946 = vsel %vm317, %v3900, 0
        %v3949 = vsel %vm317, %v3901, 0
        %v3952 = vsel %vm317, %v3902, 0
        %v3955 = vsel %vm317, %v3903, 0
        %v3958 = vsel %vm317, %v3904, 0
        %v3961 = vsel %vm317, %v3905, 0
        %v3964 = vsel %vm317, %v3906, 0
        %v3967 = vsel %vm317, %v3907, 0
        %v3970 = vsel %vm317, %v3908, 0
        %v3973 = vsel %vm317, %v3909, 0
        %v3976 = vsel %vm317, %v3910, 0
        %3978 = vmatprep.subr.bf16.mxu0 0
        %3979 = vmatpush1.bf16.msra.mxu0 %v3926
        %3980 = vmatprep.subr.bf16.mxu0 0
        %3981 = vmatpush1.bf16.msra.mxu0 %v3927
        %3982 = vmatprep.subr.bf16.mxu0 0
        %3983 = vmatpush1.bf16.msra.mxu0 0
        %3984 = vmatprep.subr.bf16.mxu0 0
        %3985 = vmatpush1.bf16.msra.mxu0 0
        %3986 = vmatprep.subr.bf16.mxu0 0
        %3987 = vmatpush1.bf16.msra.mxu0 0
        %3988 = vmatprep.subr.bf16.mxu0 0
        %3989 = vmatpush1.bf16.msra.mxu0 0
        %3990 = vmatprep.subr.bf16.mxu0 0
        %3991 = vmatpush1.bf16.msra.mxu0 0
        %3992 = vmatprep.subr.bf16.mxu0 0
        %3993 = vmatpush1.bf16.msra.mxu0 0
        %3994 = vmatprep.subr.bf16.mxu0 0
        %3995 = vmatpush1.bf16.msra.mxu0 0
        %3996 = vmatprep.subr.bf16.mxu0 0
        %3997 = vmatpush1.bf16.msra.mxu0 0
        %3998 = vmatprep.subr.bf16.mxu0 0
        %3999 = vmatpush1.bf16.msra.mxu0 0
        %4000 = vmatprep.subr.bf16.mxu0 0
        %4001 = vmatpush1.bf16.msra.mxu0 0
        %4002 = vmatprep.subr.bf16.mxu0 0
        %4003 = vmatpush1.bf16.msra.mxu0 0
        %4004 = vmatprep.subr.bf16.mxu0 0
        %4005 = vmatpush1.bf16.msra.mxu0 0
        %4006 = vmatprep.subr.bf16.mxu0 0
        %4007 = vmatpush1.bf16.msra.mxu0 0
        %4008 = vmatprep.subr.bf16.mxu0 0
        %4009 = vmatpush1.bf16.msra.mxu0 0
        %4010 = vmatprep.mubr.bf16.mxu0 0
        %4011 = vmatmul.mubr.bf16.gmra.mrb[0].mxu0 %v3931
        %v4012 = vpop.f32.mrb[0].mxu0
        %v4013 = vadd.f32 0.0, %v4012
        %v4014 = vpop.f32.mrb[0].mxu0
        %v4015 = vpop.f32.mrb[0].mxu0
        %v4016 = vadd.f32 0.0, %v4015
        %v4017 = vpop.f32.mrb[0].mxu0
        %4018 = vmatprep.mubr.bf16.mxu0 0
        %4019 = vmatmul.mubr.bf16.gmra.mrb[0].mxu0 %v3934
        %v4020 = vpop.f32.mrb[0].mxu0
        %v4021 = vadd.f32 0.0, %v4020
        %v4022 = vpop.f32.mrb[0].mxu0
        %v4023 = vpop.f32.mrb[0].mxu0
        %v4024 = vadd.f32 0.0, %v4023
        %v4025 = vpop.f32.mrb[0].mxu0
        %4026 = vmatprep.mubr.bf16.mxu0 0
        %4027 = vmatmul.mubr.bf16.gmra.mrb[0].mxu0 %v3937
        %v4028 = vpop.f32.mrb[0].mxu0
        %v4029 = vadd.f32 0.0, %v4028
        %v4030 = vpop.f32.mrb[0].mxu0
        %v4031 = vpop.f32.mrb[0].mxu0
        %v4032 = vadd.f32 0.0, %v4031
        %v4033 = vpop.f32.mrb[0].mxu0
        %4034 = vmatprep.mubr.bf16.mxu0 0
        %4035 = vmatmul.mubr.bf16.gmra.mrb[0].mxu0 %v3940
        %v4036 = vpop.f32.mrb[0].mxu0
        %v4037 = vadd.f32 0.0, %v4036
        %v4038 = vpop.f32.mrb[0].mxu0
        %v4039 = vpop.f32.mrb[0].mxu0
        %v4040 = vadd.f32 0.0, %v4039
        %v4041 = vpop.f32.mrb[0].mxu0
        %4042 = vmatprep.mubr.bf16.mxu0 0
        %4043 = vmatmul.mubr.bf16.gmra.mrb[0].mxu0 %v3943
        %v4044 = vpop.f32.mrb[0].mxu0
        %v4045 = vadd.f32 0.0, %v4044
        %v4046 = vpop.f32.mrb[0].mxu0
        %v4047 = vpop.f32.mrb[0].mxu0
        %v4048 = vadd.f32 0.0, %v4047
        %v4049 = vpop.f32.mrb[0].mxu0
        %4050 = vmatprep.mubr.bf16.mxu0 0
        %4051 = vmatmul.mubr.bf16.gmra.mrb[0].mxu0 %v3946
        %v4052 = vpop.f32.mrb[0].mxu0
        %v4053 = vadd.f32 0.0, %v4052
        %v4054 = vpop.f32.mrb[0].mxu0
        %v4055 = vpop.f32.mrb[0].mxu0
        %v4056 = vadd.f32 0.0, %v4055
        %v4057 = vpop.f32.mrb[0].mxu0
        %4058 = vmatprep.mubr.bf16.mxu0 0
        %4059 = vmatmul.mubr.bf16.gmra.mrb[0].mxu0 %v3949
        %v4060 = vpop.f32.mrb[0].mxu0
        %v4061 = vadd.f32 0.0, %v4060
        %v4062 = vpop.f32.mrb[0].mxu0
        %v4063 = vpop.f32.mrb[0].mxu0
        %v4064 = vadd.f32 0.0, %v4063
        %v4065 = vpop.f32.mrb[0].mxu0
        %4066 = vmatprep.mubr.bf16.mxu0 0
        %4067 = vmatmul.mubr.bf16.gmra.mrb[0].mxu0 %v3952
        %v4068 = vpop.f32.mrb[0].mxu0
        %v4069 = vadd.f32 0.0, %v4068
        %v4070 = vpop.f32.mrb[0].mxu0
        %v4071 = vpop.f32.mrb[0].mxu0
        %v4072 = vadd.f32 0.0, %v4071
        %v4073 = vpop.f32.mrb[0].mxu0
        %4074 = vmatprep.mubr.bf16.mxu0 0
        %4075 = vmatmul.mubr.bf16.gmra.mrb[0].mxu0 %v3955
        %v4076 = vpop.f32.mrb[0].mxu0
        %v4077 = vadd.f32 0.0, %v4076
        %v4078 = vpop.f32.mrb[0].mxu0
        %v4079 = vpop.f32.mrb[0].mxu0
        %v4080 = vadd.f32 0.0, %v4079
        %v4081 = vpop.f32.mrb[0].mxu0
        %4082 = vmatprep.mubr.bf16.mxu0 0
        %4083 = vmatmul.mubr.bf16.gmra.mrb[0].mxu0 %v3958
        %v4084 = vpop.f32.mrb[0].mxu0
        %v4085 = vadd.f32 0.0, %v4084
        %v4086 = vpop.f32.mrb[0].mxu0
        %v4087 = vpop.f32.mrb[0].mxu0
        %v4088 = vadd.f32 0.0, %v4087
        %v4089 = vpop.f32.mrb[0].mxu0
        %4090 = vmatprep.mubr.bf16.mxu0 0
        %4091 = vmatmul.mubr.bf16.gmra.mrb[0].mxu0 %v3961
        %v4092 = vpop.f32.mrb[0].mxu0
        %v4093 = vadd.f32 0.0, %v4092
        %v4094 = vpop.f32.mrb[0].mxu0
        %v4095 = vpop.f32.mrb[0].mxu0
        %v4096 = vadd.f32 0.0, %v4095
        %v4097 = vpop.f32.mrb[0].mxu0
        %4098 = vmatprep.mubr.bf16.mxu0 0
        %4099 = vmatmul.mubr.bf16.gmra.mrb[0].mxu0 %v3964
        %v4100 = vpop.f32.mrb[0].mxu0
        %v4101 = vadd.f32 0.0, %v4100
        %v4102 = vpop.f32.mrb[0].mxu0
        %v4103 = vpop.f32.mrb[0].mxu0
        %v4104 = vadd.f32 0.0, %v4103
        %v4105 = vpop.f32.mrb[0].mxu0
        %4106 = vmatprep.mubr.bf16.mxu0 0
        %4107 = vmatmul.mubr.bf16.gmra.mrb[0].mxu0 %v3967
        %v4108 = vpop.f32.mrb[0].mxu0
        %v4109 = vadd.f32 0.0, %v4108
        %v4110 = vpop.f32.mrb[0].mxu0
        %v4111 = vpop.f32.mrb[0].mxu0
        %v4112 = vadd.f32 0.0, %v4111
        %v4113 = vpop.f32.mrb[0].mxu0
        %4114 = vmatprep.mubr.bf16.mxu0 0
        %4115 = vmatmul.mubr.bf16.gmra.mrb[0].mxu0 %v3970
        %v4116 = vpop.f32.mrb[0].mxu0
        %v4117 = vadd.f32 0.0, %v4116
        %v4118 = vpop.f32.mrb[0].mxu0
        %v4119 = vpop.f32.mrb[0].mxu0
        %v4120 = vadd.f32 0.0, %v4119
        %v4121 = vpop.f32.mrb[0].mxu0
        %4122 = vmatprep.mubr.bf16.mxu0 0
        %4123 = vmatmul.mubr.bf16.gmra.mrb[0].mxu0 %v3973
        %v4124 = vpop.f32.mrb[0].mxu0
        %v4125 = vadd.f32 0.0, %v4124
        %v4126 = vpop.f32.mrb[0].mxu0
        %v4127 = vpop.f32.mrb[0].mxu0
        %v4128 = vadd.f32 0.0, %v4127
        %v4129 = vpop.f32.mrb[0].mxu0
        %4130 = vmatprep.mubr.bf16.mxu0 0
        %4131 = vmatmul.mubr.bf16.gmra.mrb[0].mxu0 %v3976
        %v4132 = vpop.f32.mrb[0].mxu0
        %v4133 = vadd.f32 0.0, %v4132
        %v4134 = vpop.f32.mrb[0].mxu0
        %v4135 = vpop.f32.mrb[0].mxu0
        %v4136 = vadd.f32 0.0, %v4135
        %v4137 = vpop.f32.mrb[0].mxu0
        %4138 = vdwg.mxu0
        %v4139 = vadd.f32 %v3863, %v4013
        %v4140 = vadd.f32 %v3864, %v4016
        %v4141 = vadd.f32 %v3865, %v4021
        %v4142 = vadd.f32 %v3866, %v4024
        %v4143 = vadd.f32 %v3867, %v4029
        %v4144 = vadd.f32 %v3868, %v4032
        %v4145 = vadd.f32 %v3869, %v4037
        %v4146 = vadd.f32 %v3870, %v4040
        %v4147 = vadd.f32 %v3871, %v4045
        %v4148 = vadd.f32 %v3872, %v4048
        %v4149 = vadd.f32 %v3873, %v4053
        %v4150 = vadd.f32 %v3874, %v4056
        %v4151 = vadd.f32 %v3875, %v4061
        %v4152 = vadd.f32 %v3876, %v4064
        %v4153 = vadd.f32 %v3877, %v4069
        %v4154 = vadd.f32 %v3878, %v4072
        %v4155 = vadd.f32 %v3879, %v4077
        %v4156 = vadd.f32 %v3880, %v4080
        %v4157 = vadd.f32 %v3881, %v4085
        %v4158 = vadd.f32 %v3882, %v4088
        %v4159 = vadd.f32 %v3883, %v4093
        %v4160 = vadd.f32 %v3884, %v4096
        %v4161 = vadd.f32 %v3885, %v4101
        %v4162 = vadd.f32 %v3886, %v4104
        %v4163 = vadd.f32 %v3887, %v4109
        %v4164 = vadd.f32 %v3888, %v4112
        %v4165 = vadd.f32 %v3889, %v4117
        %v4166 = vadd.f32 %v3890, %v4120
        %v4167 = vadd.f32 %v3891, %v4125
        %v4168 = vadd.f32 %v3892, %v4128
        %v4169 = vadd.f32 %v3893, %v4133
        %v4170 = vadd.f32 %v3894, %v4136
        %s4171 = scalar_lea.vmem %s2, 64
        %v4172 = vld [vmem:[%s4171] sm:$0xf]
        %v4173 = vld [vmem:[%s4171 + $0x4] sm:$0xf]
        %v4174 = vld [vmem:[%s4171 + $0x8] sm:$0xf]
        %v4175 = vld [vmem:[%s4171 + $0xc] sm:$0xf]
        %v4180 = vunpack.c.l.b16 %v4172
        %v4181 = vunpack.c.l.b16 %v4173
        %v4182 = vunpack.c.l.b16 %v4174
        %v4183 = vunpack.c.l.b16 %v4175
        %v4184 = vpack.c.b16 %v4181, %v4180
        %v4185 = vpack.c.b16 %v4183, %v4182
        %v4189 = vsel %vm317, %v3911, 0
        %4191 = vmatprep.subr.bf16.mxu0 0
        %4192 = vmatpush1.bf16.msra.mxu0 %v4184
        %4193 = vmatprep.subr.bf16.mxu0 0
        %4194 = vmatpush1.bf16.msra.mxu0 %v4185
        %4195 = vmatprep.subr.bf16.mxu0 0
        %4196 = vmatpush1.bf16.msra.mxu0 0
        %4197 = vmatprep.subr.bf16.mxu0 0
        %4198 = vmatpush1.bf16.msra.mxu0 0
        %4199 = vmatprep.subr.bf16.mxu0 0
        %4200 = vmatpush1.bf16.msra.mxu0 0
        %4201 = vmatprep.subr.bf16.mxu0 0
        %4202 = vmatpush1.bf16.msra.mxu0 0
        %4203 = vmatprep.subr.bf16.mxu0 0
        %4204 = vmatpush1.bf16.msra.mxu0 0
        %4205 = vmatprep.subr.bf16.mxu0 0
        %4206 = vmatpush1.bf16.msra.mxu0 0
        %4207 = vmatprep.subr.bf16.mxu0 0
        %4208 = vmatpush1.bf16.msra.mxu0 0
        %4209 = vmatprep.subr.bf16.mxu0 0
        %4210 = vmatpush1.bf16.msra.mxu0 0
        %4211 = vmatprep.subr.bf16.mxu0 0
        %4212 = vmatpush1.bf16.msra.mxu0 0
        %4213 = vmatprep.subr.bf16.mxu0 0
        %4214 = vmatpush1.bf16.msra.mxu0 0
        %4215 = vmatprep.subr.bf16.mxu0 0
        %4216 = vmatpush1.bf16.msra.mxu0 0
        %4217 = vmatprep.subr.bf16.mxu0 0
        %4218 = vmatpush1.bf16.msra.mxu0 0
        %4219 = vmatprep.subr.bf16.mxu0 0
        %4220 = vmatpush1.bf16.msra.mxu0 0
        %4221 = vmatprep.subr.bf16.mxu0 0
        %4222 = vmatpush1.bf16.msra.mxu0 0
        %4223 = vmatprep.mubr.bf16.mxu0 0
        %4224 = vmatmul.mubr.bf16.gmra.mrb[0].mxu0 %v3934
        %v4225 = vpop.f32.mrb[0].mxu0
        %v4226 = vadd.f32 0.0, %v4225
        %v4227 = vpop.f32.mrb[0].mxu0
        %v4228 = vpop.f32.mrb[0].mxu0
        %v4229 = vadd.f32 0.0, %v4228
        %v4230 = vpop.f32.mrb[0].mxu0
        %4231 = vmatprep.mubr.bf16.mxu0 0
        %4232 = vmatmul.mubr.bf16.gmra.mrb[0].mxu0 %v3937
        %v4233 = vpop.f32.mrb[0].mxu0
        %v4234 = vadd.f32 0.0, %v4233
        %v4235 = vpop.f32.mrb[0].mxu0
        %v4236 = vpop.f32.mrb[0].mxu0
        %v4237 = vadd.f32 0.0, %v4236
        %v4238 = vpop.f32.mrb[0].mxu0
        %4239 = vmatprep.mubr.bf16.mxu0 0
        %4240 = vmatmul.mubr.bf16.gmra.mrb[0].mxu0 %v3940
        %v4241 = vpop.f32.mrb[0].mxu0
        %v4242 = vadd.f32 0.0, %v4241
        %v4243 = vpop.f32.mrb[0].mxu0
        %v4244 = vpop.f32.mrb[0].mxu0
        %v4245 = vadd.f32 0.0, %v4244
        %v4246 = vpop.f32.mrb[0].mxu0
        %4247 = vmatprep.mubr.bf16.mxu0 0
        %4248 = vmatmul.mubr.bf16.gmra.mrb[0].mxu0 %v3943
        %v4249 = vpop.f32.mrb[0].mxu0
        %v4250 = vadd.f32 0.0, %v4249
        %v4251 = vpop.f32.mrb[0].mxu0
        %v4252 = vpop.f32.mrb[0].mxu0
        %v4253 = vadd.f32 0.0, %v4252
        %v4254 = vpop.f32.mrb[0].mxu0
        %4255 = vmatprep.mubr.bf16.mxu0 0
        %4256 = vmatmul.mubr.bf16.gmra.mrb[0].mxu0 %v3946
        %v4257 = vpop.f32.mrb[0].mxu0
        %v4258 = vadd.f32 0.0, %v4257
        %v4259 = vpop.f32.mrb[0].mxu0
        %v4260 = vpop.f32.mrb[0].mxu0
        %v4261 = vadd.f32 0.0, %v4260
        %v4262 = vpop.f32.mrb[0].mxu0
        %4263 = vmatprep.mubr.bf16.mxu0 0
        %4264 = vmatmul.mubr.bf16.gmra.mrb[0].mxu0 %v3949
        %v4265 = vpop.f32.mrb[0].mxu0
        %v4266 = vadd.f32 0.0, %v4265
        %v4267 = vpop.f32.mrb[0].mxu0
        %v4268 = vpop.f32.mrb[0].mxu0
        %v4269 = vadd.f32 0.0, %v4268
        %v4270 = vpop.f32.mrb[0].mxu0
        %4271 = vmatprep.mubr.bf16.mxu0 0
        %4272 = vmatmul.mubr.bf16.gmra.mrb[0].mxu0 %v3952
        %v4273 = vpop.f32.mrb[0].mxu0
        %v4274 = vadd.f32 0.0, %v4273
        %v4275 = vpop.f32.mrb[0].mxu0
        %v4276 = vpop.f32.mrb[0].mxu0
        %v4277 = vadd.f32 0.0, %v4276
        %v4278 = vpop.f32.mrb[0].mxu0
        %4279 = vmatprep.mubr.bf16.mxu0 0
        %4280 = vmatmul.mubr.bf16.gmra.mrb[0].mxu0 %v3955
        %v4281 = vpop.f32.mrb[0].mxu0
        %v4282 = vadd.f32 0.0, %v4281
        %v4283 = vpop.f32.mrb[0].mxu0
        %v4284 = vpop.f32.mrb[0].mxu0
        %v4285 = vadd.f32 0.0, %v4284
        %v4286 = vpop.f32.mrb[0].mxu0
        %4287 = vmatprep.mubr.bf16.mxu0 0
        %4288 = vmatmul.mubr.bf16.gmra.mrb[0].mxu0 %v3958
        %v4289 = vpop.f32.mrb[0].mxu0
        %v4290 = vadd.f32 0.0, %v4289
        %v4291 = vpop.f32.mrb[0].mxu0
        %v4292 = vpop.f32.mrb[0].mxu0
        %v4293 = vadd.f32 0.0, %v4292
        %v4294 = vpop.f32.mrb[0].mxu0
        %4295 = vmatprep.mubr.bf16.mxu0 0
        %4296 = vmatmul.mubr.bf16.gmra.mrb[0].mxu0 %v3961
        %v4297 = vpop.f32.mrb[0].mxu0
        %v4298 = vadd.f32 0.0, %v4297
        %v4299 = vpop.f32.mrb[0].mxu0
        %v4300 = vpop.f32.mrb[0].mxu0
        %v4301 = vadd.f32 0.0, %v4300
        %v4302 = vpop.f32.mrb[0].mxu0
        %4303 = vmatprep.mubr.bf16.mxu0 0
        %4304 = vmatmul.mubr.bf16.gmra.mrb[0].mxu0 %v3964
        %v4305 = vpop.f32.mrb[0].mxu0
        %v4306 = vadd.f32 0.0, %v4305
        %v4307 = vpop.f32.mrb[0].mxu0
        %v4308 = vpop.f32.mrb[0].mxu0
        %v4309 = vadd.f32 0.0, %v4308
        %v4310 = vpop.f32.mrb[0].mxu0
        %4311 = vmatprep.mubr.bf16.mxu0 0
        %4312 = vmatmul.mubr.bf16.gmra.mrb[0].mxu0 %v3967
        %v4313 = vpop.f32.mrb[0].mxu0
        %v4314 = vadd.f32 0.0, %v4313
        %v4315 = vpop.f32.mrb[0].mxu0
        %v4316 = vpop.f32.mrb[0].mxu0
        %v4317 = vadd.f32 0.0, %v4316
        %v4318 = vpop.f32.mrb[0].mxu0
        %4319 = vmatprep.mubr.bf16.mxu0 0
        %4320 = vmatmul.mubr.bf16.gmra.mrb[0].mxu0 %v3970
        %v4321 = vpop.f32.mrb[0].mxu0
        %v4322 = vadd.f32 0.0, %v4321
        %v4323 = vpop.f32.mrb[0].mxu0
        %v4324 = vpop.f32.mrb[0].mxu0
        %v4325 = vadd.f32 0.0, %v4324
        %v4326 = vpop.f32.mrb[0].mxu0
        %4327 = vmatprep.mubr.bf16.mxu0 0
        %4328 = vmatmul.mubr.bf16.gmra.mrb[0].mxu0 %v3973
        %v4329 = vpop.f32.mrb[0].mxu0
        %v4330 = vadd.f32 0.0, %v4329
        %v4331 = vpop.f32.mrb[0].mxu0
        %v4332 = vpop.f32.mrb[0].mxu0
        %v4333 = vadd.f32 0.0, %v4332
        %v4334 = vpop.f32.mrb[0].mxu0
        %4335 = vmatprep.mubr.bf16.mxu0 0
        %4336 = vmatmul.mubr.bf16.gmra.mrb[0].mxu0 %v3976
        %v4337 = vpop.f32.mrb[0].mxu0
        %v4338 = vadd.f32 0.0, %v4337
        %v4339 = vpop.f32.mrb[0].mxu0
        %v4340 = vpop.f32.mrb[0].mxu0
        %v4341 = vadd.f32 0.0, %v4340
        %v4342 = vpop.f32.mrb[0].mxu0
        %4343 = vmatprep.mubr.bf16.mxu0 0
        %4344 = vmatmul.mubr.bf16.gmra.mrb[0].mxu0 %v4189
        %v4345 = vpop.f32.mrb[0].mxu0
        %v4346 = vadd.f32 0.0, %v4345
        %v4347 = vpop.f32.mrb[0].mxu0
        %v4348 = vpop.f32.mrb[0].mxu0
        %v4349 = vadd.f32 0.0, %v4348
        %v4350 = vpop.f32.mrb[0].mxu0
        %4351 = vdwg.mxu0
        %v4352 = vadd.f32 %v4139, %v4226
        %v4353 = vadd.f32 %v4140, %v4229
        %v4354 = vadd.f32 %v4141, %v4234
        %v4355 = vadd.f32 %v4142, %v4237
        %v4356 = vadd.f32 %v4143, %v4242
        %v4357 = vadd.f32 %v4144, %v4245
        %v4358 = vadd.f32 %v4145, %v4250
        %v4359 = vadd.f32 %v4146, %v4253
        %v4360 = vadd.f32 %v4147, %v4258
        %v4361 = vadd.f32 %v4148, %v4261
        %v4362 = vadd.f32 %v4149, %v4266
        %v4363 = vadd.f32 %v4150, %v4269
        %v4364 = vadd.f32 %v4151, %v4274
        %v4365 = vadd.f32 %v4152, %v4277
        %v4366 = vadd.f32 %v4153, %v4282
        %v4367 = vadd.f32 %v4154, %v4285
        %v4368 = vadd.f32 %v4155, %v4290
        %v4369 = vadd.f32 %v4156, %v4293
        %v4370 = vadd.f32 %v4157, %v4298
        %v4371 = vadd.f32 %v4158, %v4301
        %v4372 = vadd.f32 %v4159, %v4306
        %v4373 = vadd.f32 %v4160, %v4309
        %v4374 = vadd.f32 %v4161, %v4314
        %v4375 = vadd.f32 %v4162, %v4317
        %v4376 = vadd.f32 %v4163, %v4322
        %v4377 = vadd.f32 %v4164, %v4325
        %v4378 = vadd.f32 %v4165, %v4330
        %v4379 = vadd.f32 %v4166, %v4333
        %v4380 = vadd.f32 %v4167, %v4338
        %v4381 = vadd.f32 %v4168, %v4341
        %v4382 = vadd.f32 %v4169, %v4346
        %v4383 = vadd.f32 %v4170, %v4349
        %s4384 = scalar_lea.vmem %s2, 112
        %v4385 = vld [vmem:[%s4384] sm:$0xf]
        %v4386 = vld [vmem:[%s4384 + $0x4] sm:$0xf]
        %v4387 = vld [vmem:[%s4384 + $0x8] sm:$0xf]
        %v4388 = vld [vmem:[%s4384 + $0xc] sm:$0xf]
        %v4393 = vunpack.c.l.b16 %v4385
        %v4394 = vunpack.c.l.b16 %v4386
        %v4395 = vunpack.c.l.b16 %v4387
        %v4396 = vunpack.c.l.b16 %v4388
        %v4397 = vpack.c.b16 %v4394, %v4393
        %v4398 = vpack.c.b16 %v4396, %v4395
        %v4402 = vsel %vm317, %v3912, 0
        %4404 = vmatprep.subr.bf16.mxu0 0
        %4405 = vmatpush1.bf16.msra.mxu0 %v4397
        %4406 = vmatprep.subr.bf16.mxu0 0
        %4407 = vmatpush1.bf16.msra.mxu0 %v4398
        %4408 = vmatprep.subr.bf16.mxu0 0
        %4409 = vmatpush1.bf16.msra.mxu0 0
        %4410 = vmatprep.subr.bf16.mxu0 0
        %4411 = vmatpush1.bf16.msra.mxu0 0
        %4412 = vmatprep.subr.bf16.mxu0 0
        %4413 = vmatpush1.bf16.msra.mxu0 0
        %4414 = vmatprep.subr.bf16.mxu0 0
        %4415 = vmatpush1.bf16.msra.mxu0 0
        %4416 = vmatprep.subr.bf16.mxu0 0
        %4417 = vmatpush1.bf16.msra.mxu0 0
        %4418 = vmatprep.subr.bf16.mxu0 0
        %4419 = vmatpush1.bf16.msra.mxu0 0
        %4420 = vmatprep.subr.bf16.mxu0 0
        %4421 = vmatpush1.bf16.msra.mxu0 0
        %4422 = vmatprep.subr.bf16.mxu0 0
        %4423 = vmatpush1.bf16.msra.mxu0 0
        %4424 = vmatprep.subr.bf16.mxu0 0
        %4425 = vmatpush1.bf16.msra.mxu0 0
        %4426 = vmatprep.subr.bf16.mxu0 0
        %4427 = vmatpush1.bf16.msra.mxu0 0
        %4428 = vmatprep.subr.bf16.mxu0 0
        %4429 = vmatpush1.bf16.msra.mxu0 0
        %4430 = vmatprep.subr.bf16.mxu0 0
        %4431 = vmatpush1.bf16.msra.mxu0 0
        %4432 = vmatprep.subr.bf16.mxu0 0
        %4433 = vmatpush1.bf16.msra.mxu0 0
        %4434 = vmatprep.subr.bf16.mxu0 0
        %4435 = vmatpush1.bf16.msra.mxu0 0
        %4436 = vmatprep.mubr.bf16.mxu0 0
        %4437 = vmatmul.mubr.bf16.gmra.mrb[0].mxu0 %v3937
        %v4438 = vpop.f32.mrb[0].mxu0
        %v4439 = vadd.f32 0.0, %v4438
        %v4440 = vpop.f32.mrb[0].mxu0
        %v4441 = vpop.f32.mrb[0].mxu0
        %v4442 = vadd.f32 0.0, %v4441
        %v4443 = vpop.f32.mrb[0].mxu0
        %4444 = vmatprep.mubr.bf16.mxu0 0
        %4445 = vmatmul.mubr.bf16.gmra.mrb[0].mxu0 %v3940
        %v4446 = vpop.f32.mrb[0].mxu0
        %v4447 = vadd.f32 0.0, %v4446
        %v4448 = vpop.f32.mrb[0].mxu0
        %v4449 = vpop.f32.mrb[0].mxu0
        %v4450 = vadd.f32 0.0, %v4449
        %v4451 = vpop.f32.mrb[0].mxu0
        %4452 = vmatprep.mubr.bf16.mxu0 0
        %4453 = vmatmul.mubr.bf16.gmra.mrb[0].mxu0 %v3943
        %v4454 = vpop.f32.mrb[0].mxu0
        %v4455 = vadd.f32 0.0, %v4454
        %v4456 = vpop.f32.mrb[0].mxu0
        %v4457 = vpop.f32.mrb[0].mxu0
        %v4458 = vadd.f32 0.0, %v4457
        %v4459 = vpop.f32.mrb[0].mxu0
        %4460 = vmatprep.mubr.bf16.mxu0 0
        %4461 = vmatmul.mubr.bf16.gmra.mrb[0].mxu0 %v3946
        %v4462 = vpop.f32.mrb[0].mxu0
        %v4463 = vadd.f32 0.0, %v4462
        %v4464 = vpop.f32.mrb[0].mxu0
        %v4465 = vpop.f32.mrb[0].mxu0
        %v4466 = vadd.f32 0.0, %v4465
        %v4467 = vpop.f32.mrb[0].mxu0
        %4468 = vmatprep.mubr.bf16.mxu0 0
        %4469 = vmatmul.mubr.bf16.gmra.mrb[0].mxu0 %v3949
        %v4470 = vpop.f32.mrb[0].mxu0
        %v4471 = vadd.f32 0.0, %v4470
        %v4472 = vpop.f32.mrb[0].mxu0
        %v4473 = vpop.f32.mrb[0].mxu0
        %v4474 = vadd.f32 0.0, %v4473
        %v4475 = vpop.f32.mrb[0].mxu0
        %4476 = vmatprep.mubr.bf16.mxu0 0
        %4477 = vmatmul.mubr.bf16.gmra.mrb[0].mxu0 %v3952
        %v4478 = vpop.f32.mrb[0].mxu0
        %v4479 = vadd.f32 0.0, %v4478
        %v4480 = vpop.f32.mrb[0].mxu0
        %v4481 = vpop.f32.mrb[0].mxu0
        %v4482 = vadd.f32 0.0, %v4481
        %v4483 = vpop.f32.mrb[0].mxu0
        %4484 = vmatprep.mubr.bf16.mxu0 0
        %4485 = vmatmul.mubr.bf16.gmra.mrb[0].mxu0 %v3955
        %v4486 = vpop.f32.mrb[0].mxu0
        %v4487 = vadd.f32 0.0, %v4486
        %v4488 = vpop.f32.mrb[0].mxu0
        %v4489 = vpop.f32.mrb[0].mxu0
        %v4490 = vadd.f32 0.0, %v4489
        %v4491 = vpop.f32.mrb[0].mxu0
        %4492 = vmatprep.mubr.bf16.mxu0 0
        %4493 = vmatmul.mubr.bf16.gmra.mrb[0].mxu0 %v3958
        %v4494 = vpop.f32.mrb[0].mxu0
        %v4495 = vadd.f32 0.0, %v4494
        %v4496 = vpop.f32.mrb[0].mxu0
        %v4497 = vpop.f32.mrb[0].mxu0
        %v4498 = vadd.f32 0.0, %v4497
        %v4499 = vpop.f32.mrb[0].mxu0
        %4500 = vmatprep.mubr.bf16.mxu0 0
        %4501 = vmatmul.mubr.bf16.gmra.mrb[0].mxu0 %v3961
        %v4502 = vpop.f32.mrb[0].mxu0
        %v4503 = vadd.f32 0.0, %v4502
        %v4504 = vpop.f32.mrb[0].mxu0
        %v4505 = vpop.f32.mrb[0].mxu0
        %v4506 = vadd.f32 0.0, %v4505
        %v4507 = vpop.f32.mrb[0].mxu0
        %4508 = vmatprep.mubr.bf16.mxu0 0
        %4509 = vmatmul.mubr.bf16.gmra.mrb[0].mxu0 %v3964
        %v4510 = vpop.f32.mrb[0].mxu0
        %v4511 = vadd.f32 0.0, %v4510
        %v4512 = vpop.f32.mrb[0].mxu0
        %v4513 = vpop.f32.mrb[0].mxu0
        %v4514 = vadd.f32 0.0, %v4513
        %v4515 = vpop.f32.mrb[0].mxu0
        %4516 = vmatprep.mubr.bf16.mxu0 0
        %4517 = vmatmul.mubr.bf16.gmra.mrb[0].mxu0 %v3967
        %v4518 = vpop.f32.mrb[0].mxu0
        %v4519 = vadd.f32 0.0, %v4518
        %v4520 = vpop.f32.mrb[0].mxu0
        %v4521 = vpop.f32.mrb[0].mxu0
        %v4522 = vadd.f32 0.0, %v4521
        %v4523 = vpop.f32.mrb[0].mxu0
        %4524 = vmatprep.mubr.bf16.mxu0 0
        %4525 = vmatmul.mubr.bf16.gmra.mrb[0].mxu0 %v3970
        %v4526 = vpop.f32.mrb[0].mxu0
        %v4527 = vadd.f32 0.0, %v4526
        %v4528 = vpop.f32.mrb[0].mxu0
        %v4529 = vpop.f32.mrb[0].mxu0
        %v4530 = vadd.f32 0.0, %v4529
        %v4531 = vpop.f32.mrb[0].mxu0
        %4532 = vmatprep.mubr.bf16.mxu0 0
        %4533 = vmatmul.mubr.bf16.gmra.mrb[0].mxu0 %v3973
        %v4534 = vpop.f32.mrb[0].mxu0
        %v4535 = vadd.f32 0.0, %v4534
        %v4536 = vpop.f32.mrb[0].mxu0
        %v4537 = vpop.f32.mrb[0].mxu0
        %v4538 = vadd.f32 0.0, %v4537
        %v4539 = vpop.f32.mrb[0].mxu0
        %4540 = vmatprep.mubr.bf16.mxu0 0
        %4541 = vmatmul.mubr.bf16.gmra.mrb[0].mxu0 %v3976
        %v4542 = vpop.f32.mrb[0].mxu0
        %v4543 = vadd.f32 0.0, %v4542
        %v4544 = vpop.f32.mrb[0].mxu0
        %v4545 = vpop.f32.mrb[0].mxu0
        %v4546 = vadd.f32 0.0, %v4545
        %v4547 = vpop.f32.mrb[0].mxu0
        %4548 = vmatprep.mubr.bf16.mxu0 0
        %4549 = vmatmul.mubr.bf16.gmra.mrb[0].mxu0 %v4189
        %v4550 = vpop.f32.mrb[0].mxu0
        %v4551 = vadd.f32 0.0, %v4550
        %v4552 = vpop.f32.mrb[0].mxu0
        %v4553 = vpop.f32.mrb[0].mxu0
        %v4554 = vadd.f32 0.0, %v4553
        %v4555 = vpop.f32.mrb[0].mxu0
        %4556 = vmatprep.mubr.bf16.mxu0 0
        %4557 = vmatmul.mubr.bf16.gmra.mrb[0].mxu0 %v4402
        %v4558 = vpop.f32.mrb[0].mxu0
        %v4559 = vadd.f32 0.0, %v4558
        %v4560 = vpop.f32.mrb[0].mxu0
        %v4561 = vpop.f32.mrb[0].mxu0
        %v4562 = vadd.f32 0.0, %v4561
        %v4563 = vpop.f32.mrb[0].mxu0
        %4564 = vdwg.mxu0
        %v4565 = vadd.f32 %v4352, %v4439
        %v4566 = vadd.f32 %v4353, %v4442
        %v4567 = vadd.f32 %v4354, %v4447
        %v4568 = vadd.f32 %v4355, %v4450
        %v4569 = vadd.f32 %v4356, %v4455
        %v4570 = vadd.f32 %v4357, %v4458
        %v4571 = vadd.f32 %v4358, %v4463
        %v4572 = vadd.f32 %v4359, %v4466
        %v4573 = vadd.f32 %v4360, %v4471
        %v4574 = vadd.f32 %v4361, %v4474
        %v4575 = vadd.f32 %v4362, %v4479
        %v4576 = vadd.f32 %v4363, %v4482
        %v4577 = vadd.f32 %v4364, %v4487
        %v4578 = vadd.f32 %v4365, %v4490
        %v4579 = vadd.f32 %v4366, %v4495
        %v4580 = vadd.f32 %v4367, %v4498
        %v4581 = vadd.f32 %v4368, %v4503
        %v4582 = vadd.f32 %v4369, %v4506
        %v4583 = vadd.f32 %v4370, %v4511
        %v4584 = vadd.f32 %v4371, %v4514
        %v4585 = vadd.f32 %v4372, %v4519
        %v4586 = vadd.f32 %v4373, %v4522
        %v4587 = vadd.f32 %v4374, %v4527
        %v4588 = vadd.f32 %v4375, %v4530
        %v4589 = vadd.f32 %v4376, %v4535
        %v4590 = vadd.f32 %v4377, %v4538
        %v4591 = vadd.f32 %v4378, %v4543
        %v4592 = vadd.f32 %v4379, %v4546
        %v4593 = vadd.f32 %v4380, %v4551
        %v4594 = vadd.f32 %v4381, %v4554
        %v4595 = vadd.f32 %v4382, %v4559
        %v4596 = vadd.f32 %v4383, %v4562
        %v4615 = vrot.slane %v3006, 1
        %v4616 = vrot.slane %v3007, 1
        %v4617 = vsel %vm970, %v4615, %v4616
        %v4618 = vrot.slane %v3008, 1
        %v4619 = vsel %vm970, %v4616, %v4618
        %v4620 = vrot.slane %v3010, 1
        %v4621 = vrot.slane %v3011, 1
        %v4622 = vsel %vm970, %v4620, %v4621
        %v4623 = vrot.slane %v3012, 1
        %v4624 = vsel %vm970, %v4621, %v4623
        %v4625 = vrot.slane %v3014, 1
        %v4626 = vrot.slane %v3015, 1
        %v4627 = vsel %vm970, %v4625, %v4626
        %v4628 = vrot.slane %v3016, 1
        %v4629 = vsel %vm970, %v4626, %v4628
        %v4630 = vrot.slane %v3018, 1
        %v4631 = vrot.slane %v3019, 1
        %v4632 = vsel %vm970, %v4630, %v4631
        %v4633 = vrot.slane %v3020, 1
        %v4634 = vsel %vm970, %v4631, %v4633
        %v4635 = vrot.slane %v3022, 1
        %v4636 = vrot.slane %v3023, 1
        %v4637 = vsel %vm970, %v4635, %v4636
        %v4638 = vrot.slane %v3024, 1
        %v4639 = vsel %vm970, %v4636, %v4638
        %v4640 = vrot.slane %v3026, 1
        %v4641 = vrot.slane %v3027, 1
        %v4642 = vsel %vm970, %v4640, %v4641
        %v4643 = vrot.slane %v3028, 1
        %v4644 = vsel %vm970, %v4641, %v4643
        %v4645 = vrot.slane %v3030, 1
        %v4646 = vrot.slane %v3031, 1
        %v4647 = vsel %vm970, %v4645, %v4646
        %v4648 = vrot.slane %v3032, 1
        %v4649 = vsel %vm970, %v4646, %v4648
        %v4650 = vrot.slane %v3034, 1
        %v4651 = vrot.slane %v3035, 1
        %v4652 = vsel %vm970, %v4650, %v4651
        %v4653 = vrot.slane %v3036, 1
        %v4654 = vsel %vm970, %v4651, %v4653
        %v4655 = vrot.slane %v3038, 1
        %v4656 = vrot.slane %v3039, 1
        %v4657 = vsel %vm970, %v4655, %v4656
        %v4658 = vrot.slane %v3040, 1
        %v4659 = vsel %vm970, %v4656, %v4658
        %v4660 = vrot.slane %v3042, 1
        %v4661 = vrot.slane %v3043, 1
        %v4662 = vsel %vm970, %v4660, %v4661
        %v4663 = vrot.slane %v3044, 1
        %v4664 = vsel %vm970, %v4661, %v4663
        %v4665 = vrot.slane %v3046, 1
        %v4666 = vrot.slane %v3047, 1
        %v4667 = vsel %vm970, %v4665, %v4666
        %v4668 = vrot.slane %v3048, 1
        %v4669 = vsel %vm970, %v4666, %v4668
        %v4670 = vrot.slane %v3050, 1
        %v4671 = vrot.slane %v3051, 1
        %v4672 = vsel %vm970, %v4670, %v4671
        %v4673 = vrot.slane %v3052, 1
        %v4674 = vsel %vm970, %v4671, %v4673
        %v4675 = vrot.slane %v3054, 1
        %v4676 = vrot.slane %v3055, 1
        %v4677 = vsel %vm970, %v4675, %v4676
        %v4678 = vrot.slane %v3056, 1
        %v4679 = vsel %vm970, %v4676, %v4678
        %v4680 = vrot.slane %v3058, 1
        %v4681 = vrot.slane %v3059, 1
        %v4682 = vsel %vm970, %v4680, %v4681
        %v4683 = vrot.slane %v3060, 1
        %v4684 = vsel %vm970, %v4681, %v4683
        %v4685 = vrot.slane %v3062, 1
        %v4686 = vrot.slane %v3063, 1
        %v4687 = vsel %vm970, %v4685, %v4686
        %v4688 = vrot.slane %v3064, 1
        %v4689 = vsel %vm970, %v4686, %v4688
        %v4690 = vrot.slane %v3066, 1
        %v4691 = vrot.slane %v3067, 1
        %v4692 = vsel %vm970, %v4690, %v4691
        %v4693 = vrot.slane %v3068, 1
        %v4694 = vsel %vm970, %v4691, %v4693
        %v4695 = vrot.slane %v3070, 1
        %v4696 = vrot.slane %v3071, 1
        %v4697 = vsel %vm970, %v4695, %v4696
        %v4698 = vrot.slane %v3072, 1
        %v4699 = vsel %vm970, %v4696, %v4698
        %v4700 = vrot.slane %v3074, 1
        %v4701 = vrot.slane %v3075, 1
        %v4702 = vsel %vm970, %v4700, %v4701
        %v4703 = vrot.slane %v3076, 1
        %v4704 = vsel %vm970, %v4701, %v4703
        %v4741 = vpack.c.bf16 %v4619, %v4617
        %v4742 = vpack.c.bf16 %v4624, %v4622
        %v4743 = vpack.c.bf16 %v4629, %v4627
        %v4744 = vpack.c.bf16 %v4634, %v4632
        %v4745 = vpack.c.bf16 %v4639, %v4637
        %v4746 = vpack.c.bf16 %v4644, %v4642
        %v4747 = vpack.c.bf16 %v4649, %v4647
        %v4748 = vpack.c.bf16 %v4654, %v4652
        %v4749 = vpack.c.bf16 %v4659, %v4657
        %v4750 = vpack.c.bf16 %v4664, %v4662
        %v4751 = vpack.c.bf16 %v4669, %v4667
        %v4752 = vpack.c.bf16 %v4674, %v4672
        %v4753 = vpack.c.bf16 %v4679, %v4677
        %v4754 = vpack.c.bf16 %v4684, %v4682
        %v4755 = vpack.c.bf16 %v4689, %v4687
        %v4756 = vpack.c.bf16 %v4694, %v4692
        %v4757 = vpack.c.bf16 %v4699, %v4697
        %v4758 = vpack.c.bf16 %v4704, %v4702
        %s4759 = scalar_lea.vmem %s2, 32
        %v4760 = vld [vmem:[%s4759] sm:$0xf]
        %v4761 = vld [vmem:[%s4759 + $0x4] sm:$0xf]
        %v4762 = vld [vmem:[%s4759 + $0x8] sm:$0xf]
        %v4763 = vld [vmem:[%s4759 + $0xc] sm:$0xf]
        %v4768 = vunpack.c.l.b16 %v4760
        %v4769 = vunpack.c.l.b16 %v4761
        %v4770 = vunpack.c.l.b16 %v4762
        %v4771 = vunpack.c.l.b16 %v4763
        %v4772 = vpack.c.b16 %v4769, %v4768
        %v4773 = vpack.c.b16 %v4771, %v4770
        %v4777 = vsel %vm317, %v4741, 0
        %v4780 = vsel %vm317, %v4742, 0
        %v4783 = vsel %vm317, %v4743, 0
        %v4786 = vsel %vm317, %v4744, 0
        %v4789 = vsel %vm317, %v4745, 0
        %v4792 = vsel %vm317, %v4746, 0
        %v4795 = vsel %vm317, %v4747, 0
        %v4798 = vsel %vm317, %v4748, 0
        %v4801 = vsel %vm317, %v4749, 0
        %v4804 = vsel %vm317, %v4750, 0
        %v4807 = vsel %vm317, %v4751, 0
        %v4810 = vsel %vm317, %v4752, 0
        %v4813 = vsel %vm317, %v4753, 0
        %v4816 = vsel %vm317, %v4754, 0
        %v4819 = vsel %vm317, %v4755, 0
        %v4822 = vsel %vm317, %v4756, 0
        %4824 = vmatprep.subr.bf16.mxu0 0
        %4825 = vmatpush1.bf16.msra.mxu0 %v4772
        %4826 = vmatprep.subr.bf16.mxu0 0
        %4827 = vmatpush1.bf16.msra.mxu0 %v4773
        %4828 = vmatprep.subr.bf16.mxu0 0
        %4829 = vmatpush1.bf16.msra.mxu0 0
        %4830 = vmatprep.subr.bf16.mxu0 0
        %4831 = vmatpush1.bf16.msra.mxu0 0
        %4832 = vmatprep.subr.bf16.mxu0 0
        %4833 = vmatpush1.bf16.msra.mxu0 0
        %4834 = vmatprep.subr.bf16.mxu0 0
        %4835 = vmatpush1.bf16.msra.mxu0 0
        %4836 = vmatprep.subr.bf16.mxu0 0
        %4837 = vmatpush1.bf16.msra.mxu0 0
        %4838 = vmatprep.subr.bf16.mxu0 0
        %4839 = vmatpush1.bf16.msra.mxu0 0
        %4840 = vmatprep.subr.bf16.mxu0 0
        %4841 = vmatpush1.bf16.msra.mxu0 0
        %4842 = vmatprep.subr.bf16.mxu0 0
        %4843 = vmatpush1.bf16.msra.mxu0 0
        %4844 = vmatprep.subr.bf16.mxu0 0
        %4845 = vmatpush1.bf16.msra.mxu0 0
        %4846 = vmatprep.subr.bf16.mxu0 0
        %4847 = vmatpush1.bf16.msra.mxu0 0
        %4848 = vmatprep.subr.bf16.mxu0 0
        %4849 = vmatpush1.bf16.msra.mxu0 0
        %4850 = vmatprep.subr.bf16.mxu0 0
        %4851 = vmatpush1.bf16.msra.mxu0 0
        %4852 = vmatprep.subr.bf16.mxu0 0
        %4853 = vmatpush1.bf16.msra.mxu0 0
        %4854 = vmatprep.subr.bf16.mxu0 0
        %4855 = vmatpush1.bf16.msra.mxu0 0
        %4856 = vmatprep.mubr.bf16.mxu0 0
        %4857 = vmatmul.mubr.bf16.gmra.mrb[0].mxu0 %v4777
        %v4858 = vpop.f32.mrb[0].mxu0
        %v4859 = vadd.f32 0.0, %v4858
        %v4860 = vpop.f32.mrb[0].mxu0
        %v4861 = vpop.f32.mrb[0].mxu0
        %v4862 = vadd.f32 0.0, %v4861
        %v4863 = vpop.f32.mrb[0].mxu0
        %4864 = vmatprep.mubr.bf16.mxu0 0
        %4865 = vmatmul.mubr.bf16.gmra.mrb[0].mxu0 %v4780
        %v4866 = vpop.f32.mrb[0].mxu0
        %v4867 = vadd.f32 0.0, %v4866
        %v4868 = vpop.f32.mrb[0].mxu0
        %v4869 = vpop.f32.mrb[0].mxu0
        %v4870 = vadd.f32 0.0, %v4869
        %v4871 = vpop.f32.mrb[0].mxu0
        %4872 = vmatprep.mubr.bf16.mxu0 0
        %4873 = vmatmul.mubr.bf16.gmra.mrb[0].mxu0 %v4783
        %v4874 = vpop.f32.mrb[0].mxu0
        %v4875 = vadd.f32 0.0, %v4874
        %v4876 = vpop.f32.mrb[0].mxu0
        %v4877 = vpop.f32.mrb[0].mxu0
        %v4878 = vadd.f32 0.0, %v4877
        %v4879 = vpop.f32.mrb[0].mxu0
        %4880 = vmatprep.mubr.bf16.mxu0 0
        %4881 = vmatmul.mubr.bf16.gmra.mrb[0].mxu0 %v4786
        %v4882 = vpop.f32.mrb[0].mxu0
        %v4883 = vadd.f32 0.0, %v4882
        %v4884 = vpop.f32.mrb[0].mxu0
        %v4885 = vpop.f32.mrb[0].mxu0
        %v4886 = vadd.f32 0.0, %v4885
        %v4887 = vpop.f32.mrb[0].mxu0
        %4888 = vmatprep.mubr.bf16.mxu0 0
        %4889 = vmatmul.mubr.bf16.gmra.mrb[0].mxu0 %v4789
        %v4890 = vpop.f32.mrb[0].mxu0
        %v4891 = vadd.f32 0.0, %v4890
        %v4892 = vpop.f32.mrb[0].mxu0
        %v4893 = vpop.f32.mrb[0].mxu0
        %v4894 = vadd.f32 0.0, %v4893
        %v4895 = vpop.f32.mrb[0].mxu0
        %4896 = vmatprep.mubr.bf16.mxu0 0
        %4897 = vmatmul.mubr.bf16.gmra.mrb[0].mxu0 %v4792
        %v4898 = vpop.f32.mrb[0].mxu0
        %v4899 = vadd.f32 0.0, %v4898
        %v4900 = vpop.f32.mrb[0].mxu0
        %v4901 = vpop.f32.mrb[0].mxu0
        %v4902 = vadd.f32 0.0, %v4901
        %v4903 = vpop.f32.mrb[0].mxu0
        %4904 = vmatprep.mubr.bf16.mxu0 0
        %4905 = vmatmul.mubr.bf16.gmra.mrb[0].mxu0 %v4795
        %v4906 = vpop.f32.mrb[0].mxu0
        %v4907 = vadd.f32 0.0, %v4906
        %v4908 = vpop.f32.mrb[0].mxu0
        %v4909 = vpop.f32.mrb[0].mxu0
        %v4910 = vadd.f32 0.0, %v4909
        %v4911 = vpop.f32.mrb[0].mxu0
        %4912 = vmatprep.mubr.bf16.mxu0 0
        %4913 = vmatmul.mubr.bf16.gmra.mrb[0].mxu0 %v4798
        %v4914 = vpop.f32.mrb[0].mxu0
        %v4915 = vadd.f32 0.0, %v4914
        %v4916 = vpop.f32.mrb[0].mxu0
        %v4917 = vpop.f32.mrb[0].mxu0
        %v4918 = vadd.f32 0.0, %v4917
        %v4919 = vpop.f32.mrb[0].mxu0
        %4920 = vmatprep.mubr.bf16.mxu0 0
        %4921 = vmatmul.mubr.bf16.gmra.mrb[0].mxu0 %v4801
        %v4922 = vpop.f32.mrb[0].mxu0
        %v4923 = vadd.f32 0.0, %v4922
        %v4924 = vpop.f32.mrb[0].mxu0
        %v4925 = vpop.f32.mrb[0].mxu0
        %v4926 = vadd.f32 0.0, %v4925
        %v4927 = vpop.f32.mrb[0].mxu0
        %4928 = vmatprep.mubr.bf16.mxu0 0
        %4929 = vmatmul.mubr.bf16.gmra.mrb[0].mxu0 %v4804
        %v4930 = vpop.f32.mrb[0].mxu0
        %v4931 = vadd.f32 0.0, %v4930
        %v4932 = vpop.f32.mrb[0].mxu0
        %v4933 = vpop.f32.mrb[0].mxu0
        %v4934 = vadd.f32 0.0, %v4933
        %v4935 = vpop.f32.mrb[0].mxu0
        %4936 = vmatprep.mubr.bf16.mxu0 0
        %4937 = vmatmul.mubr.bf16.gmra.mrb[0].mxu0 %v4807
        %v4938 = vpop.f32.mrb[0].mxu0
        %v4939 = vadd.f32 0.0, %v4938
        %v4940 = vpop.f32.mrb[0].mxu0
        %v4941 = vpop.f32.mrb[0].mxu0
        %v4942 = vadd.f32 0.0, %v4941
        %v4943 = vpop.f32.mrb[0].mxu0
        %4944 = vmatprep.mubr.bf16.mxu0 0
        %4945 = vmatmul.mubr.bf16.gmra.mrb[0].mxu0 %v4810
        %v4946 = vpop.f32.mrb[0].mxu0
        %v4947 = vadd.f32 0.0, %v4946
        %v4948 = vpop.f32.mrb[0].mxu0
        %v4949 = vpop.f32.mrb[0].mxu0
        %v4950 = vadd.f32 0.0, %v4949
        %v4951 = vpop.f32.mrb[0].mxu0
        %4952 = vmatprep.mubr.bf16.mxu0 0
        %4953 = vmatmul.mubr.bf16.gmra.mrb[0].mxu0 %v4813
        %v4954 = vpop.f32.mrb[0].mxu0
        %v4955 = vadd.f32 0.0, %v4954
        %v4956 = vpop.f32.mrb[0].mxu0
        %v4957 = vpop.f32.mrb[0].mxu0
        %v4958 = vadd.f32 0.0, %v4957
        %v4959 = vpop.f32.mrb[0].mxu0
        %4960 = vmatprep.mubr.bf16.mxu0 0
        %4961 = vmatmul.mubr.bf16.gmra.mrb[0].mxu0 %v4816
        %v4962 = vpop.f32.mrb[0].mxu0
        %v4963 = vadd.f32 0.0, %v4962
        %v4964 = vpop.f32.mrb[0].mxu0
        %v4965 = vpop.f32.mrb[0].mxu0
        %v4966 = vadd.f32 0.0, %v4965
        %v4967 = vpop.f32.mrb[0].mxu0
        %4968 = vmatprep.mubr.bf16.mxu0 0
        %4969 = vmatmul.mubr.bf16.gmra.mrb[0].mxu0 %v4819
        %v4970 = vpop.f32.mrb[0].mxu0
        %v4971 = vadd.f32 0.0, %v4970
        %v4972 = vpop.f32.mrb[0].mxu0
        %v4973 = vpop.f32.mrb[0].mxu0
        %v4974 = vadd.f32 0.0, %v4973
        %v4975 = vpop.f32.mrb[0].mxu0
        %4976 = vmatprep.mubr.bf16.mxu0 0
        %4977 = vmatmul.mubr.bf16.gmra.mrb[0].mxu0 %v4822
        %v4978 = vpop.f32.mrb[0].mxu0
        %v4979 = vadd.f32 0.0, %v4978
        %v4980 = vpop.f32.mrb[0].mxu0
        %v4981 = vpop.f32.mrb[0].mxu0
        %v4982 = vadd.f32 0.0, %v4981
        %v4983 = vpop.f32.mrb[0].mxu0
        %4984 = vdwg.mxu0
        %v4985 = vadd.f32 %v4565, %v4859
        %v4986 = vadd.f32 %v4566, %v4862
        %v4987 = vadd.f32 %v4567, %v4867
        %v4988 = vadd.f32 %v4568, %v4870
        %v4989 = vadd.f32 %v4569, %v4875
        %v4990 = vadd.f32 %v4570, %v4878
        %v4991 = vadd.f32 %v4571, %v4883
        %v4992 = vadd.f32 %v4572, %v4886
        %v4993 = vadd.f32 %v4573, %v4891
        %v4994 = vadd.f32 %v4574, %v4894
        %v4995 = vadd.f32 %v4575, %v4899
        %v4996 = vadd.f32 %v4576, %v4902
        %v4997 = vadd.f32 %v4577, %v4907
        %v4998 = vadd.f32 %v4578, %v4910
        %v4999 = vadd.f32 %v4579, %v4915
        %v5000 = vadd.f32 %v4580, %v4918
        %v5001 = vadd.f32 %v4581, %v4923
        %v5002 = vadd.f32 %v4582, %v4926
        %v5003 = vadd.f32 %v4583, %v4931
        %v5004 = vadd.f32 %v4584, %v4934
        %v5005 = vadd.f32 %v4585, %v4939
        %v5006 = vadd.f32 %v4586, %v4942
        %v5007 = vadd.f32 %v4587, %v4947
        %v5008 = vadd.f32 %v4588, %v4950
        %v5009 = vadd.f32 %v4589, %v4955
        %v5010 = vadd.f32 %v4590, %v4958
        %v5011 = vadd.f32 %v4591, %v4963
        %v5012 = vadd.f32 %v4592, %v4966
        %v5013 = vadd.f32 %v4593, %v4971
        %v5014 = vadd.f32 %v4594, %v4974
        %v5015 = vadd.f32 %v4595, %v4979
        %v5016 = vadd.f32 %v4596, %v4982
        %s5017 = scalar_lea.vmem %s2, 80
        %v5018 = vld [vmem:[%s5017] sm:$0xf]
        %v5019 = vld [vmem:[%s5017 + $0x4] sm:$0xf]
        %v5020 = vld [vmem:[%s5017 + $0x8] sm:$0xf]
        %v5021 = vld [vmem:[%s5017 + $0xc] sm:$0xf]
        %v5026 = vunpack.c.l.b16 %v5018
        %v5027 = vunpack.c.l.b16 %v5019
        %v5028 = vunpack.c.l.b16 %v5020
        %v5029 = vunpack.c.l.b16 %v5021
        %v5030 = vpack.c.b16 %v5027, %v5026
        %v5031 = vpack.c.b16 %v5029, %v5028
        %v5035 = vsel %vm317, %v4757, 0
        %5037 = vmatprep.subr.bf16.mxu0 0
        %5038 = vmatpush1.bf16.msra.mxu0 %v5030
        %5039 = vmatprep.subr.bf16.mxu0 0
        %5040 = vmatpush1.bf16.msra.mxu0 %v5031
        %5041 = vmatprep.subr.bf16.mxu0 0
        %5042 = vmatpush1.bf16.msra.mxu0 0
        %5043 = vmatprep.subr.bf16.mxu0 0
        %5044 = vmatpush1.bf16.msra.mxu0 0
        %5045 = vmatprep.subr.bf16.mxu0 0
        %5046 = vmatpush1.bf16.msra.mxu0 0
        %5047 = vmatprep.subr.bf16.mxu0 0
        %5048 = vmatpush1.bf16.msra.mxu0 0
        %5049 = vmatprep.subr.bf16.mxu0 0
        %5050 = vmatpush1.bf16.msra.mxu0 0
        %5051 = vmatprep.subr.bf16.mxu0 0
        %5052 = vmatpush1.bf16.msra.mxu0 0
        %5053 = vmatprep.subr.bf16.mxu0 0
        %5054 = vmatpush1.bf16.msra.mxu0 0
        %5055 = vmatprep.subr.bf16.mxu0 0
        %5056 = vmatpush1.bf16.msra.mxu0 0
        %5057 = vmatprep.subr.bf16.mxu0 0
        %5058 = vmatpush1.bf16.msra.mxu0 0
        %5059 = vmatprep.subr.bf16.mxu0 0
        %5060 = vmatpush1.bf16.msra.mxu0 0
        %5061 = vmatprep.subr.bf16.mxu0 0
        %5062 = vmatpush1.bf16.msra.mxu0 0
        %5063 = vmatprep.subr.bf16.mxu0 0
        %5064 = vmatpush1.bf16.msra.mxu0 0
        %5065 = vmatprep.subr.bf16.mxu0 0
        %5066 = vmatpush1.bf16.msra.mxu0 0
        %5067 = vmatprep.subr.bf16.mxu0 0
        %5068 = vmatpush1.bf16.msra.mxu0 0
        %5069 = vmatprep.mubr.bf16.mxu0 0
        %5070 = vmatmul.mubr.bf16.gmra.mrb[0].mxu0 %v4780
        %v5071 = vpop.f32.mrb[0].mxu0
        %v5072 = vadd.f32 0.0, %v5071
        %v5073 = vpop.f32.mrb[0].mxu0
        %v5074 = vpop.f32.mrb[0].mxu0
        %v5075 = vadd.f32 0.0, %v5074
        %v5076 = vpop.f32.mrb[0].mxu0
        %5077 = vmatprep.mubr.bf16.mxu0 0
        %5078 = vmatmul.mubr.bf16.gmra.mrb[0].mxu0 %v4783
        %v5079 = vpop.f32.mrb[0].mxu0
        %v5080 = vadd.f32 0.0, %v5079
        %v5081 = vpop.f32.mrb[0].mxu0
        %v5082 = vpop.f32.mrb[0].mxu0
        %v5083 = vadd.f32 0.0, %v5082
        %v5084 = vpop.f32.mrb[0].mxu0
        %5085 = vmatprep.mubr.bf16.mxu0 0
        %5086 = vmatmul.mubr.bf16.gmra.mrb[0].mxu0 %v4786
        %v5087 = vpop.f32.mrb[0].mxu0
        %v5088 = vadd.f32 0.0, %v5087
        %v5089 = vpop.f32.mrb[0].mxu0
        %v5090 = vpop.f32.mrb[0].mxu0
        %v5091 = vadd.f32 0.0, %v5090
        %v5092 = vpop.f32.mrb[0].mxu0
        %5093 = vmatprep.mubr.bf16.mxu0 0
        %5094 = vmatmul.mubr.bf16.gmra.mrb[0].mxu0 %v4789
        %v5095 = vpop.f32.mrb[0].mxu0
        %v5096 = vadd.f32 0.0, %v5095
        %v5097 = vpop.f32.mrb[0].mxu0
        %v5098 = vpop.f32.mrb[0].mxu0
        %v5099 = vadd.f32 0.0, %v5098
        %v5100 = vpop.f32.mrb[0].mxu0
        %5101 = vmatprep.mubr.bf16.mxu0 0
        %5102 = vmatmul.mubr.bf16.gmra.mrb[0].mxu0 %v4792
        %v5103 = vpop.f32.mrb[0].mxu0
        %v5104 = vadd.f32 0.0, %v5103
        %v5105 = vpop.f32.mrb[0].mxu0
        %v5106 = vpop.f32.mrb[0].mxu0
        %v5107 = vadd.f32 0.0, %v5106
        %v5108 = vpop.f32.mrb[0].mxu0
        %5109 = vmatprep.mubr.bf16.mxu0 0
        %5110 = vmatmul.mubr.bf16.gmra.mrb[0].mxu0 %v4795
        %v5111 = vpop.f32.mrb[0].mxu0
        %v5112 = vadd.f32 0.0, %v5111
        %v5113 = vpop.f32.mrb[0].mxu0
        %v5114 = vpop.f32.mrb[0].mxu0
        %v5115 = vadd.f32 0.0, %v5114
        %v5116 = vpop.f32.mrb[0].mxu0
        %5117 = vmatprep.mubr.bf16.mxu0 0
        %5118 = vmatmul.mubr.bf16.gmra.mrb[0].mxu0 %v4798
        %v5119 = vpop.f32.mrb[0].mxu0
        %v5120 = vadd.f32 0.0, %v5119
        %v5121 = vpop.f32.mrb[0].mxu0
        %v5122 = vpop.f32.mrb[0].mxu0
        %v5123 = vadd.f32 0.0, %v5122
        %v5124 = vpop.f32.mrb[0].mxu0
        %5125 = vmatprep.mubr.bf16.mxu0 0
        %5126 = vmatmul.mubr.bf16.gmra.mrb[0].mxu0 %v4801
        %v5127 = vpop.f32.mrb[0].mxu0
        %v5128 = vadd.f32 0.0, %v5127
        %v5129 = vpop.f32.mrb[0].mxu0
        %v5130 = vpop.f32.mrb[0].mxu0
        %v5131 = vadd.f32 0.0, %v5130
        %v5132 = vpop.f32.mrb[0].mxu0
        %5133 = vmatprep.mubr.bf16.mxu0 0
        %5134 = vmatmul.mubr.bf16.gmra.mrb[0].mxu0 %v4804
        %v5135 = vpop.f32.mrb[0].mxu0
        %v5136 = vadd.f32 0.0, %v5135
        %v5137 = vpop.f32.mrb[0].mxu0
        %v5138 = vpop.f32.mrb[0].mxu0
        %v5139 = vadd.f32 0.0, %v5138
        %v5140 = vpop.f32.mrb[0].mxu0
        %5141 = vmatprep.mubr.bf16.mxu0 0
        %5142 = vmatmul.mubr.bf16.gmra.mrb[0].mxu0 %v4807
        %v5143 = vpop.f32.mrb[0].mxu0
        %v5144 = vadd.f32 0.0, %v5143
        %v5145 = vpop.f32.mrb[0].mxu0
        %v5146 = vpop.f32.mrb[0].mxu0
        %v5147 = vadd.f32 0.0, %v5146
        %v5148 = vpop.f32.mrb[0].mxu0
        %5149 = vmatprep.mubr.bf16.mxu0 0
        %5150 = vmatmul.mubr.bf16.gmra.mrb[0].mxu0 %v4810
        %v5151 = vpop.f32.mrb[0].mxu0
        %v5152 = vadd.f32 0.0, %v5151
        %v5153 = vpop.f32.mrb[0].mxu0
        %v5154 = vpop.f32.mrb[0].mxu0
        %v5155 = vadd.f32 0.0, %v5154
        %v5156 = vpop.f32.mrb[0].mxu0
        %5157 = vmatprep.mubr.bf16.mxu0 0
        %5158 = vmatmul.mubr.bf16.gmra.mrb[0].mxu0 %v4813
        %v5159 = vpop.f32.mrb[0].mxu0
        %v5160 = vadd.f32 0.0, %v5159
        %v5161 = vpop.f32.mrb[0].mxu0
        %v5162 = vpop.f32.mrb[0].mxu0
        %v5163 = vadd.f32 0.0, %v5162
        %v5164 = vpop.f32.mrb[0].mxu0
        %5165 = vmatprep.mubr.bf16.mxu0 0
        %5166 = vmatmul.mubr.bf16.gmra.mrb[0].mxu0 %v4816
        %v5167 = vpop.f32.mrb[0].mxu0
        %v5168 = vadd.f32 0.0, %v5167
        %v5169 = vpop.f32.mrb[0].mxu0
        %v5170 = vpop.f32.mrb[0].mxu0
        %v5171 = vadd.f32 0.0, %v5170
        %v5172 = vpop.f32.mrb[0].mxu0
        %5173 = vmatprep.mubr.bf16.mxu0 0
        %5174 = vmatmul.mubr.bf16.gmra.mrb[0].mxu0 %v4819
        %v5175 = vpop.f32.mrb[0].mxu0
        %v5176 = vadd.f32 0.0, %v5175
        %v5177 = vpop.f32.mrb[0].mxu0
        %v5178 = vpop.f32.mrb[0].mxu0
        %v5179 = vadd.f32 0.0, %v5178
        %v5180 = vpop.f32.mrb[0].mxu0
        %5181 = vmatprep.mubr.bf16.mxu0 0
        %5182 = vmatmul.mubr.bf16.gmra.mrb[0].mxu0 %v4822
        %v5183 = vpop.f32.mrb[0].mxu0
        %v5184 = vadd.f32 0.0, %v5183
        %v5185 = vpop.f32.mrb[0].mxu0
        %v5186 = vpop.f32.mrb[0].mxu0
        %v5187 = vadd.f32 0.0, %v5186
        %v5188 = vpop.f32.mrb[0].mxu0
        %5189 = vmatprep.mubr.bf16.mxu0 0
        %5190 = vmatmul.mubr.bf16.gmra.mrb[0].mxu0 %v5035
        %v5191 = vpop.f32.mrb[0].mxu0
        %v5192 = vadd.f32 0.0, %v5191
        %v5193 = vpop.f32.mrb[0].mxu0
        %v5194 = vpop.f32.mrb[0].mxu0
        %v5195 = vadd.f32 0.0, %v5194
        %v5196 = vpop.f32.mrb[0].mxu0
        %5197 = vdwg.mxu0
        %v5198 = vadd.f32 %v4985, %v5072
        %v5199 = vadd.f32 %v4986, %v5075
        %v5200 = vadd.f32 %v4987, %v5080
        %v5201 = vadd.f32 %v4988, %v5083
        %v5202 = vadd.f32 %v4989, %v5088
        %v5203 = vadd.f32 %v4990, %v5091
        %v5204 = vadd.f32 %v4991, %v5096
        %v5205 = vadd.f32 %v4992, %v5099
        %v5206 = vadd.f32 %v4993, %v5104
        %v5207 = vadd.f32 %v4994, %v5107
        %v5208 = vadd.f32 %v4995, %v5112
        %v5209 = vadd.f32 %v4996, %v5115
        %v5210 = vadd.f32 %v4997, %v5120
        %v5211 = vadd.f32 %v4998, %v5123
        %v5212 = vadd.f32 %v4999, %v5128
        %v5213 = vadd.f32 %v5000, %v5131
        %v5214 = vadd.f32 %v5001, %v5136
        %v5215 = vadd.f32 %v5002, %v5139
        %v5216 = vadd.f32 %v5003, %v5144
        %v5217 = vadd.f32 %v5004, %v5147
        %v5218 = vadd.f32 %v5005, %v5152
        %v5219 = vadd.f32 %v5006, %v5155
        %v5220 = vadd.f32 %v5007, %v5160
        %v5221 = vadd.f32 %v5008, %v5163
        %v5222 = vadd.f32 %v5009, %v5168
        %v5223 = vadd.f32 %v5010, %v5171
        %v5224 = vadd.f32 %v5011, %v5176
        %v5225 = vadd.f32 %v5012, %v5179
        %v5226 = vadd.f32 %v5013, %v5184
        %v5227 = vadd.f32 %v5014, %v5187
        %v5228 = vadd.f32 %v5015, %v5192
        %v5229 = vadd.f32 %v5016, %v5195
        %s5230 = scalar_lea.vmem %s2, 128
        %v5231 = vld [vmem:[%s5230] sm:$0xf]
        %v5232 = vld [vmem:[%s5230 + $0x4] sm:$0xf]
        %v5233 = vld [vmem:[%s5230 + $0x8] sm:$0xf]
        %v5234 = vld [vmem:[%s5230 + $0xc] sm:$0xf]
        %v5239 = vunpack.c.l.b16 %v5231
        %v5240 = vunpack.c.l.b16 %v5232
        %v5241 = vunpack.c.l.b16 %v5233
        %v5242 = vunpack.c.l.b16 %v5234
        %v5243 = vpack.c.b16 %v5240, %v5239
        %v5244 = vpack.c.b16 %v5242, %v5241
        %v5248 = vsel %vm317, %v4758, 0
        %5250 = vmatprep.subr.bf16.mxu0 0
        %5251 = vmatpush1.bf16.msra.mxu0 %v5243
        %5252 = vmatprep.subr.bf16.mxu0 0
        %5253 = vmatpush1.bf16.msra.mxu0 %v5244
        %5254 = vmatprep.subr.bf16.mxu0 0
        %5255 = vmatpush1.bf16.msra.mxu0 0
        %5256 = vmatprep.subr.bf16.mxu0 0
        %5257 = vmatpush1.bf16.msra.mxu0 0
        %5258 = vmatprep.subr.bf16.mxu0 0
        %5259 = vmatpush1.bf16.msra.mxu0 0
        %5260 = vmatprep.subr.bf16.mxu0 0
        %5261 = vmatpush1.bf16.msra.mxu0 0
        %5262 = vmatprep.subr.bf16.mxu0 0
        %5263 = vmatpush1.bf16.msra.mxu0 0
        %5264 = vmatprep.subr.bf16.mxu0 0
        %5265 = vmatpush1.bf16.msra.mxu0 0
        %5266 = vmatprep.subr.bf16.mxu0 0
        %5267 = vmatpush1.bf16.msra.mxu0 0
        %5268 = vmatprep.subr.bf16.mxu0 0
        %5269 = vmatpush1.bf16.msra.mxu0 0
        %5270 = vmatprep.subr.bf16.mxu0 0
        %5271 = vmatpush1.bf16.msra.mxu0 0
        %5272 = vmatprep.subr.bf16.mxu0 0
        %5273 = vmatpush1.bf16.msra.mxu0 0
        %5274 = vmatprep.subr.bf16.mxu0 0
        %5275 = vmatpush1.bf16.msra.mxu0 0
        %5276 = vmatprep.subr.bf16.mxu0 0
        %5277 = vmatpush1.bf16.msra.mxu0 0
        %5278 = vmatprep.subr.bf16.mxu0 0
        %5279 = vmatpush1.bf16.msra.mxu0 0
        %5280 = vmatprep.subr.bf16.mxu0 0
        %5281 = vmatpush1.bf16.msra.mxu0 0
        %5282 = vmatprep.mubr.bf16.mxu0 0
        %5283 = vmatmul.mubr.bf16.gmra.mrb[0].mxu0 %v4783
        %v5284 = vpop.f32.mrb[0].mxu0
        %v5285 = vadd.f32 0.0, %v5284
        %v5286 = vpop.f32.mrb[0].mxu0
        %v5287 = vpop.f32.mrb[0].mxu0
        %v5288 = vadd.f32 0.0, %v5287
        %v5289 = vpop.f32.mrb[0].mxu0
        %5290 = vmatprep.mubr.bf16.mxu0 0
        %5291 = vmatmul.mubr.bf16.gmra.mrb[0].mxu0 %v4786
        %v5292 = vpop.f32.mrb[0].mxu0
        %v5293 = vadd.f32 0.0, %v5292
        %v5294 = vpop.f32.mrb[0].mxu0
        %v5295 = vpop.f32.mrb[0].mxu0
        %v5296 = vadd.f32 0.0, %v5295
        %v5297 = vpop.f32.mrb[0].mxu0
        %5298 = vmatprep.mubr.bf16.mxu0 0
        %5299 = vmatmul.mubr.bf16.gmra.mrb[0].mxu0 %v4789
        %v5300 = vpop.f32.mrb[0].mxu0
        %v5301 = vadd.f32 0.0, %v5300
        %v5302 = vpop.f32.mrb[0].mxu0
        %v5303 = vpop.f32.mrb[0].mxu0
        %v5304 = vadd.f32 0.0, %v5303
        %v5305 = vpop.f32.mrb[0].mxu0
        %5306 = vmatprep.mubr.bf16.mxu0 0
        %5307 = vmatmul.mubr.bf16.gmra.mrb[0].mxu0 %v4792
        %v5308 = vpop.f32.mrb[0].mxu0
        %v5309 = vadd.f32 0.0, %v5308
        %v5310 = vpop.f32.mrb[0].mxu0
        %v5311 = vpop.f32.mrb[0].mxu0
        %v5312 = vadd.f32 0.0, %v5311
        %v5313 = vpop.f32.mrb[0].mxu0
        %5314 = vmatprep.mubr.bf16.mxu0 0
        %5315 = vmatmul.mubr.bf16.gmra.mrb[0].mxu0 %v4795
        %v5316 = vpop.f32.mrb[0].mxu0
        %v5317 = vadd.f32 0.0, %v5316
        %v5318 = vpop.f32.mrb[0].mxu0
        %v5319 = vpop.f32.mrb[0].mxu0
        %v5320 = vadd.f32 0.0, %v5319
        %v5321 = vpop.f32.mrb[0].mxu0
        %5322 = vmatprep.mubr.bf16.mxu0 0
        %5323 = vmatmul.mubr.bf16.gmra.mrb[0].mxu0 %v4798
        %v5324 = vpop.f32.mrb[0].mxu0
        %v5325 = vadd.f32 0.0, %v5324
        %v5326 = vpop.f32.mrb[0].mxu0
        %v5327 = vpop.f32.mrb[0].mxu0
        %v5328 = vadd.f32 0.0, %v5327
        %v5329 = vpop.f32.mrb[0].mxu0
        %5330 = vmatprep.mubr.bf16.mxu0 0
        %5331 = vmatmul.mubr.bf16.gmra.mrb[0].mxu0 %v4801
        %v5332 = vpop.f32.mrb[0].mxu0
        %v5333 = vadd.f32 0.0, %v5332
        %v5334 = vpop.f32.mrb[0].mxu0
        %v5335 = vpop.f32.mrb[0].mxu0
        %v5336 = vadd.f32 0.0, %v5335
        %v5337 = vpop.f32.mrb[0].mxu0
        %5338 = vmatprep.mubr.bf16.mxu0 0
        %5339 = vmatmul.mubr.bf16.gmra.mrb[0].mxu0 %v4804
        %v5340 = vpop.f32.mrb[0].mxu0
        %v5341 = vadd.f32 0.0, %v5340
        %v5342 = vpop.f32.mrb[0].mxu0
        %v5343 = vpop.f32.mrb[0].mxu0
        %v5344 = vadd.f32 0.0, %v5343
        %v5345 = vpop.f32.mrb[0].mxu0
        %5346 = vmatprep.mubr.bf16.mxu0 0
        %5347 = vmatmul.mubr.bf16.gmra.mrb[0].mxu0 %v4807
        %v5348 = vpop.f32.mrb[0].mxu0
        %v5349 = vadd.f32 0.0, %v5348
        %v5350 = vpop.f32.mrb[0].mxu0
        %v5351 = vpop.f32.mrb[0].mxu0
        %v5352 = vadd.f32 0.0, %v5351
        %v5353 = vpop.f32.mrb[0].mxu0
        %5354 = vmatprep.mubr.bf16.mxu0 0
        %5355 = vmatmul.mubr.bf16.gmra.mrb[0].mxu0 %v4810
        %v5356 = vpop.f32.mrb[0].mxu0
        %v5357 = vadd.f32 0.0, %v5356
        %v5358 = vpop.f32.mrb[0].mxu0
        %v5359 = vpop.f32.mrb[0].mxu0
        %v5360 = vadd.f32 0.0, %v5359
        %v5361 = vpop.f32.mrb[0].mxu0
        %5362 = vmatprep.mubr.bf16.mxu0 0
        %5363 = vmatmul.mubr.bf16.gmra.mrb[0].mxu0 %v4813
        %v5364 = vpop.f32.mrb[0].mxu0
        %v5365 = vadd.f32 0.0, %v5364
        %v5366 = vpop.f32.mrb[0].mxu0
        %v5367 = vpop.f32.mrb[0].mxu0
        %v5368 = vadd.f32 0.0, %v5367
        %v5369 = vpop.f32.mrb[0].mxu0
        %5370 = vmatprep.mubr.bf16.mxu0 0
        %5371 = vmatmul.mubr.bf16.gmra.mrb[0].mxu0 %v4816
        %v5372 = vpop.f32.mrb[0].mxu0
        %v5373 = vadd.f32 0.0, %v5372
        %v5374 = vpop.f32.mrb[0].mxu0
        %v5375 = vpop.f32.mrb[0].mxu0
        %v5376 = vadd.f32 0.0, %v5375
        %v5377 = vpop.f32.mrb[0].mxu0
        %5378 = vmatprep.mubr.bf16.mxu0 0
        %5379 = vmatmul.mubr.bf16.gmra.mrb[0].mxu0 %v4819
        %v5380 = vpop.f32.mrb[0].mxu0
        %v5381 = vadd.f32 0.0, %v5380
        %v5382 = vpop.f32.mrb[0].mxu0
        %v5383 = vpop.f32.mrb[0].mxu0
        %v5384 = vadd.f32 0.0, %v5383
        %v5385 = vpop.f32.mrb[0].mxu0
        %5386 = vmatprep.mubr.bf16.mxu0 0
        %5387 = vmatmul.mubr.bf16.gmra.mrb[0].mxu0 %v4822
        %v5388 = vpop.f32.mrb[0].mxu0
        %v5389 = vadd.f32 0.0, %v5388
        %v5390 = vpop.f32.mrb[0].mxu0
        %v5391 = vpop.f32.mrb[0].mxu0
        %v5392 = vadd.f32 0.0, %v5391
        %v5393 = vpop.f32.mrb[0].mxu0
        %5394 = vmatprep.mubr.bf16.mxu0 0
        %5395 = vmatmul.mubr.bf16.gmra.mrb[0].mxu0 %v5035
        %v5396 = vpop.f32.mrb[0].mxu0
        %v5397 = vadd.f32 0.0, %v5396
        %v5398 = vpop.f32.mrb[0].mxu0
        %v5399 = vpop.f32.mrb[0].mxu0
        %v5400 = vadd.f32 0.0, %v5399
        %v5401 = vpop.f32.mrb[0].mxu0
        %5402 = vmatprep.mubr.bf16.mxu0 0
        %5403 = vmatmul.mubr.bf16.gmra.mrb[0].mxu0 %v5248
        %v5404 = vpop.f32.mrb[0].mxu0
        %v5405 = vadd.f32 0.0, %v5404
        %v5406 = vpop.f32.mrb[0].mxu0
        %v5407 = vpop.f32.mrb[0].mxu0
        %v5408 = vadd.f32 0.0, %v5407
        %v5409 = vpop.f32.mrb[0].mxu0
        %5410 = vdwg.mxu0
        %v5411 = vadd.f32 %v5198, %v5285
        %v5412 = vadd.f32 %v5199, %v5288
        %v5413 = vadd.f32 %v5200, %v5293
        %v5414 = vadd.f32 %v5201, %v5296
        %v5415 = vadd.f32 %v5202, %v5301
        %v5416 = vadd.f32 %v5203, %v5304
        %v5417 = vadd.f32 %v5204, %v5309
        %v5418 = vadd.f32 %v5205, %v5312
        %v5419 = vadd.f32 %v5206, %v5317
        %v5420 = vadd.f32 %v5207, %v5320
        %v5421 = vadd.f32 %v5208, %v5325
        %v5422 = vadd.f32 %v5209, %v5328
        %v5423 = vadd.f32 %v5210, %v5333
        %v5424 = vadd.f32 %v5211, %v5336
        %v5425 = vadd.f32 %v5212, %v5341
        %v5426 = vadd.f32 %v5213, %v5344
        %v5427 = vadd.f32 %v5214, %v5349
        %v5428 = vadd.f32 %v5215, %v5352
        %v5429 = vadd.f32 %v5216, %v5357
        %v5430 = vadd.f32 %v5217, %v5360
        %v5431 = vadd.f32 %v5218, %v5365
        %v5432 = vadd.f32 %v5219, %v5368
        %v5433 = vadd.f32 %v5220, %v5373
        %v5434 = vadd.f32 %v5221, %v5376
        %v5435 = vadd.f32 %v5222, %v5381
        %v5436 = vadd.f32 %v5223, %v5384
        %v5437 = vadd.f32 %v5224, %v5389
        %v5438 = vadd.f32 %v5225, %v5392
        %v5439 = vadd.f32 %v5226, %v5397
        %v5440 = vadd.f32 %v5227, %v5400
        %v5441 = vadd.f32 %v5228, %v5405
        %v5442 = vadd.f32 %v5229, %v5408
        %v5443 = vadd.f32 %v5411, %v978
        %v5444 = vadd.f32 %v5412, %v980
        %v5445 = vadd.f32 %v5413, %v983
        %v5446 = vadd.f32 %v5414, %v985
        %v5447 = vadd.f32 %v5415, %v988
        %v5448 = vadd.f32 %v5416, %v990
        %v5449 = vadd.f32 %v5417, %v993
        %v5450 = vadd.f32 %v5418, %v995
        %v5451 = vadd.f32 %v5419, %v998
        %v5452 = vadd.f32 %v5420, %v1000
        %v5453 = vadd.f32 %v5421, %v1003
        %v5454 = vadd.f32 %v5422, %v1005
        %v5455 = vadd.f32 %v5423, %v1008
        %v5456 = vadd.f32 %v5424, %v1010
        %v5457 = vadd.f32 %v5425, %v1013
        %v5458 = vadd.f32 %v5426, %v1015
        %v5459 = vadd.f32 %v5427, %v1018
        %v5460 = vadd.f32 %v5428, %v1020
        %v5461 = vadd.f32 %v5429, %v1023
        %v5462 = vadd.f32 %v5430, %v1025
        %v5463 = vadd.f32 %v5431, %v1028
        %v5464 = vadd.f32 %v5432, %v1030
        %v5465 = vadd.f32 %v5433, %v1033
        %v5466 = vadd.f32 %v5434, %v1035
        %v5467 = vadd.f32 %v5435, %v1038
        %v5468 = vadd.f32 %v5436, %v1040
        %v5469 = vadd.f32 %v5437, %v1043
        %v5470 = vadd.f32 %v5438, %v1045
        %v5471 = vadd.f32 %v5439, %v1048
        %v5472 = vadd.f32 %v5440, %v1050
        %v5473 = vadd.f32 %v5441, %v1053
        %v5474 = vadd.f32 %v5442, %v1055
        %v5475 = vsel %vm317, %v5443, 0.0
        %v5476 = vsel %vm317, %v5444, 0.0
        %v5477 = vadd.f32 %v5475, %v5476
        %v5478 = vsel %vm317, %v5445, 0.0
        %v5479 = vadd.f32 %v5477, %v5478
        %v5480 = vsel %vm317, %v5446, 0.0
        %v5481 = vadd.f32 %v5479, %v5480
        %v5482 = vsel %vm317, %v5447, 0.0
        %v5483 = vadd.f32 %v5481, %v5482
        %v5484 = vsel %vm317, %v5448, 0.0
        %v5485 = vadd.f32 %v5483, %v5484
        %v5486 = vsel %vm317, %v5449, 0.0
        %v5487 = vadd.f32 %v5485, %v5486
        %v5488 = vsel %vm317, %v5450, 0.0
        %v5489 = vadd.f32 %v5487, %v5488
        %v5490 = vsel %vm317, %v5451, 0.0
        %v5491 = vadd.f32 %v5489, %v5490
        %v5492 = vsel %vm317, %v5452, 0.0
        %v5493 = vadd.f32 %v5491, %v5492
        %v5494 = vsel %vm317, %v5453, 0.0
        %v5495 = vadd.f32 %v5493, %v5494
        %v5496 = vsel %vm317, %v5454, 0.0
        %v5497 = vadd.f32 %v5495, %v5496
        %v5498 = vsel %vm317, %v5455, 0.0
        %v5499 = vadd.f32 %v5497, %v5498
        %v5500 = vsel %vm317, %v5456, 0.0
        %v5501 = vadd.f32 %v5499, %v5500
        %v5502 = vsel %vm317, %v5457, 0.0
        %v5503 = vadd.f32 %v5501, %v5502
        %v5504 = vsel %vm317, %v5458, 0.0
        %v5505 = vadd.f32 %v5503, %v5504
        %v5506 = vsel %vm317, %v5459, 0.0
        %v5507 = vadd.f32 %v5505, %v5506
        %v5508 = vsel %vm317, %v5460, 0.0
        %v5509 = vadd.f32 %v5507, %v5508
        %v5510 = vsel %vm317, %v5461, 0.0
        %v5511 = vadd.f32 %v5509, %v5510
        %v5512 = vsel %vm317, %v5462, 0.0
        %v5513 = vadd.f32 %v5511, %v5512
        %v5514 = vsel %vm317, %v5463, 0.0
        %v5515 = vadd.f32 %v5513, %v5514
        %v5516 = vsel %vm317, %v5464, 0.0
        %v5517 = vadd.f32 %v5515, %v5516
        %v5518 = vsel %vm317, %v5465, 0.0
        %v5519 = vadd.f32 %v5517, %v5518
        %v5520 = vsel %vm317, %v5466, 0.0
        %v5521 = vadd.f32 %v5519, %v5520
        %v5522 = vsel %vm317, %v5467, 0.0
        %v5523 = vadd.f32 %v5521, %v5522
        %v5524 = vsel %vm317, %v5468, 0.0
        %v5525 = vadd.f32 %v5523, %v5524
        %v5526 = vsel %vm317, %v5469, 0.0
        %v5527 = vadd.f32 %v5525, %v5526
        %v5528 = vsel %vm317, %v5470, 0.0
        %v5529 = vadd.f32 %v5527, %v5528
        %v5530 = vsel %vm317, %v5471, 0.0
        %v5531 = vadd.f32 %v5529, %v5530
        %v5532 = vsel %vm317, %v5472, 0.0
        %v5533 = vadd.f32 %v5531, %v5532
        %v5534 = vsel %vm317, %v5473, 0.0
        %v5535 = vadd.f32 %v5533, %v5534
        %v5536 = vsel %vm317, %v5474, 0.0
        %v5537 = vadd.f32 %v5535, %v5536
        %v5538 = vrot.slane %v5537, 4
        %v5539 = vadd.f32 %v5537, %v5538
        %v5540 = vrot.slane %v5539, 2
        %v5541 = vadd.f32 %v5539, %v5540
        %v5542 = vrot.slane %v5541, 1
        %v5543 = vadd.f32 %v5541, %v5542
        %v5544 = vmul.f32 %v5543, %v2697
        %v5545 = vsub.f32 %v5443, %v5544
        %v5546 = vsub.f32 %v5444, %v5544
        %v5547 = vsub.f32 %v5445, %v5544
        %v5548 = vsub.f32 %v5446, %v5544
        %v5549 = vsub.f32 %v5447, %v5544
        %v5550 = vsub.f32 %v5448, %v5544
        %v5551 = vsub.f32 %v5449, %v5544
        %v5552 = vsub.f32 %v5450, %v5544
        %v5553 = vsub.f32 %v5451, %v5544
        %v5554 = vsub.f32 %v5452, %v5544
        %v5555 = vsub.f32 %v5453, %v5544
        %v5556 = vsub.f32 %v5454, %v5544
        %v5557 = vsub.f32 %v5455, %v5544
        %v5558 = vsub.f32 %v5456, %v5544
        %v5559 = vsub.f32 %v5457, %v5544
        %v5560 = vsub.f32 %v5458, %v5544
        %v5561 = vsub.f32 %v5459, %v5544
        %v5562 = vsub.f32 %v5460, %v5544
        %v5563 = vsub.f32 %v5461, %v5544
        %v5564 = vsub.f32 %v5462, %v5544
        %v5565 = vsub.f32 %v5463, %v5544
        %v5566 = vsub.f32 %v5464, %v5544
        %v5567 = vsub.f32 %v5465, %v5544
        %v5568 = vsub.f32 %v5466, %v5544
        %v5569 = vsub.f32 %v5467, %v5544
        %v5570 = vsub.f32 %v5468, %v5544
        %v5571 = vsub.f32 %v5469, %v5544
        %v5572 = vsub.f32 %v5470, %v5544
        %v5573 = vsub.f32 %v5471, %v5544
        %v5574 = vsub.f32 %v5472, %v5544
        %v5575 = vsub.f32 %v5473, %v5544
        %v5576 = vsub.f32 %v5474, %v5544
        %v5577 = vmul.f32 %v5545, %v5545
        %v5578 = vmul.f32 %v5546, %v5546
        %v5579 = vmul.f32 %v5547, %v5547
        %v5580 = vmul.f32 %v5548, %v5548
        %v5581 = vmul.f32 %v5549, %v5549
        %v5582 = vmul.f32 %v5550, %v5550
        %v5583 = vmul.f32 %v5551, %v5551
        %v5584 = vmul.f32 %v5552, %v5552
        %v5585 = vmul.f32 %v5553, %v5553
        %v5586 = vmul.f32 %v5554, %v5554
        %v5587 = vmul.f32 %v5555, %v5555
        %v5588 = vmul.f32 %v5556, %v5556
        %v5589 = vmul.f32 %v5557, %v5557
        %v5590 = vmul.f32 %v5558, %v5558
        %v5591 = vmul.f32 %v5559, %v5559
        %v5592 = vmul.f32 %v5560, %v5560
        %v5593 = vmul.f32 %v5561, %v5561
        %v5594 = vmul.f32 %v5562, %v5562
        %v5595 = vmul.f32 %v5563, %v5563
        %v5596 = vmul.f32 %v5564, %v5564
        %v5597 = vmul.f32 %v5565, %v5565
        %v5598 = vmul.f32 %v5566, %v5566
        %v5599 = vmul.f32 %v5567, %v5567
        %v5600 = vmul.f32 %v5568, %v5568
        %v5601 = vmul.f32 %v5569, %v5569
        %v5602 = vmul.f32 %v5570, %v5570
        %v5603 = vmul.f32 %v5571, %v5571
        %v5604 = vmul.f32 %v5572, %v5572
        %v5605 = vmul.f32 %v5573, %v5573
        %v5606 = vmul.f32 %v5574, %v5574
        %v5607 = vmul.f32 %v5575, %v5575
        %v5608 = vmul.f32 %v5576, %v5576
        %v5609 = vsel %vm317, %v5577, 0.0
        %v5610 = vsel %vm317, %v5578, 0.0
        %v5611 = vadd.f32 %v5609, %v5610
        %v5612 = vsel %vm317, %v5579, 0.0
        %v5613 = vadd.f32 %v5611, %v5612
        %v5614 = vsel %vm317, %v5580, 0.0
        %v5615 = vadd.f32 %v5613, %v5614
        %v5616 = vsel %vm317, %v5581, 0.0
        %v5617 = vadd.f32 %v5615, %v5616
        %v5618 = vsel %vm317, %v5582, 0.0
        %v5619 = vadd.f32 %v5617, %v5618
        %v5620 = vsel %vm317, %v5583, 0.0
        %v5621 = vadd.f32 %v5619, %v5620
        %v5622 = vsel %vm317, %v5584, 0.0
        %v5623 = vadd.f32 %v5621, %v5622
        %v5624 = vsel %vm317, %v5585, 0.0
        %v5625 = vadd.f32 %v5623, %v5624
        %v5626 = vsel %vm317, %v5586, 0.0
        %v5627 = vadd.f32 %v5625, %v5626
        %v5628 = vsel %vm317, %v5587, 0.0
        %v5629 = vadd.f32 %v5627, %v5628
        %v5630 = vsel %vm317, %v5588, 0.0
        %v5631 = vadd.f32 %v5629, %v5630
        %v5632 = vsel %vm317, %v5589, 0.0
        %v5633 = vadd.f32 %v5631, %v5632
        %v5634 = vsel %vm317, %v5590, 0.0
        %v5635 = vadd.f32 %v5633, %v5634
        %v5636 = vsel %vm317, %v5591, 0.0
        %v5637 = vadd.f32 %v5635, %v5636
        %v5638 = vsel %vm317, %v5592, 0.0
        %v5639 = vadd.f32 %v5637, %v5638
        %v5640 = vsel %vm317, %v5593, 0.0
        %v5641 = vadd.f32 %v5639, %v5640
        %v5642 = vsel %vm317, %v5594, 0.0
        %v5643 = vadd.f32 %v5641, %v5642
        %v5644 = vsel %vm317, %v5595, 0.0
        %v5645 = vadd.f32 %v5643, %v5644
        %v5646 = vsel %vm317, %v5596, 0.0
        %v5647 = vadd.f32 %v5645, %v5646
        %v5648 = vsel %vm317, %v5597, 0.0
        %v5649 = vadd.f32 %v5647, %v5648
        %v5650 = vsel %vm317, %v5598, 0.0
        %v5651 = vadd.f32 %v5649, %v5650
        %v5652 = vsel %vm317, %v5599, 0.0
        %v5653 = vadd.f32 %v5651, %v5652
        %v5654 = vsel %vm317, %v5600, 0.0
        %v5655 = vadd.f32 %v5653, %v5654
        %v5656 = vsel %vm317, %v5601, 0.0
        %v5657 = vadd.f32 %v5655, %v5656
        %v5658 = vsel %vm317, %v5602, 0.0
        %v5659 = vadd.f32 %v5657, %v5658
        %v5660 = vsel %vm317, %v5603, 0.0
        %v5661 = vadd.f32 %v5659, %v5660
        %v5662 = vsel %vm317, %v5604, 0.0
        %v5663 = vadd.f32 %v5661, %v5662
        %v5664 = vsel %vm317, %v5605, 0.0
        %v5665 = vadd.f32 %v5663, %v5664
        %v5666 = vsel %vm317, %v5606, 0.0
        %v5667 = vadd.f32 %v5665, %v5666
        %v5668 = vsel %vm317, %v5607, 0.0
        %v5669 = vadd.f32 %v5667, %v5668
        %v5670 = vsel %vm317, %v5608, 0.0
        %v5671 = vadd.f32 %v5669, %v5670
        %v5672 = vrot.slane %v5671, 4
        %v5673 = vadd.f32 %v5671, %v5672
        %v5674 = vrot.slane %v5673, 2
        %v5675 = vadd.f32 %v5673, %v5674
        %v5676 = vrot.slane %v5675, 1
        %v5677 = vadd.f32 %v5675, %v5676
        %v5678 = vmul.f32 %v5677, %v2697
        %v5679 = vadd.f32 %v5678, 1e-05
        %v5680 = vrsqrt.pop %v5679
        %v5681 = vmul.f32 %v5545, %v5680
        %v5682 = vmul.f32 %v5546, %v5680
        %v5683 = vmul.f32 %v5547, %v5680
        %v5684 = vmul.f32 %v5548, %v5680
        %v5685 = vmul.f32 %v5549, %v5680
        %v5686 = vmul.f32 %v5550, %v5680
        %v5687 = vmul.f32 %v5551, %v5680
        %v5688 = vmul.f32 %v5552, %v5680
        %v5689 = vmul.f32 %v5553, %v5680
        %v5690 = vmul.f32 %v5554, %v5680
        %v5691 = vmul.f32 %v5555, %v5680
        %v5692 = vmul.f32 %v5556, %v5680
        %v5693 = vmul.f32 %v5557, %v5680
        %v5694 = vmul.f32 %v5558, %v5680
        %v5695 = vmul.f32 %v5559, %v5680
        %v5696 = vmul.f32 %v5560, %v5680
        %v5697 = vmul.f32 %v5561, %v5680
        %v5698 = vmul.f32 %v5562, %v5680
        %v5699 = vmul.f32 %v5563, %v5680
        %v5700 = vmul.f32 %v5564, %v5680
        %v5701 = vmul.f32 %v5565, %v5680
        %v5702 = vmul.f32 %v5566, %v5680
        %v5703 = vmul.f32 %v5567, %v5680
        %v5704 = vmul.f32 %v5568, %v5680
        %v5705 = vmul.f32 %v5569, %v5680
        %v5706 = vmul.f32 %v5570, %v5680
        %v5707 = vmul.f32 %v5571, %v5680
        %v5708 = vmul.f32 %v5572, %v5680
        %v5709 = vmul.f32 %v5573, %v5680
        %v5710 = vmul.f32 %v5574, %v5680
        %v5711 = vmul.f32 %v5575, %v5680
        %v5712 = vmul.f32 %v5576, %v5680
        %v5713 = vmax.f32 %v5681, 0.0
        %v5714 = vmax.f32 %v5682, 0.0
        %v5715 = vmax.f32 %v5683, 0.0
        %v5716 = vmax.f32 %v5684, 0.0
        %v5717 = vmax.f32 %v5685, 0.0
        %v5718 = vmax.f32 %v5686, 0.0
        %v5719 = vmax.f32 %v5687, 0.0
        %v5720 = vmax.f32 %v5688, 0.0
        %v5721 = vmax.f32 %v5689, 0.0
        %v5722 = vmax.f32 %v5690, 0.0
        %v5723 = vmax.f32 %v5691, 0.0
        %v5724 = vmax.f32 %v5692, 0.0
        %v5725 = vmax.f32 %v5693, 0.0
        %v5726 = vmax.f32 %v5694, 0.0
        %v5727 = vmax.f32 %v5695, 0.0
        %v5728 = vmax.f32 %v5696, 0.0
        %v5729 = vmax.f32 %v5697, 0.0
        %v5730 = vmax.f32 %v5698, 0.0
        %v5731 = vmax.f32 %v5699, 0.0
        %v5732 = vmax.f32 %v5700, 0.0
        %v5733 = vmax.f32 %v5701, 0.0
        %v5734 = vmax.f32 %v5702, 0.0
        %v5735 = vmax.f32 %v5703, 0.0
        %v5736 = vmax.f32 %v5704, 0.0
        %v5737 = vmax.f32 %v5705, 0.0
        %v5738 = vmax.f32 %v5706, 0.0
        %v5739 = vmax.f32 %v5707, 0.0
        %v5740 = vmax.f32 %v5708, 0.0
        %v5741 = vmax.f32 %v5709, 0.0
        %v5742 = vmax.f32 %v5710, 0.0
        %v5743 = vmax.f32 %v5711, 0.0
        %v5744 = vmax.f32 %v5712, 0.0
        %5745 = vst.msk [vmem:[%s163] sm:$0xff] %vm317, %v5713
        %5746 = vst.msk [vmem:[%s163 + $0x8] sm:$0xff] %vm317, %v5714
        %5747 = vst.msk [vmem:[%s163 + $0x10] sm:$0xff] %vm317, %v5715
        %5748 = vst.msk [vmem:[%s163 + $0x18] sm:$0xff] %vm317, %v5716
        %5749 = vst.msk [vmem:[%s163 + $0x20] sm:$0xff] %vm317, %v5717
        %5750 = vst.msk [vmem:[%s163 + $0x28] sm:$0xff] %vm317, %v5718
        %5751 = vst.msk [vmem:[%s163 + $0x30] sm:$0xff] %vm317, %v5719
        %5752 = vst.msk [vmem:[%s163 + $0x38] sm:$0xff] %vm317, %v5720
        %5753 = vst.msk [vmem:[%s163 + $0x40] sm:$0xff] %vm317, %v5721
        %5754 = vst.msk [vmem:[%s163 + $0x48] sm:$0xff] %vm317, %v5722
        %5755 = vst.msk [vmem:[%s163 + $0x50] sm:$0xff] %vm317, %v5723
        %5756 = vst.msk [vmem:[%s163 + $0x58] sm:$0xff] %vm317, %v5724
        %5757 = vst.msk [vmem:[%s163 + $0x60] sm:$0xff] %vm317, %v5725
        %5758 = vst.msk [vmem:[%s163 + $0x68] sm:$0xff] %vm317, %v5726
        %5759 = vst.msk [vmem:[%s163 + $0x70] sm:$0xff] %vm317, %v5727
        %5760 = vst.msk [vmem:[%s163 + $0x78] sm:$0xff] %vm317, %v5728
        %5761 = vst.msk [vmem:[%s163 + $0x80] sm:$0xff] %vm317, %v5729
        %5762 = vst.msk [vmem:[%s163 + $0x88] sm:$0xff] %vm317, %v5730
        %5763 = vst.msk [vmem:[%s163 + $0x90] sm:$0xff] %vm317, %v5731
        %5764 = vst.msk [vmem:[%s163 + $0x98] sm:$0xff] %vm317, %v5732
        %5765 = vst.msk [vmem:[%s163 + $0xa0] sm:$0xff] %vm317, %v5733
        %5766 = vst.msk [vmem:[%s163 + $0xa8] sm:$0xff] %vm317, %v5734
        %5767 = vst.msk [vmem:[%s163 + $0xb0] sm:$0xff] %vm317, %v5735
        %5768 = vst.msk [vmem:[%s163 + $0xb8] sm:$0xff] %vm317, %v5736
        %5769 = vst.msk [vmem:[%s163 + $0xc0] sm:$0xff] %vm317, %v5737
        %5770 = vst.msk [vmem:[%s163 + $0xc8] sm:$0xff] %vm317, %v5738
        %5771 = vst.msk [vmem:[%s163 + $0xd0] sm:$0xff] %vm317, %v5739
        %5772 = vst.msk [vmem:[%s163 + $0xd8] sm:$0xff] %vm317, %v5740
        %5773 = vst.msk [vmem:[%s163 + $0xe0] sm:$0xff] %vm317, %v5741
        %5774 = vst.msk [vmem:[%s163 + $0xe8] sm:$0xff] %vm317, %v5742
        %5775 = vst.msk [vmem:[%s163 + $0xf0] sm:$0xff] %vm317, %v5743
        %5776 = vst.msk [vmem:[%s163 + $0xf8] sm:$0xff] %vm317, %v5744
        %s5777 = sand.u32 %s93, 1
        %s5778 = scalar_lea.sflag [#allocation4], %s5777
        %s5779 = sand.u32 %s93, 1
        %s5780 = smul.addr %s5779, 256
        %s5781 = scalar_lea.vmem [#allocation3], %s5780
        // Predicated region
        $region33: #{resblock_forward.1} parent=31 // pred_check
          %p5782 = pneg %p103
        $region34: #{resblock_forward.1} parent=31 // pred_check_branch
          %5784 = sbr.rel (%p5782) target = $region36
        $region35: #{resblock_forward.1} parent=31 // pred_region
          %s5786 = ssub.s32 4096, 4096
          %5787 = vsyncadd %s5778, %s5786
          %s5788 = smul.addr %s17, 32
          %s5789 = smul.addr %s5788, 128
          %s5790 = scalar_lea.hbm %s3, %s5789
          %s5791 = sshll.u32 %s5781, 4
          %s5792 = int_to_ptr.vmem [resolvable:$true] %s5791
          %5797 = dma.vmem_to_hbm [thread:$0]  %s5792, 4096, %s5790, %s5778, 128, 128, 8
        $region36: #{resblock_forward.1} parent=31 // pred_fallthru
          _
      $region32: #{resblock_forward.1} parent=5 // pred_fallthru
        _
      %p5798 = scmp.le.s32.totalorder 2, %s12
      // Predicated region
      $region37: #{resblock_forward.1} parent=5 // pred_check
        %p5799 = pneg %p5798
      $region38: #{resblock_forward.1} parent=5 // pred_check_branch
        %5801 = sbr.rel (%p5799) target = $region40
      $region39: #{resblock_forward.1} parent=5 // pred_region
        %s5802 = ssub.s32 %s12, 2
        // Predicated region
        $region41: #{resblock_forward.1} parent=39 // pred_check
          %p5803 = pneg %p109
        $region42: #{resblock_forward.1} parent=39 // pred_check_branch
          %5805 = sbr.rel (%p5803) target = $region44
        $region43: #{resblock_forward.1} parent=39 // pred_region
          %s5806 = sand.u32 %s94, 1
          %s5807 = scalar_lea.sflag [#allocation4], %s5806
          %s5808 = sand.u32 %s94, 1
          %s5809 = smul.addr %s5808, 256
          %s5810 = scalar_lea.vmem [#allocation3], %s5809
          %5811 = dma.done %s5807, 4096
        $region44: #{resblock_forward.1} parent=39 // pred_fallthru
          _
      $region40: #{resblock_forward.1} parent=5 // pred_fallthru
        _
    $region6: #{resblock_forward.1} parent=1 // loop_footer
      %s16 = sadd.s32 1, %s12
    $region7: #{resblock_forward.1} parent=1 // loop_footer_branch
      %11 = sbr.rel target = $region3
    $region8: #{resblock_forward.1} parent=1 // loop_exit
      _
    %5812 = vsyncpa [#allocation4], 1
    %s5813 = scalar_lea.sflag [#allocation4], 1
    %5814 = vsyncpa %s5813, 1

</llo_original>
